<compile_context>
chip_gen: v7x
topology: tpu7x:2x2x1
jax: 0.10.0
libtpu: 0.0.40
codegen_flags: <defaults>
</compile_context>

<pallas_src>
import functools
import math

import jax
import jax.numpy as jnp
from jax.experimental import pallas as pl
from jax.experimental.pallas import tpu as pltpu

EPS = 1e-6  # partial(nn.LayerNorm, eps=1e-06)

# MXU operand dtype: bf16 is MXU-native on v5e/v6e/v7x and halves weight DMA.
# Accumulation is always f32 via preferred_element_type; residual/LN/softmax stay f32.
MATMUL_DTYPE = jnp.bfloat16


def _erf(z):
    """Abramowitz & Stegun 7.1.26 erf, |abs err| < 1.5e-7 (exact-GELU quality)."""
    a1, a2, a3, a4, a5 = 0.254829592, -0.284496736, 1.421413741, -1.453152027, 1.061405429
    p = 0.3275911
    s = jnp.where(z >= 0.0, 1.0, -1.0).astype(z.dtype)
    az = jnp.abs(z)
    t = 1.0 / (1.0 + p * az)
    poly = ((((a5 * t + a4) * t + a3) * t + a2) * t + a1) * t
    return s * (1.0 - poly * jnp.exp(-az * az))


def _gelu_exact(x):
    # torch nn.GELU default: x * 0.5 * (1 + erf(x / sqrt(2)))
    return 0.5 * x * (1.0 + _erf(x * (1.0 / math.sqrt(2.0))))


def fused_transformer_kernel(x_ref, wqkv_ref, wproj_ref, wfc1_ref, wfc2_ref, vec_ref,
                             o_ref, *, num_heads, B_shard, N_pad, n_real, D, Hd):
    """One (row-shard, depth) step on the flat (B_shard*N_pad, D) activation slab."""
    d = pl.program_id(1)                  # depth axis (trailing, "arbitrary")

    @pl.when(d == 0)
    def _():
        o_ref[...] = x_ref[...]           # seed resident activations for this row shard

    x = o_ref[...]                        # (R, D) f32, VMEM-resident across depth
    R = B_shard * N_pad
    hd = D // num_heads
    scale = float(hd) ** -0.5

    # ---- this block's weights (separate, ref-indexed operands) ----
    wqkv = wqkv_ref[0]                    # (D, 3D)     bf16
    wproj = wproj_ref[0]                  # (H, hd, D)  bf16 (W_proj^T split per head)
    wfc1 = wfc1_ref[0]                    # (D, Hd)     bf16
    wfc2 = wfc2_ref[0]                    # (Hd, D)     bf16
    vec = vec_ref[0]                      # (8, VW)     f32 LN weights + biases
    ln1w, ln1b = vec[0:1, 0:D], vec[1:2, 0:D]
    ln2w, ln2b = vec[2:3, 0:D], vec[3:4, 0:D]
    bproj, bfc2 = vec[4:5, 0:D], vec[5:6, 0:D]
    bqkv, bfc1 = vec[6:7, 0:3 * D], vec[7:8, 0:Hd]

    # ---- LayerNorm 1 (f32) ----
    mu = jnp.mean(x, axis=-1, keepdims=True)
    var = jnp.mean(jnp.square(x - mu), axis=-1, keepdims=True)
    xn = (x - mu) * jax.lax.rsqrt(var + EPS) * ln1w + ln1b

    # ---- QKV projection (bf16 operands, f32 accumulation; qkv_bias=True) ----
    qkv = jnp.dot(xn.astype(MATMUL_DTYPE), wqkv,
                  preferred_element_type=jnp.float32) + bqkv          # (R, 3D) f32
    q, k, v = qkv[:, 0:D], qkv[:, D:2 * D], qkv[:, 2 * D:3 * D]

    # mask for padded key positions (padded keys -> -inf-ish before softmax)
    key_valid = jax.lax.broadcasted_iota(jnp.int32, (B_shard, N_pad, N_pad), 2) < n_real

    # ---- attention: static head loop, batched over B; lane-dense accumulation ----
    attn_out = jnp.zeros((R, D), jnp.float32)
    for h in range(num_heads):
        lo, hi = h * hd, (h + 1) * hd
        qh = q[:, lo:hi].reshape(B_shard, N_pad, hd).astype(MATMUL_DTYPE)
        kh = k[:, lo:hi].reshape(B_shard, N_pad, hd).astype(MATMUL_DTYPE)
        vh = v[:, lo:hi].reshape(B_shard, N_pad, hd).astype(MATMUL_DTYPE)
        s = jnp.einsum('bnd,bmd->bnm', qh, kh,
                       preferred_element_type=jnp.float32) * scale    # (B, N, N) f32
        s = jnp.where(key_valid, s, jnp.float32(-1e30))
        m = jnp.max(s, axis=-1, keepdims=True)
        p = jnp.exp(s - m)
        denom = jnp.sum(p, axis=-1, keepdims=True)
        p = p * pl.reciprocal(denom, approx=True)                     # EUP slot, ~free
        oh = jnp.einsum('bnm,bmd->bnd', p.astype(MATMUL_DTYPE), vh,
                        preferred_element_type=jnp.float32)           # (B, N, hd) f32
        # Per-head projection: (R, hd) @ (hd, D) accumulated in f32 — no scratch,
        # no narrow masked stores; output of every op here is lane-dense (R, D).
        attn_out = attn_out + jnp.dot(
            oh.reshape(R, hd).astype(MATMUL_DTYPE), wproj[h],
            preferred_element_type=jnp.float32)

    x = x + attn_out + bproj                   # residual (drop / drop_path prob = 0)

    # ---- LayerNorm 2 + MLP (exact erf-GELU in f32) ----
    mu2 = jnp.mean(x, axis=-1, keepdims=True)
    var2 = jnp.mean(jnp.square(x - mu2), axis=-1, keepdims=True)
    xn2 = (x - mu2) * jax.lax.rsqrt(var2 + EPS) * ln2w + ln2b
    h1 = jnp.dot(xn2.astype(MATMUL_DTYPE), wfc1,
                 preferred_element_type=jnp.float32) + bfc1
    h1 = _gelu_exact(h1)
    h2 = jnp.dot(h1.astype(MATMUL_DTYPE), wfc2,
                 preferred_element_type=jnp.float32) + bfc2
    o_ref[...] = x + h2                        # residual; single lane-dense writeback


def pack_blocks(blocks_params, num_heads):
    """Pre-transpose (torch (out,in) -> (in,out)), split W_proj^T per head, cast to bf16."""
    D = blocks_params[0]["wproj"].shape[0]
    Hd = blocks_params[0]["wfc1"].shape[0]
    hd = D // num_heads
    VW = max(((max(3 * D, Hd, D) + 127) // 128) * 128, 128)

    def pad_row(v):
        v = v.reshape(-1)
        return jnp.pad(v, (0, VW - v.shape[0]))

    wqkv_l, wproj_l, wfc1_l, wfc2_l, vec_l = [], [], [], [], []
    for p in blocks_params:
        wqkv_l.append(p["wqkv"].T)                                  # (D, 3D)
        wproj_l.append(p["wproj"].T.reshape(num_heads, hd, D))      # (H, hd, D)
        wfc1_l.append(p["wfc1"].T)                                  # (D, Hd)
        wfc2_l.append(p["wfc2"].T)                                  # (Hd, D)
        vec_l.append(jnp.stack([
            pad_row(p["ln1w"]), pad_row(p["ln1b"]),
            pad_row(p["ln2w"]), pad_row(p["ln2b"]),
            pad_row(p["bproj"]), pad_row(p["bfc2"]),
            pad_row(p["bqkv"]), pad_row(p["bfc1"]),
        ]))
    return (jnp.stack(wqkv_l).astype(MATMUL_DTYPE),
            jnp.stack(wproj_l).astype(MATMUL_DTYPE),
            jnp.stack(wfc1_l).astype(MATMUL_DTYPE),
            jnp.stack(wfc2_l).astype(MATMUL_DTYPE),
            jnp.stack(vec_l).astype(jnp.float32))


def _default_row_shards(batch):
    """2 row shards on v7x-class chips (2 TensorCores/chip), 1 elsewhere."""
    try:
        kind = jax.devices()[0].device_kind.lower()
    except Exception:
        return 1
    return 2 if ("v7" in kind and batch % 2 == 0) else 1


def transformer_forward(x, cls_tokens, blocks_params, num_heads, num_row_shards=None):
    """Mirrors Transformer.forward: NCHW -> tokens -> fused blocks -> split -> NCHW."""
    B, C, Himg, Wimg = x.shape
    assert C % num_heads == 0, "embed_dim must be divisible by num_heads"
    tokens = jnp.transpose(x, (0, 2, 3, 1)).reshape(B, Himg * Wimg, C)   # b (h w) c
    T = cls_tokens.shape[1]
    t = jnp.concatenate([cls_tokens, tokens], axis=1)                    # (B, N, C)
    N = t.shape[1]
    N_pad = ((N + 7) // 8) * 8                       # sublane-aligned token count
    t = jnp.pad(t, ((0, 0), (0, N_pad - N), (0, 0)))

    if num_row_shards is None:
        num_row_shards = _default_row_shards(B)
    assert B % num_row_shards == 0
    B_shard = B // num_row_shards
    R = B * N_pad
    R_shard = B_shard * N_pad
    flat = t.reshape(R, C).astype(jnp.float32)

    wqkv, wproj, wfc1, wfc2, vecs = pack_blocks(blocks_params, num_heads)
    depth = wqkv.shape[0]
    Hd = wfc1.shape[2]
    VW = vecs.shape[2]
    hd = C // num_heads

    kernel = functools.partial(fused_transformer_kernel, num_heads=num_heads,
                               B_shard=B_shard, N_pad=N_pad, n_real=N, D=C, Hd=Hd)

    out_flat = pl.pallas_call(
        kernel,
        out_shape=jax.ShapeDtypeStruct((R, C), jnp.float32),
        grid=(num_row_shards, depth),
        in_specs=[
            pl.BlockSpec((R_shard, C), lambda r, d: (r, 0)),             # activations
            pl.BlockSpec((1, C, 3 * C), lambda r, d: (d, 0, 0)),         # Wqkv^T
            pl.BlockSpec((1, num_heads, hd, C), lambda r, d: (d, 0, 0, 0)),  # Wproj^T/head
            pl.BlockSpec((1, C, Hd), lambda r, d: (d, 0, 0)),            # Wfc1^T
            pl.BlockSpec((1, Hd, C), lambda r, d: (d, 0, 0)),            # Wfc2^T
            pl.BlockSpec((1, 8, VW), lambda r, d: (d, 0, 0)),            # LN/bias slab
        ],
        out_specs=pl.BlockSpec((R_shard, C), lambda r, d: (r, 0)),       # resident over d
        compiler_params=pltpu.CompilerParams(
            dimension_semantics=("parallel", "arbitrary"),
            vmem_limit_bytes=64 * 1024 * 1024),
    )(flat, wqkv, wproj, wfc1, wfc2, vecs)

    out = out_flat.reshape(B, N_pad, C)[:, :N]
    cls_out = out[:, :T]
    x_out = jnp.transpose(out[:, T:].reshape(B, Himg, Wimg, C), (0, 3, 1, 2))
    return x_out, cls_out


def init_block_params(key, dim, mlp_ratio):
    """Deterministic synthetic weights (torch Linear layout: (out, in))."""
    hidden = int(dim * mlp_ratio)
    k0, k1, k2, k3 = jax.random.split(key, 4)
    std = 0.02
    return dict(
        ln1w=jnp.ones((dim,), jnp.float32), ln1b=jnp.zeros((dim,), jnp.float32),
        wqkv=(jax.random.normal(k0, (3 * dim, dim)) * std).astype(jnp.float32),
        bqkv=jnp.zeros((3 * dim,), jnp.float32),
        wproj=(jax.random.normal(k1, (dim, dim)) * std).astype(jnp.float32),
        bproj=jnp.zeros((dim,), jnp.float32),
        ln2w=jnp.ones((dim,), jnp.float32), ln2b=jnp.zeros((dim,), jnp.float32),
        wfc1=(jax.random.normal(k2, (hidden, dim)) * std).astype(jnp.float32),
        bfc1=jnp.zeros((hidden,), jnp.float32),
        wfc2=(jax.random.normal(k3, (dim, hidden)) * std).astype(jnp.float32),
        bfc2=jnp.zeros((dim,), jnp.float32),
    )


def reference_forward(x, cls_tokens, blocks_params, num_heads):
    """Pure-JAX reference mirroring the torch module (same bf16 matmul operand casts)."""
    mmd = MATMUL_DTYPE

    def mm(a, b):
        return jnp.dot(a.astype(mmd), b.astype(mmd), preferred_element_type=jnp.float32)

    def ln(z, w, b):
        mu = z.mean(-1, keepdims=True)
        var = jnp.square(z - mu).mean(-1, keepdims=True)
        return (z - mu) * jax.lax.rsqrt(var + EPS) * w + b

    B, C, Hh, Ww = x.shape
    t = jnp.concatenate(
        [cls_tokens, jnp.transpose(x, (0, 2, 3, 1)).reshape(B, Hh * Ww, C)], axis=1)
    for p in blocks_params:
        Bb, N, D = t.shape
        hd = D // num_heads
        xn = ln(t, p["ln1w"], p["ln1b"])
        qkv = mm(xn, p["wqkv"].T) + p["bqkv"]
        q, k, v = qkv[..., :D], qkv[..., D:2 * D], qkv[..., 2 * D:]
        split = lambda z: z.reshape(Bb, N, num_heads, hd).transpose(0, 2, 1, 3)
        s = jnp.einsum('bhnd,bhmd->bhnm', split(q).astype(mmd), split(k).astype(mmd),
                       preferred_element_type=jnp.float32) * (float(hd) ** -0.5)
        a = jax.nn.softmax(s, axis=-1)
        o = jnp.einsum('bhnm,bhmd->bhnd', a.astype(mmd), split(v).astype(mmd),
                       preferred_element_type=jnp.float32)
        o = o.transpose(0, 2, 1, 3).reshape(Bb, N, D)
        t = t + mm(o, p["wproj"].T) + p["bproj"]
        xn2 = ln(t, p["ln2w"], p["ln2b"])
        h = jax.nn.gelu(mm(xn2, p["wfc1"].T) + p["bfc1"], approximate=False)
        t = t + mm(h, p["wfc2"].T) + p["bfc2"]
    T = cls_tokens.shape[1]
    cls = t[:, :T]
    xr = jnp.transpose(t[:, T:].reshape(B, Hh, Ww, C), (0, 3, 1, 2))
    return xr, cls


if __name__ == "__main__":
    # Transformer(base_dim=8, depth=2, heads=4, mlp_ratio=4) -> embed_dim = 32
    base_dim, heads, depth, mlp_ratio = 8, 4, 2, 4.0
    embed_dim = base_dim * heads
    B, H, W, T = 2, 4, 4, 1

    kx, kc = jax.random.split(jax.random.PRNGKey(0))
    x = jax.random.normal(kx, (B, embed_dim, H, W), dtype=jnp.float32)
    cls_tokens = jax.random.normal(kc, (B, T, embed_dim), dtype=jnp.float32)

    pkeys = jax.random.split(jax.random.PRNGKey(42), depth)
    blocks_params = [init_block_params(pk, embed_dim, mlp_ratio) for pk in pkeys]

    fwd = jax.jit(transformer_forward, static_argnums=(3, 4))
    x_out, cls_out = fwd(x, cls_tokens, blocks_params, heads, None)
    jax.block_until_ready((x_out, cls_out))

    assert x_out.shape == (B, embed_dim, H, W)
    assert cls_out.shape == (B, T, embed_dim)
    assert bool(jnp.all(jnp.isfinite(x_out))) and bool(jnp.all(jnp.isfinite(cls_out)))

    x_ref, cls_ref = reference_forward(x, cls_tokens, blocks_params, heads)
    assert bool(jnp.allclose(x_out, x_ref, atol=5e-3, rtol=5e-3))
    assert bool(jnp.allclose(cls_out, cls_ref, atol=5e-3, rtol=5e-3))

    print("KERNEL_OK")
</pallas_src>

<mosaic_0001>
module attributes {stable_mosaic.version = 11 : i64} {
  func.func @fused_transformer_kernel(%arg0: i32, %arg1: i32, %arg2: memref<48x32xf32, #tpu.memory_space<vmem>>, %arg3: memref<1x32x96xbf16, #tpu.memory_space<vmem>>, %arg4: memref<1x4x8x32xbf16, #tpu.memory_space<vmem>>, %arg5: memref<1x32x128xbf16, #tpu.memory_space<vmem>>, %arg6: memref<1x128x32xbf16, #tpu.memory_space<vmem>>, %arg7: memref<1x8x128xf32, #tpu.memory_space<vmem>>, %arg8: memref<48x32xf32, #tpu.memory_space<vmem>>) attributes {dimension_semantics = [#tpu.dimension_semantics<parallel>, #tpu.dimension_semantics<arbitrary>], iteration_bounds = array<i64: 1, 2>, scalar_prefetch = 0 : i64, scratch_operands = 0 : i64, tpu.core_type = #tpu.core_type<tc>, window_params = [{transform_indices = @transform_0, window_bounds = array<i64: 48, 32>}, {transform_indices = @transform_1, window_bounds = array<i64: 1, 32, 96>}, {transform_indices = @transform_2, window_bounds = array<i64: 1, 4, 8, 32>}, {transform_indices = @transform_3, window_bounds = array<i64: 1, 32, 128>}, {transform_indices = @transform_4, window_bounds = array<i64: 1, 128, 32>}, {transform_indices = @transform_5, window_bounds = array<i64: 1, 8, 128>}, {transform_indices = @transform_6, window_bounds = array<i64: 48, 32>}]} {
    %c0_i32 = arith.constant 0 : i32
    %0 = arith.cmpi eq, %arg1, %c0_i32 : i32
    %1 = arith.extui %0 : i1 to i32
    %c0_i32_0 = arith.constant 0 : i32
    %2 = arith.cmpi ne, %1, %c0_i32_0 : i32
    scf.if %2 {
      %c0_77 = arith.constant 0 : index
      %c0_78 = arith.constant 0 : index
      %259 = vector.load %arg2[%c0_77, %c0_78] : memref<48x32xf32, #tpu.memory_space<vmem>>, vector<48x32xf32>
      %c0_79 = arith.constant 0 : index
      %c0_80 = arith.constant 0 : index
      %260 = vector.load %arg8[%c0_79, %c0_80] : memref<48x32xf32, #tpu.memory_space<vmem>>, vector<48x32xf32>
      tpu.vector_store %arg8[%c0_79, %c0_80], %259 {strides = array<i32>} : memref<48x32xf32, #tpu.memory_space<vmem>>, vector<48x32xf32>,
    } else {
    }
    %c0 = arith.constant 0 : index
    %c0_1 = arith.constant 0 : index
    %3 = vector.load %arg8[%c0, %c0_1] : memref<48x32xf32, #tpu.memory_space<vmem>>, vector<48x32xf32>
    %c0_2 = arith.constant 0 : index
    %c0_3 = arith.constant 0 : index
    %c0_4 = arith.constant 0 : index
    %4 = vector.load %arg3[%c0_2, %c0_3, %c0_4] : memref<1x32x96xbf16, #tpu.memory_space<vmem>>, vector<1x32x96xbf16>
    %5 = vector.shape_cast %4 : vector<1x32x96xbf16> to vector<32x96xbf16>
    %c0_5 = arith.constant 0 : index
    %c0_6 = arith.constant 0 : index
    %c0_7 = arith.constant 0 : index
    %c0_8 = arith.constant 0 : index
    %6 = vector.load %arg4[%c0_5, %c0_6, %c0_7, %c0_8] : memref<1x4x8x32xbf16, #tpu.memory_space<vmem>>, vector<1x4x8x32xbf16>
    %7 = vector.shape_cast %6 : vector<1x4x8x32xbf16> to vector<4x8x32xbf16>
    %c0_9 = arith.constant 0 : index
    %c0_10 = arith.constant 0 : index
    %c0_11 = arith.constant 0 : index
    %8 = vector.load %arg5[%c0_9, %c0_10, %c0_11] : memref<1x32x128xbf16, #tpu.memory_space<vmem>>, vector<1x32x128xbf16>
    %9 = vector.shape_cast %8 : vector<1x32x128xbf16> to vector<32x128xbf16>
    %c0_12 = arith.constant 0 : index
    %c0_13 = arith.constant 0 : index
    %c0_14 = arith.constant 0 : index
    %10 = vector.load %arg6[%c0_12, %c0_13, %c0_14] : memref<1x128x32xbf16, #tpu.memory_space<vmem>>, vector<1x128x32xbf16>
    %11 = vector.shape_cast %10 : vector<1x128x32xbf16> to vector<128x32xbf16>
    %c0_15 = arith.constant 0 : index
    %c0_16 = arith.constant 0 : index
    %c0_17 = arith.constant 0 : index
    %12 = vector.load %arg7[%c0_15, %c0_16, %c0_17] : memref<1x8x128xf32, #tpu.memory_space<vmem>>, vector<1x8x128xf32>
    %13 = vector.shape_cast %12 : vector<1x8x128xf32> to vector<8x128xf32>
    %14 = vector.extract_strided_slice %13 {offsets = [0, 0], sizes = [1, 32], strides = [1, 1]} : vector<8x128xf32> to vector<1x32xf32>
    %15 = vector.extract_strided_slice %13 {offsets = [1, 0], sizes = [1, 32], strides = [1, 1]} : vector<8x128xf32> to vector<1x32xf32>
    %16 = vector.extract_strided_slice %13 {offsets = [2, 0], sizes = [1, 32], strides = [1, 1]} : vector<8x128xf32> to vector<1x32xf32>
    %17 = vector.extract_strided_slice %13 {offsets = [3, 0], sizes = [1, 32], strides = [1, 1]} : vector<8x128xf32> to vector<1x32xf32>
    %18 = vector.extract_strided_slice %13 {offsets = [4, 0], sizes = [1, 32], strides = [1, 1]} : vector<8x128xf32> to vector<1x32xf32>
    %19 = vector.extract_strided_slice %13 {offsets = [5, 0], sizes = [1, 32], strides = [1, 1]} : vector<8x128xf32> to vector<1x32xf32>
    %20 = vector.extract_strided_slice %13 {offsets = [6, 0], sizes = [1, 96], strides = [1, 1]} : vector<8x128xf32> to vector<1x96xf32>
    %21 = vector.extract_strided_slice %13 {offsets = [7, 0], sizes = [1, 128], strides = [1, 1]} : vector<8x128xf32> to vector<1x128xf32>
    %cst = arith.constant dense<0.000000e+00> : vector<48xf32>
    %22 = vector.multi_reduction <add>, %3, %cst [1] : vector<48x32xf32> to vector<48xf32>
    %23 = vector.shape_cast %22 : vector<48xf32> to vector<48x1xf32>
    %cst_18 = arith.constant 3.200000e+01 : f32
    %24 = vector.broadcast %cst_18 : f32 to vector<48x1xf32>
    %25 = arith.divf %23, %24 : vector<48x1xf32>
    %26 = vector.broadcast %25 : vector<48x1xf32> to vector<48x32xf32>
    %27 = arith.subf %3, %26 : vector<48x32xf32>
    %28 = arith.mulf %27, %27 : vector<48x32xf32>
    %cst_19 = arith.constant dense<0.000000e+00> : vector<48xf32>
    %29 = vector.multi_reduction <add>, %28, %cst_19 [1] : vector<48x32xf32> to vector<48xf32>
    %30 = vector.shape_cast %29 : vector<48xf32> to vector<48x1xf32>
    %cst_20 = arith.constant 3.200000e+01 : f32
    %31 = vector.broadcast %cst_20 : f32 to vector<48x1xf32>
    %32 = arith.divf %30, %31 : vector<48x1xf32>
    %33 = vector.broadcast %25 : vector<48x1xf32> to vector<48x32xf32>
    %34 = arith.subf %3, %33 : vector<48x32xf32>
    %cst_21 = arith.constant 9.99999997E-7 : f32
    %35 = vector.broadcast %cst_21 : f32 to vector<48x1xf32>
    %36 = arith.addf %32, %35 : vector<48x1xf32>
    %37 = math.rsqrt %36 : vector<48x1xf32>
    %38 = vector.broadcast %37 : vector<48x1xf32> to vector<48x32xf32>
    %39 = arith.mulf %34, %38 : vector<48x32xf32>
    %40 = vector.broadcast %14 : vector<1x32xf32> to vector<48x32xf32>
    %41 = arith.mulf %39, %40 : vector<48x32xf32>
    %42 = vector.broadcast %15 : vector<1x32xf32> to vector<48x32xf32>
    %43 = arith.addf %41, %42 : vector<48x32xf32>
    %44 = arith.truncf %43 : vector<48x32xf32> to vector<48x32xbf16>
    %cst_22 = arith.constant dense<0.000000e+00> : vector<48x96xf32>
    %45 = tpu.matmul %44, %5, %cst_22 {dimension_numbers = #tpu.dot_dimension_numbers<[1], [0], [0], [1], [0, 0, 1, 1], [], []>} : vector<48x32xbf16>, vector<32x96xbf16>, vector<48x96xf32> -> vector<48x96xf32>
    %46 = vector.broadcast %20 : vector<1x96xf32> to vector<48x96xf32>
    %47 = arith.addf %45, %46 : vector<48x96xf32>
    %48 = vector.extract_strided_slice %47 {offsets = [0, 0], sizes = [48, 32], strides = [1, 1]} : vector<48x96xf32> to vector<48x32xf32>
    %49 = vector.extract_strided_slice %47 {offsets = [0, 32], sizes = [48, 32], strides = [1, 1]} : vector<48x96xf32> to vector<48x32xf32>
    %50 = vector.extract_strided_slice %47 {offsets = [0, 64], sizes = [48, 32], strides = [1, 1]} : vector<48x96xf32> to vector<48x32xf32>
    %51 = tpu.iota {dimensions = array<i32: 2>} : vector<2x24x24xi32>
    %c17_i32 = arith.constant 17 : i32
    %52 = vector.broadcast %c17_i32 : i32 to vector<2x24x24xi32>
    %53 = arith.cmpi slt, %51, %52 : vector<2x24x24xi32>
    %cst_23 = arith.constant 0.000000e+00 : f32
    %54 = vector.broadcast %cst_23 : f32 to vector<48x32xf32>
    %55 = vector.extract_strided_slice %48 {offsets = [0, 0], sizes = [48, 8], strides = [1, 1]} : vector<48x32xf32> to vector<48x8xf32>
    %56 = vector.shape_cast %55 : vector<48x8xf32> to vector<2x24x8xf32>
    %57 = arith.truncf %56 : vector<2x24x8xf32> to vector<2x24x8xbf16>
    %58 = vector.extract_strided_slice %49 {offsets = [0, 0], sizes = [48, 8], strides = [1, 1]} : vector<48x32xf32> to vector<48x8xf32>
    %59 = vector.shape_cast %58 : vector<48x8xf32> to vector<2x24x8xf32>
    %60 = arith.truncf %59 : vector<2x24x8xf32> to vector<2x24x8xbf16>
    %61 = vector.extract_strided_slice %50 {offsets = [0, 0], sizes = [48, 8], strides = [1, 1]} : vector<48x32xf32> to vector<48x8xf32>
    %62 = vector.shape_cast %61 : vector<48x8xf32> to vector<2x24x8xf32>
    %63 = arith.truncf %62 : vector<2x24x8xf32> to vector<2x24x8xbf16>
    "tpu.trace_start"() <{level = 10 : i32, message = "bnd,bmd->bnm"}> : () -> ()
    %cst_24 = arith.constant dense<0.000000e+00> : vector<2x24x24xf32>
    %64 = tpu.matmul %57, %60, %cst_24 {dimension_numbers = #tpu.dot_dimension_numbers<[2], [2], [1], [1], [0, 0, 0, 1, 1, 1], [0], [0]>} : vector<2x24x8xbf16>, vector<2x24x8xbf16>, vector<2x24x24xf32> -> vector<2x24x24xf32>
    "tpu.trace_stop"() : () -> ()
    %cst_25 = arith.constant 0.353553385 : f32
    %65 = vector.broadcast %cst_25 : f32 to vector<2x24x24xf32>
    %66 = arith.mulf %64, %65 : vector<2x24x24xf32>
    %cst_26 = arith.constant -1.000000e+30 : f32
    %67 = vector.broadcast %cst_26 : f32 to vector<2x24x24xf32>
    %68 = arith.select %53, %66, %67 : vector<2x24x24xi1>, vector<2x24x24xf32>
    %cst_27 = arith.constant dense<0xFF800000> : vector<2x24xf32>
    %69 = vector.multi_reduction <maximumf>, %68, %cst_27 [2] : vector<2x24x24xf32> to vector<2x24xf32>
    %70 = vector.shape_cast %69 : vector<2x24xf32> to vector<2x24x1xf32>
    %71 = vector.broadcast %70 : vector<2x24x1xf32> to vector<2x24x24xf32>
    %72 = arith.subf %68, %71 : vector<2x24x24xf32>
    %73 = math.exp %72 : vector<2x24x24xf32>
    %cst_28 = arith.constant dense<0.000000e+00> : vector<2x24xf32>
    %74 = vector.multi_reduction <add>, %73, %cst_28 [2] : vector<2x24x24xf32> to vector<2x24xf32>
    %75 = vector.shape_cast %74 : vector<2x24xf32> to vector<2x24x1xf32>
    %76 = tpu.reciprocal %75 {approx = true} : vector<2x24x1xf32> -> vector<2x24x1xf32>
    %77 = vector.broadcast %76 : vector<2x24x1xf32> to vector<2x24x24xf32>
    %78 = arith.mulf %73, %77 : vector<2x24x24xf32>
    %79 = arith.truncf %78 : vector<2x24x24xf32> to vector<2x24x24xbf16>
    "tpu.trace_start"() <{level = 10 : i32, message = "bnm,bmd->bnd"}> : () -> ()
    %cst_29 = arith.constant dense<0.000000e+00> : vector<2x24x8xf32>
    %80 = tpu.matmul %79, %63, %cst_29 {dimension_numbers = #tpu.dot_dimension_numbers<[2], [1], [1], [2], [0, 0, 0, 1, 1, 2], [0], [0]>} : vector<2x24x24xbf16>, vector<2x24x8xbf16>, vector<2x24x8xf32> -> vector<2x24x8xf32>
    "tpu.trace_stop"() : () -> ()
    %81 = vector.shape_cast %80 : vector<2x24x8xf32> to vector<48x8xf32>
    %82 = arith.truncf %81 : vector<48x8xf32> to vector<48x8xbf16>
    %83 = vector.extract_strided_slice %7 {offsets = [0, 0, 0], sizes = [1, 8, 32], strides = [1, 1, 1]} : vector<4x8x32xbf16> to vector<1x8x32xbf16>
    %84 = vector.shape_cast %83 : vector<1x8x32xbf16> to vector<8x32xbf16>
    %cst_30 = arith.constant dense<0.000000e+00> : vector<48x32xf32>
    %85 = tpu.matmul %82, %84, %cst_30 {dimension_numbers = #tpu.dot_dimension_numbers<[1], [0], [0], [1], [0, 0, 1, 1], [], []>} : vector<48x8xbf16>, vector<8x32xbf16>, vector<48x32xf32> -> vector<48x32xf32>
    %86 = arith.addf %54, %85 : vector<48x32xf32>
    %87 = vector.extract_strided_slice %48 {offsets = [0, 8], sizes = [48, 8], strides = [1, 1]} : vector<48x32xf32> to vector<48x8xf32>
    %88 = vector.shape_cast %87 : vector<48x8xf32> to vector<2x24x8xf32>
    %89 = arith.truncf %88 : vector<2x24x8xf32> to vector<2x24x8xbf16>
    %90 = vector.extract_strided_slice %49 {offsets = [0, 8], sizes = [48, 8], strides = [1, 1]} : vector<48x32xf32> to vector<48x8xf32>
    %91 = vector.shape_cast %90 : vector<48x8xf32> to vector<2x24x8xf32>
    %92 = arith.truncf %91 : vector<2x24x8xf32> to vector<2x24x8xbf16>
    %93 = vector.extract_strided_slice %50 {offsets = [0, 8], sizes = [48, 8], strides = [1, 1]} : vector<48x32xf32> to vector<48x8xf32>
    %94 = vector.shape_cast %93 : vector<48x8xf32> to vector<2x24x8xf32>
    %95 = arith.truncf %94 : vector<2x24x8xf32> to vector<2x24x8xbf16>
    "tpu.trace_start"() <{level = 10 : i32, message = "bnd,bmd->bnm"}> : () -> ()
    %cst_31 = arith.constant dense<0.000000e+00> : vector<2x24x24xf32>
    %96 = tpu.matmul %89, %92, %cst_31 {dimension_numbers = #tpu.dot_dimension_numbers<[2], [2], [1], [1], [0, 0, 0, 1, 1, 1], [0], [0]>} : vector<2x24x8xbf16>, vector<2x24x8xbf16>, vector<2x24x24xf32> -> vector<2x24x24xf32>
    "tpu.trace_stop"() : () -> ()
    %cst_32 = arith.constant 0.353553385 : f32
    %97 = vector.broadcast %cst_32 : f32 to vector<2x24x24xf32>
    %98 = arith.mulf %96, %97 : vector<2x24x24xf32>
    %cst_33 = arith.constant -1.000000e+30 : f32
    %99 = vector.broadcast %cst_33 : f32 to vector<2x24x24xf32>
    %100 = arith.select %53, %98, %99 : vector<2x24x24xi1>, vector<2x24x24xf32>
    %cst_34 = arith.constant dense<0xFF800000> : vector<2x24xf32>
    %101 = vector.multi_reduction <maximumf>, %100, %cst_34 [2] : vector<2x24x24xf32> to vector<2x24xf32>
    %102 = vector.shape_cast %101 : vector<2x24xf32> to vector<2x24x1xf32>
    %103 = vector.broadcast %102 : vector<2x24x1xf32> to vector<2x24x24xf32>
    %104 = arith.subf %100, %103 : vector<2x24x24xf32>
    %105 = math.exp %104 : vector<2x24x24xf32>
    %cst_35 = arith.constant dense<0.000000e+00> : vector<2x24xf32>
    %106 = vector.multi_reduction <add>, %105, %cst_35 [2] : vector<2x24x24xf32> to vector<2x24xf32>
    %107 = vector.shape_cast %106 : vector<2x24xf32> to vector<2x24x1xf32>
    %108 = tpu.reciprocal %107 {approx = true} : vector<2x24x1xf32> -> vector<2x24x1xf32>
    %109 = vector.broadcast %108 : vector<2x24x1xf32> to vector<2x24x24xf32>
    %110 = arith.mulf %105, %109 : vector<2x24x24xf32>
    %111 = arith.truncf %110 : vector<2x24x24xf32> to vector<2x24x24xbf16>
    "tpu.trace_start"() <{level = 10 : i32, message = "bnm,bmd->bnd"}> : () -> ()
    %cst_36 = arith.constant dense<0.000000e+00> : vector<2x24x8xf32>
    %112 = tpu.matmul %111, %95, %cst_36 {dimension_numbers = #tpu.dot_dimension_numbers<[2], [1], [1], [2], [0, 0, 0, 1, 1, 2], [0], [0]>} : vector<2x24x24xbf16>, vector<2x24x8xbf16>, vector<2x24x8xf32> -> vector<2x24x8xf32>
    "tpu.trace_stop"() : () -> ()
    %113 = vector.shape_cast %112 : vector<2x24x8xf32> to vector<48x8xf32>
    %114 = arith.truncf %113 : vector<48x8xf32> to vector<48x8xbf16>
    %115 = vector.extract_strided_slice %7 {offsets = [1, 0, 0], sizes = [1, 8, 32], strides = [1, 1, 1]} : vector<4x8x32xbf16> to vector<1x8x32xbf16>
    %116 = vector.shape_cast %115 : vector<1x8x32xbf16> to vector<8x32xbf16>
    %cst_37 = arith.constant dense<0.000000e+00> : vector<48x32xf32>
    %117 = tpu.matmul %114, %116, %cst_37 {dimension_numbers = #tpu.dot_dimension_numbers<[1], [0], [0], [1], [0, 0, 1, 1], [], []>} : vector<48x8xbf16>, vector<8x32xbf16>, vector<48x32xf32> -> vector<48x32xf32>
    %118 = arith.addf %86, %117 : vector<48x32xf32>
    %119 = vector.extract_strided_slice %48 {offsets = [0, 16], sizes = [48, 8], strides = [1, 1]} : vector<48x32xf32> to vector<48x8xf32>
    %120 = vector.shape_cast %119 : vector<48x8xf32> to vector<2x24x8xf32>
    %121 = arith.truncf %120 : vector<2x24x8xf32> to vector<2x24x8xbf16>
    %122 = vector.extract_strided_slice %49 {offsets = [0, 16], sizes = [48, 8], strides = [1, 1]} : vector<48x32xf32> to vector<48x8xf32>
    %123 = vector.shape_cast %122 : vector<48x8xf32> to vector<2x24x8xf32>
    %124 = arith.truncf %123 : vector<2x24x8xf32> to vector<2x24x8xbf16>
    %125 = vector.extract_strided_slice %50 {offsets = [0, 16], sizes = [48, 8], strides = [1, 1]} : vector<48x32xf32> to vector<48x8xf32>
    %126 = vector.shape_cast %125 : vector<48x8xf32> to vector<2x24x8xf32>
    %127 = arith.truncf %126 : vector<2x24x8xf32> to vector<2x24x8xbf16>
    "tpu.trace_start"() <{level = 10 : i32, message = "bnd,bmd->bnm"}> : () -> ()
    %cst_38 = arith.constant dense<0.000000e+00> : vector<2x24x24xf32>
    %128 = tpu.matmul %121, %124, %cst_38 {dimension_numbers = #tpu.dot_dimension_numbers<[2], [2], [1], [1], [0, 0, 0, 1, 1, 1], [0], [0]>} : vector<2x24x8xbf16>, vector<2x24x8xbf16>, vector<2x24x24xf32> -> vector<2x24x24xf32>
    "tpu.trace_stop"() : () -> ()
    %cst_39 = arith.constant 0.353553385 : f32
    %129 = vector.broadcast %cst_39 : f32 to vector<2x24x24xf32>
    %130 = arith.mulf %128, %129 : vector<2x24x24xf32>
    %cst_40 = arith.constant -1.000000e+30 : f32
    %131 = vector.broadcast %cst_40 : f32 to vector<2x24x24xf32>
    %132 = arith.select %53, %130, %131 : vector<2x24x24xi1>, vector<2x24x24xf32>
    %cst_41 = arith.constant dense<0xFF800000> : vector<2x24xf32>
    %133 = vector.multi_reduction <maximumf>, %132, %cst_41 [2] : vector<2x24x24xf32> to vector<2x24xf32>
    %134 = vector.shape_cast %133 : vector<2x24xf32> to vector<2x24x1xf32>
    %135 = vector.broadcast %134 : vector<2x24x1xf32> to vector<2x24x24xf32>
    %136 = arith.subf %132, %135 : vector<2x24x24xf32>
    %137 = math.exp %136 : vector<2x24x24xf32>
    %cst_42 = arith.constant dense<0.000000e+00> : vector<2x24xf32>
    %138 = vector.multi_reduction <add>, %137, %cst_42 [2] : vector<2x24x24xf32> to vector<2x24xf32>
    %139 = vector.shape_cast %138 : vector<2x24xf32> to vector<2x24x1xf32>
    %140 = tpu.reciprocal %139 {approx = true} : vector<2x24x1xf32> -> vector<2x24x1xf32>
    %141 = vector.broadcast %140 : vector<2x24x1xf32> to vector<2x24x24xf32>
    %142 = arith.mulf %137, %141 : vector<2x24x24xf32>
    %143 = arith.truncf %142 : vector<2x24x24xf32> to vector<2x24x24xbf16>
    "tpu.trace_start"() <{level = 10 : i32, message = "bnm,bmd->bnd"}> : () -> ()
    %cst_43 = arith.constant dense<0.000000e+00> : vector<2x24x8xf32>
    %144 = tpu.matmul %143, %127, %cst_43 {dimension_numbers = #tpu.dot_dimension_numbers<[2], [1], [1], [2], [0, 0, 0, 1, 1, 2], [0], [0]>} : vector<2x24x24xbf16>, vector<2x24x8xbf16>, vector<2x24x8xf32> -> vector<2x24x8xf32>
    "tpu.trace_stop"() : () -> ()
    %145 = vector.shape_cast %144 : vector<2x24x8xf32> to vector<48x8xf32>
    %146 = arith.truncf %145 : vector<48x8xf32> to vector<48x8xbf16>
    %147 = vector.extract_strided_slice %7 {offsets = [2, 0, 0], sizes = [1, 8, 32], strides = [1, 1, 1]} : vector<4x8x32xbf16> to vector<1x8x32xbf16>
    %148 = vector.shape_cast %147 : vector<1x8x32xbf16> to vector<8x32xbf16>
    %cst_44 = arith.constant dense<0.000000e+00> : vector<48x32xf32>
    %149 = tpu.matmul %146, %148, %cst_44 {dimension_numbers = #tpu.dot_dimension_numbers<[1], [0], [0], [1], [0, 0, 1, 1], [], []>} : vector<48x8xbf16>, vector<8x32xbf16>, vector<48x32xf32> -> vector<48x32xf32>
    %150 = arith.addf %118, %149 : vector<48x32xf32>
    %151 = vector.extract_strided_slice %48 {offsets = [0, 24], sizes = [48, 8], strides = [1, 1]} : vector<48x32xf32> to vector<48x8xf32>
    %152 = vector.shape_cast %151 : vector<48x8xf32> to vector<2x24x8xf32>
    %153 = arith.truncf %152 : vector<2x24x8xf32> to vector<2x24x8xbf16>
    %154 = vector.extract_strided_slice %49 {offsets = [0, 24], sizes = [48, 8], strides = [1, 1]} : vector<48x32xf32> to vector<48x8xf32>
    %155 = vector.shape_cast %154 : vector<48x8xf32> to vector<2x24x8xf32>
    %156 = arith.truncf %155 : vector<2x24x8xf32> to vector<2x24x8xbf16>
    %157 = vector.extract_strided_slice %50 {offsets = [0, 24], sizes = [48, 8], strides = [1, 1]} : vector<48x32xf32> to vector<48x8xf32>
    %158 = vector.shape_cast %157 : vector<48x8xf32> to vector<2x24x8xf32>
    %159 = arith.truncf %158 : vector<2x24x8xf32> to vector<2x24x8xbf16>
    "tpu.trace_start"() <{level = 10 : i32, message = "bnd,bmd->bnm"}> : () -> ()
    %cst_45 = arith.constant dense<0.000000e+00> : vector<2x24x24xf32>
    %160 = tpu.matmul %153, %156, %cst_45 {dimension_numbers = #tpu.dot_dimension_numbers<[2], [2], [1], [1], [0, 0, 0, 1, 1, 1], [0], [0]>} : vector<2x24x8xbf16>, vector<2x24x8xbf16>, vector<2x24x24xf32> -> vector<2x24x24xf32>
    "tpu.trace_stop"() : () -> ()
    %cst_46 = arith.constant 0.353553385 : f32
    %161 = vector.broadcast %cst_46 : f32 to vector<2x24x24xf32>
    %162 = arith.mulf %160, %161 : vector<2x24x24xf32>
    %cst_47 = arith.constant -1.000000e+30 : f32
    %163 = vector.broadcast %cst_47 : f32 to vector<2x24x24xf32>
    %164 = arith.select %53, %162, %163 : vector<2x24x24xi1>, vector<2x24x24xf32>
    %cst_48 = arith.constant dense<0xFF800000> : vector<2x24xf32>
    %165 = vector.multi_reduction <maximumf>, %164, %cst_48 [2] : vector<2x24x24xf32> to vector<2x24xf32>
    %166 = vector.shape_cast %165 : vector<2x24xf32> to vector<2x24x1xf32>
    %167 = vector.broadcast %166 : vector<2x24x1xf32> to vector<2x24x24xf32>
    %168 = arith.subf %164, %167 : vector<2x24x24xf32>
    %169 = math.exp %168 : vector<2x24x24xf32>
    %cst_49 = arith.constant dense<0.000000e+00> : vector<2x24xf32>
    %170 = vector.multi_reduction <add>, %169, %cst_49 [2] : vector<2x24x24xf32> to vector<2x24xf32>
    %171 = vector.shape_cast %170 : vector<2x24xf32> to vector<2x24x1xf32>
    %172 = tpu.reciprocal %171 {approx = true} : vector<2x24x1xf32> -> vector<2x24x1xf32>
    %173 = vector.broadcast %172 : vector<2x24x1xf32> to vector<2x24x24xf32>
    %174 = arith.mulf %169, %173 : vector<2x24x24xf32>
    %175 = arith.truncf %174 : vector<2x24x24xf32> to vector<2x24x24xbf16>
    "tpu.trace_start"() <{level = 10 : i32, message = "bnm,bmd->bnd"}> : () -> ()
    %cst_50 = arith.constant dense<0.000000e+00> : vector<2x24x8xf32>
    %176 = tpu.matmul %175, %159, %cst_50 {dimension_numbers = #tpu.dot_dimension_numbers<[2], [1], [1], [2], [0, 0, 0, 1, 1, 2], [0], [0]>} : vector<2x24x24xbf16>, vector<2x24x8xbf16>, vector<2x24x8xf32> -> vector<2x24x8xf32>
    "tpu.trace_stop"() : () -> ()
    %177 = vector.shape_cast %176 : vector<2x24x8xf32> to vector<48x8xf32>
    %178 = arith.truncf %177 : vector<48x8xf32> to vector<48x8xbf16>
    %179 = vector.extract_strided_slice %7 {offsets = [3, 0, 0], sizes = [1, 8, 32], strides = [1, 1, 1]} : vector<4x8x32xbf16> to vector<1x8x32xbf16>
    %180 = vector.shape_cast %179 : vector<1x8x32xbf16> to vector<8x32xbf16>
    %cst_51 = arith.constant dense<0.000000e+00> : vector<48x32xf32>
    %181 = tpu.matmul %178, %180, %cst_51 {dimension_numbers = #tpu.dot_dimension_numbers<[1], [0], [0], [1], [0, 0, 1, 1], [], []>} : vector<48x8xbf16>, vector<8x32xbf16>, vector<48x32xf32> -> vector<48x32xf32>
    %182 = arith.addf %150, %181 : vector<48x32xf32>
    %183 = arith.addf %3, %182 : vector<48x32xf32>
    %184 = vector.broadcast %18 : vector<1x32xf32> to vector<48x32xf32>
    %185 = arith.addf %183, %184 : vector<48x32xf32>
    %cst_52 = arith.constant dense<0.000000e+00> : vector<48xf32>
    %186 = vector.multi_reduction <add>, %185, %cst_52 [1] : vector<48x32xf32> to vector<48xf32>
    %187 = vector.shape_cast %186 : vector<48xf32> to vector<48x1xf32>
    %cst_53 = arith.constant 3.200000e+01 : f32
    %188 = vector.broadcast %cst_53 : f32 to vector<48x1xf32>
    %189 = arith.divf %187, %188 : vector<48x1xf32>
    %190 = vector.broadcast %189 : vector<48x1xf32> to vector<48x32xf32>
    %191 = arith.subf %185, %190 : vector<48x32xf32>
    %192 = arith.mulf %191, %191 : vector<48x32xf32>
    %cst_54 = arith.constant dense<0.000000e+00> : vector<48xf32>
    %193 = vector.multi_reduction <add>, %192, %cst_54 [1] : vector<48x32xf32> to vector<48xf32>
    %194 = vector.shape_cast %193 : vector<48xf32> to vector<48x1xf32>
    %cst_55 = arith.constant 3.200000e+01 : f32
    %195 = vector.broadcast %cst_55 : f32 to vector<48x1xf32>
    %196 = arith.divf %194, %195 : vector<48x1xf32>
    %197 = vector.broadcast %189 : vector<48x1xf32> to vector<48x32xf32>
    %198 = arith.subf %185, %197 : vector<48x32xf32>
    %cst_56 = arith.constant 9.99999997E-7 : f32
    %199 = vector.broadcast %cst_56 : f32 to vector<48x1xf32>
    %200 = arith.addf %196, %199 : vector<48x1xf32>
    %201 = math.rsqrt %200 : vector<48x1xf32>
    %202 = vector.broadcast %201 : vector<48x1xf32> to vector<48x32xf32>
    %203 = arith.mulf %198, %202 : vector<48x32xf32>
    %204 = vector.broadcast %16 : vector<1x32xf32> to vector<48x32xf32>
    %205 = arith.mulf %203, %204 : vector<48x32xf32>
    %206 = vector.broadcast %17 : vector<1x32xf32> to vector<48x32xf32>
    %207 = arith.addf %205, %206 : vector<48x32xf32>
    %208 = arith.truncf %207 : vector<48x32xf32> to vector<48x32xbf16>
    %cst_57 = arith.constant dense<0.000000e+00> : vector<48x128xf32>
    %209 = tpu.matmul %208, %9, %cst_57 {dimension_numbers = #tpu.dot_dimension_numbers<[1], [0], [0], [1], [0, 0, 1, 1], [], []>} : vector<48x32xbf16>, vector<32x128xbf16>, vector<48x128xf32> -> vector<48x128xf32>
    %210 = vector.broadcast %21 : vector<1x128xf32> to vector<48x128xf32>
    %211 = arith.addf %209, %210 : vector<48x128xf32>
    %cst_58 = arith.constant 5.000000e-01 : f32
    %212 = vector.broadcast %cst_58 : f32 to vector<48x128xf32>
    %213 = arith.mulf %212, %211 : vector<48x128xf32>
    %cst_59 = arith.constant 0.707106769 : f32
    %214 = vector.broadcast %cst_59 : f32 to vector<48x128xf32>
    %215 = arith.mulf %211, %214 : vector<48x128xf32>
    %cst_60 = arith.constant 0.000000e+00 : f32
    %216 = vector.broadcast %cst_60 : f32 to vector<48x128xf32>
    %217 = arith.cmpf oge, %215, %216 : vector<48x128xf32>
    %cst_61 = arith.constant 1.000000e+00 : f32
    %cst_62 = arith.constant -1.000000e+00 : f32
    %218 = vector.broadcast %cst_61 : f32 to vector<48x128xf32>
    %219 = vector.broadcast %cst_62 : f32 to vector<48x128xf32>
    %220 = arith.select %217, %218, %219 : vector<48x128xi1>, vector<48x128xf32>
    %221 = math.absf %215 : vector<48x128xf32>
    %cst_63 = arith.constant 0.327591091 : f32
    %222 = vector.broadcast %cst_63 : f32 to vector<48x128xf32>
    %223 = arith.mulf %222, %221 : vector<48x128xf32>
    %cst_64 = arith.constant 1.000000e+00 : f32
    %224 = vector.broadcast %cst_64 : f32 to vector<48x128xf32>
    %225 = arith.addf %224, %223 : vector<48x128xf32>
    %cst_65 = arith.constant 1.000000e+00 : f32
    %226 = vector.broadcast %cst_65 : f32 to vector<48x128xf32>
    %227 = arith.divf %226, %225 : vector<48x128xf32>
    %cst_66 = arith.constant 1.06140542 : f32
    %228 = vector.broadcast %cst_66 : f32 to vector<48x128xf32>
    %229 = arith.mulf %228, %227 : vector<48x128xf32>
    %cst_67 = arith.constant -1.45315206 : f32
    %230 = vector.broadcast %cst_67 : f32 to vector<48x128xf32>
    %231 = arith.addf %229, %230 : vector<48x128xf32>
    %232 = arith.mulf %231, %227 : vector<48x128xf32>
    %cst_68 = arith.constant 1.42141378 : f32
    %233 = vector.broadcast %cst_68 : f32 to vector<48x128xf32>
    %234 = arith.addf %232, %233 : vector<48x128xf32>
    %235 = arith.mulf %234, %227 : vector<48x128xf32>
    %cst_69 = arith.constant -0.284496725 : f32
    %236 = vector.broadcast %cst_69 : f32 to vector<48x128xf32>
    %237 = arith.addf %235, %236 : vector<48x128xf32>
    %238 = arith.mulf %237, %227 : vector<48x128xf32>
    %cst_70 = arith.constant 0.254829586 : f32
    %239 = vector.broadcast %cst_70 : f32 to vector<48x128xf32>
    %240 = arith.addf %238, %239 : vector<48x128xf32>
    %241 = arith.mulf %240, %227 : vector<48x128xf32>
    %cst_71 = arith.constant 0.000000e+00 : f32
    %242 = vector.broadcast %cst_71 : f32 to vector<48x128xf32>
    %243 = arith.subf %242, %221 : vector<48x128xf32>
    %244 = arith.mulf %243, %221 : vector<48x128xf32>
    %245 = math.exp %244 : vector<48x128xf32>
    %246 = arith.mulf %241, %245 : vector<48x128xf32>
    %cst_72 = arith.constant 1.000000e+00 : f32
    %247 = vector.broadcast %cst_72 : f32 to vector<48x128xf32>
    %248 = arith.subf %247, %246 : vector<48x128xf32>
    %249 = arith.mulf %220, %248 : vector<48x128xf32>
    %cst_73 = arith.constant 1.000000e+00 : f32
    %250 = vector.broadcast %cst_73 : f32 to vector<48x128xf32>
    %251 = arith.addf %250, %249 : vector<48x128xf32>
    %252 = arith.mulf %213, %251 : vector<48x128xf32>
    %253 = arith.truncf %252 : vector<48x128xf32> to vector<48x128xbf16>
    %cst_74 = arith.constant dense<0.000000e+00> : vector<48x32xf32>
    %254 = tpu.matmul %253, %11, %cst_74 {dimension_numbers = #tpu.dot_dimension_numbers<[1], [0], [0], [1], [0, 0, 1, 1], [], []>} : vector<48x128xbf16>, vector<128x32xbf16>, vector<48x32xf32> -> vector<48x32xf32>
    %255 = vector.broadcast %19 : vector<1x32xf32> to vector<48x32xf32>
    %256 = arith.addf %254, %255 : vector<48x32xf32>
    %257 = arith.addf %185, %256 : vector<48x32xf32>
    %c0_75 = arith.constant 0 : index
    %c0_76 = arith.constant 0 : index
    %258 = vector.load %arg8[%c0_75, %c0_76] : memref<48x32xf32, #tpu.memory_space<vmem>>, vector<48x32xf32>
    tpu.vector_store %arg8[%c0_75, %c0_76], %257 {strides = array<i32>} : memref<48x32xf32, #tpu.memory_space<vmem>>, vector<48x32xf32>,
    return
  }
  func.func @transform_0(%arg0: i32, %arg1: i32) -> (i32, i32) {
    %c0_i32 = arith.constant 0 : i32
    %c0_i32_0 = arith.constant 0 : i32
    return %arg0, %c0_i32 : i32, i32
  }
  func.func @transform_1(%arg0: i32, %arg1: i32) -> (i32, i32, i32) {
    %c0_i32 = arith.constant 0 : i32
    %c0_i32_0 = arith.constant 0 : i32
    %c0_i32_1 = arith.constant 0 : i32
    return %arg1, %c0_i32, %c0_i32_0 : i32, i32, i32
  }
  func.func @transform_2(%arg0: i32, %arg1: i32) -> (i32, i32, i32, i32) {
    %c0_i32 = arith.constant 0 : i32
    %c0_i32_0 = arith.constant 0 : i32
    %c0_i32_1 = arith.constant 0 : i32
    %c0_i32_2 = arith.constant 0 : i32
    return %arg1, %c0_i32, %c0_i32_0, %c0_i32_1 : i32, i32, i32, i32
  }
  func.func @transform_3(%arg0: i32, %arg1: i32) -> (i32, i32, i32) {
    %c0_i32 = arith.constant 0 : i32
    %c0_i32_0 = arith.constant 0 : i32
    %c0_i32_1 = arith.constant 0 : i32
    return %arg1, %c0_i32, %c0_i32_0 : i32, i32, i32
  }
  func.func @transform_4(%arg0: i32, %arg1: i32) -> (i32, i32, i32) {
    %c0_i32 = arith.constant 0 : i32
    %c0_i32_0 = arith.constant 0 : i32
    %c0_i32_1 = arith.constant 0 : i32
    return %arg1, %c0_i32, %c0_i32_0 : i32, i32, i32
  }
  func.func @transform_5(%arg0: i32, %arg1: i32) -> (i32, i32, i32) {
    %c0_i32 = arith.constant 0 : i32
    %c0_i32_0 = arith.constant 0 : i32
    %c0_i32_1 = arith.constant 0 : i32
    return %arg1, %c0_i32, %c0_i32_0 : i32, i32, i32
  }
  func.func @transform_6(%arg0: i32, %arg1: i32) -> (i32, i32) {
    %c0_i32 = arith.constant 0 : i32
    %c0_i32_0 = arith.constant 0 : i32
    return %arg0, %c0_i32 : i32, i32
  }
}

</mosaic_0001>

<llo_original>
// kernel: transformer_forward.1
$region0: #{transformer_forward.1}
  #allocation0 [shape = 'u32[]', space=smem, size = 0x4, offset = 0x4, fixed_abs, tag = 'smem constant byte address 0x4 - core index']
  #allocation1 [shape = 'u32[144,128]{1,0:T(1,128)}', space=vmem, size = 0x12000, scoped, tag = 'internal scratch']
  %s0 = inlined_call_operand.hbm [shape: f32[48,32], index: 0, kind: input, shape index: {}]
  %s1 = inlined_call_operand.hbm [shape: bf16[2,32,96], index: 1, kind: input, shape index: {}]
  %s2 = inlined_call_operand.hbm [shape: bf16[2,4,8,32], index: 2, kind: input, shape index: {}]
  %s3 = inlined_call_operand.hbm [shape: bf16[2,32,128], index: 3, kind: input, shape index: {}]
  %s4 = inlined_call_operand.hbm [shape: bf16[2,128,32], index: 4, kind: input, shape index: {}]
  %s5 = inlined_call_operand.hbm [shape: f32[2,8,128], index: 5, kind: input, shape index: {}]
  %s6 = inlined_call_operand.hbm [shape: f32[48,32], index: 6, kind: output, shape index: {}]
  %s7 = sld [smem:[#allocation0]]
  $region85: #{transformer_forward.1} parent=0
    _
  %s9 = ssub.s32 1, %s7
  %s10 = scalar_select 0, %s9, %s7
  $region1: #{transformer_forward.1} parent=0
    #allocation2 [shape = 'u8[24576]{0}', space=vmem, size = 0x6000, scoped, tag = 'input window, operand 0, single buffered']
    #allocation3 [shape = 's32[2]{0}', space=sflag, size = 0x8, scoped, tag = 'scoped memory for transformer_forward.1']
    #allocation4 [shape = 's32[2]{0}', space=sflag, size = 0x8, scoped, tag = 'scoped memory for transformer_forward.1']
    #allocation5 [shape = 'u8[16384]{0}', space=vmem, size = 0x4000, scoped, tag = 'input window, operand 1']
    #allocation6 [shape = 's32[2]{0}', space=sflag, size = 0x8, scoped, tag = 'scoped memory for transformer_forward.1']
    #allocation7 [shape = 'u8[16384]{0}', space=vmem, size = 0x4000, scoped, tag = 'input window, operand 2']
    #allocation8 [shape = 'u8[16384]{0}', space=vmem, size = 0x4000, scoped, tag = 'input window, operand 3']
    #allocation9 [shape = 's32[2]{0}', space=sflag, size = 0x8, scoped, tag = 'scoped memory for transformer_forward.1']
    #allocation10 [shape = 'u8[65536]{0}', space=vmem, size = 0x10000, scoped, tag = 'input window, operand 4']
    #allocation11 [shape = 'u8[8192]{0}', space=vmem, size = 0x2000, scoped, tag = 'input window, operand 5']
    #allocation12 [shape = 's32[2]{0}', space=sflag, size = 0x8, scoped, tag = 'scoped memory for transformer_forward.1']
    #allocation13 [shape = 'u8[24576]{0}', space=vmem, size = 0x6000, scoped, tag = 'output window, operand 0, single buffered']
    %11 = vsyncpa [#allocation3], 0
    %12 = vsyncpa [#allocation6], 0
    %s13 = scalar_lea.sflag [#allocation6], 1
    %14 = vsyncpa %s13, 0
    %15 = vsyncpa [#allocation9], 0
    %s16 = scalar_lea.sflag [#allocation9], 1
    %17 = vsyncpa %s16, 0
    %18 = vsyncpa [#allocation12], 0
    %s19 = scalar_lea.sflag [#allocation12], 1
    %20 = vsyncpa %s19, 0
    %21 = vsyncpa [#allocation4], 0
    loop: start=0, step=1, limit=4
    $region2: #{transformer_forward.1} parent=1 // loop_pre_header
      _
    $region3: #{transformer_forward.1} parent=1 // loop_header
      %s23 = sphi 0, %s27
      %p24 = scmp.ge.s32.totalorder %s23, 4
      %s30 = sphi 0, %s42
      %s31 = sphi 0, %s38
      %s32 = sphi 0, %s30
      %s33 = sphi 0, %s31
      %s34 = sphi 0, %s32
      %s35 = sphi 0, %s33
      %s45 = sphi 0, %s47
      %s48 = sphi 0, %s45
      %s49 = sphi 0, %s48
      %s65 = sphi 0, %s49
      %s71 = sphi 0, %s73
      %s74 = sphi 0, %s71
      %s75 = sphi 0, %s74
      %s91 = sphi 0, %s75
      %s97 = sphi 0, %s99
      %s100 = sphi 0, %s97
      %s101 = sphi 0, %s100
      %s117 = sphi 0, %s101
      %s123 = sphi 0, %s125
      %s126 = sphi 0, %s123
      %s127 = sphi 0, %s126
      %s143 = sphi 0, %s127
      %s149 = sphi 0, %s151
      %s152 = sphi 0, %s149
      %s153 = sphi 0, %s152
      %s169 = sphi 0, %s153
      %s175 = sphi 0, %s177
      %s178 = sphi 0, %s175
      %s179 = sphi 0, %s178
      %s195 = sphi 0, %s179
      %s201 = sphi 0, %s203
      %s204 = sphi 0, %s201
      %s205 = sphi 0, %s204
      %s221 = sphi 0, %s205
    $region4: #{transformer_forward.1} parent=1 // loop_header_branch
      %26 = sbr.rel (%p24) target = $region8
    $region5: #{transformer_forward.1} parent=1 // loop_body
      %s28 = ssub.s32 %s23, 1
      %s29 = ssub.s32 %s23, 2
      %s36 = sadd.s32 1, %s31
      %p37 = scmp.ge.s32.totalorder %s36, 2
      %s38 = scalar_select %p37, 0, %s36
      %s39 = sadd.s32 1, %s30
      %s40 = scalar_select %p37, %s39, %s30
      %p41 = scmp.ge.s32.totalorder %s40, 1
      %s42 = scalar_select %p41, 0, %s40
      %s43 = ssub.s32 %s30, %s42
      %p44 = scmp.eq.s32.totalorder %s43, 0
      %s46 = sadd.s32 %s45, 1
      %s47 = scalar_select %p44, %s45, %s46
      %p50 = pneg %p44
      %p51 = scmp.eq.s32.totalorder %s23, 1
      %p52 = por %p50, %p51
      %p53 = scmp.ne.s32.totalorder %s45, %s48
      %p54 = scmp.eq.s32.totalorder %s23, 0
      %p55 = por %p53, %p54
      %p56 = scmp.ne.s32.totalorder %s45, %s48
      %p57 = scmp.eq.s32.totalorder %s28, 1
      %p58 = por %p56, %p57
      %p59 = scmp.ne.s32.totalorder %s48, %s49
      %p60 = scmp.eq.s32.totalorder %s28, 0
      %p61 = por %p59, %p60
      %p62 = scmp.ne.s32.totalorder %s48, %s49
      %p63 = scmp.eq.s32.totalorder %s29, 1
      %p64 = por %p62, %p63
      %p66 = scmp.ne.s32.totalorder %s49, %s65
      %p67 = scmp.eq.s32.totalorder %s29, 0
      %p68 = por %p66, %p67
      %s69 = ssub.s32 %s31, %s38
      %p70 = scmp.eq.s32.totalorder %s69, 0
      %s72 = sadd.s32 %s71, 1
      %s73 = scalar_select %p70, %s71, %s72
      %p76 = pneg %p70
      %p77 = scmp.eq.s32.totalorder %s23, 1
      %p78 = por %p76, %p77
      %p79 = scmp.ne.s32.totalorder %s71, %s74
      %p80 = scmp.eq.s32.totalorder %s23, 0
      %p81 = por %p79, %p80
      %p82 = scmp.ne.s32.totalorder %s71, %s74
      %p83 = scmp.eq.s32.totalorder %s28, 1
      %p84 = por %p82, %p83
      %p85 = scmp.ne.s32.totalorder %s74, %s75
      %p86 = scmp.eq.s32.totalorder %s28, 0
      %p87 = por %p85, %p86
      %p88 = scmp.ne.s32.totalorder %s74, %s75
      %p89 = scmp.eq.s32.totalorder %s29, 1
      %p90 = por %p88, %p89
      %p92 = scmp.ne.s32.totalorder %s75, %s91
      %p93 = scmp.eq.s32.totalorder %s29, 0
      %p94 = por %p92, %p93
      %s95 = ssub.s32 %s31, %s38
      %p96 = scmp.eq.s32.totalorder %s95, 0
      %s98 = sadd.s32 %s97, 1
      %s99 = scalar_select %p96, %s97, %s98
      %p102 = pneg %p96
      %p103 = scmp.eq.s32.totalorder %s23, 1
      %p104 = por %p102, %p103
      %p105 = scmp.ne.s32.totalorder %s97, %s100
      %p106 = scmp.eq.s32.totalorder %s23, 0
      %p107 = por %p105, %p106
      %p108 = scmp.ne.s32.totalorder %s97, %s100
      %p109 = scmp.eq.s32.totalorder %s28, 1
      %p110 = por %p108, %p109
      %p111 = scmp.ne.s32.totalorder %s100, %s101
      %p112 = scmp.eq.s32.totalorder %s28, 0
      %p113 = por %p111, %p112
      %p114 = scmp.ne.s32.totalorder %s100, %s101
      %p115 = scmp.eq.s32.totalorder %s29, 1
      %p116 = por %p114, %p115
      %p118 = scmp.ne.s32.totalorder %s101, %s117
      %p119 = scmp.eq.s32.totalorder %s29, 0
      %p120 = por %p118, %p119
      %s121 = ssub.s32 %s31, %s38
      %p122 = scmp.eq.s32.totalorder %s121, 0
      %s124 = sadd.s32 %s123, 1
      %s125 = scalar_select %p122, %s123, %s124
      %p128 = pneg %p122
      %p129 = scmp.eq.s32.totalorder %s23, 1
      %p130 = por %p128, %p129
      %p131 = scmp.ne.s32.totalorder %s123, %s126
      %p132 = scmp.eq.s32.totalorder %s23, 0
      %p133 = por %p131, %p132
      %p134 = scmp.ne.s32.totalorder %s123, %s126
      %p135 = scmp.eq.s32.totalorder %s28, 1
      %p136 = por %p134, %p135
      %p137 = scmp.ne.s32.totalorder %s126, %s127
      %p138 = scmp.eq.s32.totalorder %s28, 0
      %p139 = por %p137, %p138
      %p140 = scmp.ne.s32.totalorder %s126, %s127
      %p141 = scmp.eq.s32.totalorder %s29, 1
      %p142 = por %p140, %p141
      %p144 = scmp.ne.s32.totalorder %s127, %s143
      %p145 = scmp.eq.s32.totalorder %s29, 0
      %p146 = por %p144, %p145
      %s147 = ssub.s32 %s31, %s38
      %p148 = scmp.eq.s32.totalorder %s147, 0
      %s150 = sadd.s32 %s149, 1
      %s151 = scalar_select %p148, %s149, %s150
      %p154 = pneg %p148
      %p155 = scmp.eq.s32.totalorder %s23, 1
      %p156 = por %p154, %p155
      %p157 = scmp.ne.s32.totalorder %s149, %s152
      %p158 = scmp.eq.s32.totalorder %s23, 0
      %p159 = por %p157, %p158
      %p160 = scmp.ne.s32.totalorder %s149, %s152
      %p161 = scmp.eq.s32.totalorder %s28, 1
      %p162 = por %p160, %p161
      %p163 = scmp.ne.s32.totalorder %s152, %s153
      %p164 = scmp.eq.s32.totalorder %s28, 0
      %p165 = por %p163, %p164
      %p166 = scmp.ne.s32.totalorder %s152, %s153
      %p167 = scmp.eq.s32.totalorder %s29, 1
      %p168 = por %p166, %p167
      %p170 = scmp.ne.s32.totalorder %s153, %s169
      %p171 = scmp.eq.s32.totalorder %s29, 0
      %p172 = por %p170, %p171
      %s173 = ssub.s32 %s31, %s38
      %p174 = scmp.eq.s32.totalorder %s173, 0
      %s176 = sadd.s32 %s175, 1
      %s177 = scalar_select %p174, %s175, %s176
      %p180 = pneg %p174
      %p181 = scmp.eq.s32.totalorder %s23, 1
      %p182 = por %p180, %p181
      %p183 = scmp.ne.s32.totalorder %s175, %s178
      %p184 = scmp.eq.s32.totalorder %s23, 0
      %p185 = por %p183, %p184
      %p186 = scmp.ne.s32.totalorder %s175, %s178
      %p187 = scmp.eq.s32.totalorder %s28, 1
      %p188 = por %p186, %p187
      %p189 = scmp.ne.s32.totalorder %s178, %s179
      %p190 = scmp.eq.s32.totalorder %s28, 0
      %p191 = por %p189, %p190
      %p192 = scmp.ne.s32.totalorder %s178, %s179
      %p193 = scmp.eq.s32.totalorder %s29, 1
      %p194 = por %p192, %p193
      %p196 = scmp.ne.s32.totalorder %s179, %s195
      %p197 = scmp.eq.s32.totalorder %s29, 0
      %p198 = por %p196, %p197
      %s199 = ssub.s32 %s30, %s42
      %p200 = scmp.eq.s32.totalorder %s199, 0
      %s202 = sadd.s32 %s201, 1
      %s203 = scalar_select %p200, %s201, %s202
      %p206 = pneg %p200
      %p207 = scmp.eq.s32.totalorder %s23, 1
      %p208 = por %p206, %p207
      %p209 = scmp.ne.s32.totalorder %s201, %s204
      %p210 = scmp.eq.s32.totalorder %s23, 0
      %p211 = por %p209, %p210
      %p212 = scmp.ne.s32.totalorder %s201, %s204
      %p213 = scmp.eq.s32.totalorder %s28, 1
      %p214 = por %p212, %p213
      %p215 = scmp.ne.s32.totalorder %s204, %s205
      %p216 = scmp.eq.s32.totalorder %s28, 0
      %p217 = por %p215, %p216
      %p218 = scmp.ne.s32.totalorder %s204, %s205
      %p219 = scmp.eq.s32.totalorder %s29, 1
      %p220 = por %p218, %p219
      %p222 = scmp.ne.s32.totalorder %s205, %s221
      %p223 = scmp.eq.s32.totalorder %s29, 0
      %p224 = por %p222, %p223
      %p225 = scmp.le.s32.totalorder 1, %s23
      %p226 = scmp.lt.s32.totalorder %s23, 3
      %p227 = pnand %p225, %p226
      %p228 = pneg %p227
      // Predicated region
      $region9: #{transformer_forward.1} parent=5 // pred_check
        _
      $region10: #{transformer_forward.1} parent=5 // pred_check_branch
        %230 = sbr.rel (%p227) target = $region12
      $region11: #{transformer_forward.1} parent=5 // pred_region
        %s231 = ssub.s32 %s23, 1
        // Predicated region
        $region13: #{transformer_forward.1} parent=11 // pred_check
          %p232 = pneg %p61
        $region14: #{transformer_forward.1} parent=11 // pred_check_branch
          %234 = sbr.rel (%p232) target = $region16
        $region15: #{transformer_forward.1} parent=11 // pred_region
          %s235 = smul.u32 6, %s32
          %s237 = ssub.s32 768, 768
          %238 = vsyncadd [#allocation3], %s237
          %s239 = smul.addr %s235, 128
          %s240 = scalar_lea.hbm %s0, %s239
          %s241 = sshll.u32 [#allocation2], 4
          %s242 = int_to_ptr.vmem [resolvable:$true] %s241
          %247 = dma.hbm_to_vmem [thread:$0]  %s240, 768, %s242, [#allocation3], 128, 128, 8
        $region16: #{transformer_forward.1} parent=11 // pred_fallthru
          _
      $region12: #{transformer_forward.1} parent=5 // pred_fallthru
        _
      %p248 = scmp.lt.s32.totalorder %s23, 2
      // Predicated region
      $region17: #{transformer_forward.1} parent=5 // pred_check
        %p249 = pneg %p248
      $region18: #{transformer_forward.1} parent=5 // pred_check_branch
        %251 = sbr.rel (%p249) target = $region20
      $region19: #{transformer_forward.1} parent=5 // pred_region
        // Predicated region
        $region21: #{transformer_forward.1} parent=19 // pred_check
          %p252 = pneg %p81
        $region22: #{transformer_forward.1} parent=19 // pred_check_branch
          %254 = sbr.rel (%p252) target = $region24
        $region23: #{transformer_forward.1} parent=19 // pred_region
          %s255 = sand.u32 %s23, 1
          %s256 = scalar_lea.sflag [#allocation6], %s255
          %s257 = sand.u32 %s71, 1
          %s258 = smul.addr %s257, 16
          %s259 = scalar_lea.vmem [#allocation5], %s258
          %s261 = ssub.s32 256, 256
          %262 = vsyncadd %s256, %s261
          %s263 = smul.addr %s31, 4
          %s264 = smul.addr %s263, 64
          %s265 = scalar_lea.hbm %s1, %s264
          %s266 = sshll.u32 %s259, 4
          %s267 = int_to_ptr.vmem [resolvable:$true] %s266
          %272 = dma.hbm_to_vmem [thread:$0]  %s265, 256, %s267, %s256, 64, 64, 4
        $region24: #{transformer_forward.1} parent=19 // pred_fallthru
          _
        // Predicated region
        $region25: #{transformer_forward.1} parent=19 // pred_check
          %p273 = pneg %p107
        $region26: #{transformer_forward.1} parent=19 // pred_check_branch
          %275 = sbr.rel (%p273) target = $region28
        $region27: #{transformer_forward.1} parent=19 // pred_region
          %s276 = sand.u32 %s23, 1
          %s277 = scalar_lea.sflag [#allocation6], %s276
          %s278 = sand.u32 %s97, 1
          %s279 = smul.addr %s278, 16
          %s280 = scalar_lea.vmem [#allocation7], %s279
          %s282 = ssub.s32 256, 256
          %283 = vsyncadd %s277, %s282
          %s284 = smul.addr %s31, 4
          %s285 = smul.addr %s284, 64
          %s286 = scalar_lea.hbm %s2, %s285
          %s287 = sshll.u32 %s280, 4
          %s288 = int_to_ptr.vmem [resolvable:$true] %s287
          %293 = dma.hbm_to_vmem [thread:$0]  %s286, 256, %s288, %s277, 64, 64, 4
        $region28: #{transformer_forward.1} parent=19 // pred_fallthru
          _
        // Predicated region
        $region29: #{transformer_forward.1} parent=19 // pred_check
          %p294 = pneg %p133
        $region30: #{transformer_forward.1} parent=19 // pred_check_branch
          %296 = sbr.rel (%p294) target = $region32
        $region31: #{transformer_forward.1} parent=19 // pred_region
          %s297 = sand.u32 %s23, 1
          %s298 = scalar_lea.sflag [#allocation9], %s297
          %s299 = sand.u32 %s123, 1
          %s300 = smul.addr %s299, 16
          %s301 = scalar_lea.vmem [#allocation8], %s300
          %s303 = ssub.s32 256, 256
          %304 = vsyncadd %s298, %s303
          %s305 = smul.addr %s31, 4
          %s306 = smul.addr %s305, 64
          %s307 = scalar_lea.hbm %s3, %s306
          %s308 = sshll.u32 %s301, 4
          %s309 = int_to_ptr.vmem [resolvable:$true] %s308
          %314 = dma.hbm_to_vmem [thread:$0]  %s307, 256, %s309, %s298, 64, 64, 4
        $region32: #{transformer_forward.1} parent=19 // pred_fallthru
          _
        // Predicated region
        $region33: #{transformer_forward.1} parent=19 // pred_check
          %p315 = pneg %p159
        $region34: #{transformer_forward.1} parent=19 // pred_check_branch
          %317 = sbr.rel (%p315) target = $region36
        $region35: #{transformer_forward.1} parent=19 // pred_region
          %s318 = sand.u32 %s23, 1
          %s319 = scalar_lea.sflag [#allocation9], %s318
          %s320 = sand.u32 %s149, 1
          %s321 = smul.addr %s320, 64
          %s322 = scalar_lea.vmem [#allocation10], %s321
          %s324 = ssub.s32 1024, 1024
          %325 = vsyncadd %s319, %s324
          %s326 = smul.addr %s31, 16
          %s327 = smul.addr %s326, 64
          %s328 = scalar_lea.hbm %s4, %s327
          %s329 = sshll.u32 %s322, 4
          %s330 = int_to_ptr.vmem [resolvable:$true] %s329
          %335 = dma.hbm_to_vmem [thread:$0]  %s328, 1024, %s330, %s319, 64, 64, 4
        $region36: #{transformer_forward.1} parent=19 // pred_fallthru
          _
        // Predicated region
        $region37: #{transformer_forward.1} parent=19 // pred_check
          %p336 = pneg %p185
        $region38: #{transformer_forward.1} parent=19 // pred_check_branch
          %338 = sbr.rel (%p336) target = $region40
        $region39: #{transformer_forward.1} parent=19 // pred_region
          %s339 = sand.u32 %s175, 1
          %s340 = scalar_lea.sflag [#allocation12], %s339
          %s341 = sand.u32 %s175, 1
          %s342 = smul.addr %s341, 8
          %s343 = scalar_lea.vmem [#allocation11], %s342
          %s345 = ssub.s32 128, 128
          %346 = vsyncadd %s340, %s345
          %s347 = smul.addr %s31, 128
          %s348 = scalar_lea.hbm %s5, %s347
          %s350 = sshll.u32 %s343, 4
          %s351 = int_to_ptr.vmem [resolvable:$true] %s350
          %353 = dma.hbm_to_vmem [thread:$0]  %s348, 128, %s351, %s340
        $region40: #{transformer_forward.1} parent=19 // pred_fallthru
          _
      $region20: #{transformer_forward.1} parent=5 // pred_fallthru
        _
      %p354 = scmp.le.s32.totalorder 1, %s23
      %p355 = scmp.lt.s32.totalorder %s23, 3
      %p356 = pnand %p354, %p355
      %p357 = pneg %p356
      // Predicated region
      $region41: #{transformer_forward.1} parent=5 // pred_check
        _
      $region42: #{transformer_forward.1} parent=5 // pred_check_branch
        %359 = sbr.rel (%p356) target = $region44
      $region43: #{transformer_forward.1} parent=5 // pred_region
        %s360 = ssub.s32 %s23, 1
        // Predicated region
        $region45: #{transformer_forward.1} parent=43 // pred_check
          %p361 = pneg %p61
        $region46: #{transformer_forward.1} parent=43 // pred_check_branch
          %363 = sbr.rel (%p361) target = $region48
        $region47: #{transformer_forward.1} parent=43 // pred_region
          %364 = dma.done [#allocation3], 768
        $region48: #{transformer_forward.1} parent=43 // pred_fallthru
          _
        %s365 = sand.u32 %s28, 1
        %s366 = scalar_lea.sflag [#allocation6], %s365
        %s367 = sand.u32 %s74, 1
        %s368 = smul.addr %s367, 16
        %s369 = scalar_lea.vmem [#allocation5], %s368
        // Predicated region
        $region49: #{transformer_forward.1} parent=43 // pred_check
          %p370 = pneg %p87
        $region50: #{transformer_forward.1} parent=43 // pred_check_branch
          %372 = sbr.rel (%p370) target = $region52
        $region51: #{transformer_forward.1} parent=43 // pred_region
          %373 = dma.done %s366, 256
        $region52: #{transformer_forward.1} parent=43 // pred_fallthru
          _
        %s374 = sand.u32 %s28, 1
        %s375 = scalar_lea.sflag [#allocation6], %s374
        %s376 = sand.u32 %s100, 1
        %s377 = smul.addr %s376, 16
        %s378 = scalar_lea.vmem [#allocation7], %s377
        // Predicated region
        $region53: #{transformer_forward.1} parent=43 // pred_check
          %p379 = pneg %p113
        $region54: #{transformer_forward.1} parent=43 // pred_check_branch
          %381 = sbr.rel (%p379) target = $region56
        $region55: #{transformer_forward.1} parent=43 // pred_region
          %382 = dma.done %s375, 256
        $region56: #{transformer_forward.1} parent=43 // pred_fallthru
          _
        %s383 = sand.u32 %s28, 1
        %s384 = scalar_lea.sflag [#allocation9], %s383
        %s385 = sand.u32 %s126, 1
        %s386 = smul.addr %s385, 16
        %s387 = scalar_lea.vmem [#allocation8], %s386
        // Predicated region
        $region57: #{transformer_forward.1} parent=43 // pred_check
          %p388 = pneg %p139
        $region58: #{transformer_forward.1} parent=43 // pred_check_branch
          %390 = sbr.rel (%p388) target = $region60
        $region59: #{transformer_forward.1} parent=43 // pred_region
          %391 = dma.done %s384, 256
        $region60: #{transformer_forward.1} parent=43 // pred_fallthru
          _
        %s392 = sand.u32 %s28, 1
        %s393 = scalar_lea.sflag [#allocation9], %s392
        %s394 = sand.u32 %s152, 1
        %s395 = smul.addr %s394, 64
        %s396 = scalar_lea.vmem [#allocation10], %s395
        // Predicated region
        $region61: #{transformer_forward.1} parent=43 // pred_check
          %p397 = pneg %p165
        $region62: #{transformer_forward.1} parent=43 // pred_check_branch
          %399 = sbr.rel (%p397) target = $region64
        $region63: #{transformer_forward.1} parent=43 // pred_region
          %400 = dma.done %s393, 1024
        $region64: #{transformer_forward.1} parent=43 // pred_fallthru
          _
        %s401 = sand.u32 %s178, 1
        %s402 = scalar_lea.sflag [#allocation12], %s401
        %s403 = sand.u32 %s178, 1
        %s404 = smul.addr %s403, 8
        %s405 = scalar_lea.vmem [#allocation11], %s404
        // Predicated region
        $region65: #{transformer_forward.1} parent=43 // pred_check
          %p406 = pneg %p191
        $region66: #{transformer_forward.1} parent=43 // pred_check_branch
          %408 = sbr.rel (%p406) target = $region68
        $region67: #{transformer_forward.1} parent=43 // pred_region
          %409 = dma.done %s402, 128
        $region68: #{transformer_forward.1} parent=43 // pred_fallthru
          _
        %p410 = pneg %p61
        %p411 = pneg %p58
        %s412 = sand.u32 %s28, 1
        %s413 = scalar_lea.sflag [#allocation6], %s412
        %s414 = sand.u32 %s74, 1
        %s415 = smul.addr %s414, 16
        %s416 = scalar_lea.vmem [#allocation5], %s415
        %p417 = pneg %p87
        %p418 = pneg %p84
        %s419 = sand.u32 %s28, 1
        %s420 = scalar_lea.sflag [#allocation6], %s419
        %s421 = sand.u32 %s100, 1
        %s422 = smul.addr %s421, 16
        %s423 = scalar_lea.vmem [#allocation7], %s422
        %p424 = pneg %p113
        %p425 = pneg %p110
        %s426 = sand.u32 %s28, 1
        %s427 = scalar_lea.sflag [#allocation9], %s426
        %s428 = sand.u32 %s126, 1
        %s429 = smul.addr %s428, 16
        %s430 = scalar_lea.vmem [#allocation8], %s429
        %p431 = pneg %p139
        %p432 = pneg %p136
        %s433 = sand.u32 %s28, 1
        %s434 = scalar_lea.sflag [#allocation9], %s433
        %s435 = sand.u32 %s152, 1
        %s436 = smul.addr %s435, 64
        %s437 = scalar_lea.vmem [#allocation10], %s436
        %p438 = pneg %p165
        %p439 = pneg %p162
        %s440 = sand.u32 %s178, 1
        %s441 = scalar_lea.sflag [#allocation12], %s440
        %s442 = sand.u32 %s178, 1
        %s443 = smul.addr %s442, 8
        %s444 = scalar_lea.vmem [#allocation11], %s443
        %p445 = pneg %p191
        %p446 = pneg %p188
        %p447 = pneg %p217
        %p448 = pneg %p214
        %s449 = smul.u32 6, %s32
        %s450 = smul.u32 6, %s32
        %p452 = scmp.eq.s32.totalorder %s33, 0
        // Predicated region
        $region69: #{transformer_forward.1} parent=43 // pred_check
          %p453 = pneg %p452
        $region70: #{transformer_forward.1} parent=43 // pred_check_branch
          %455 = sbr.rel (%p453) target = $region72
        $region71: #{transformer_forward.1} parent=43 // pred_region
          %v456 = vld [vmem:[#allocation2] sm:$0xff]
          %v457 = vld [vmem:[#allocation2 + $0x8] sm:$0xff]
          %v458 = vld [vmem:[#allocation2 + $0x10] sm:$0xff]
          %v459 = vld [vmem:[#allocation2 + $0x18] sm:$0xff]
          %v460 = vld [vmem:[#allocation2 + $0x20] sm:$0xff]
          %v461 = vld [vmem:[#allocation2 + $0x28] sm:$0xff]
          %vm462 = vcmask 261120
          %463 = vst.msk [vmem:[#allocation13] sm:$0xff] %vm462, %v456
          %464 = vst.msk [vmem:[#allocation13 + $0x8] sm:$0xff] %vm462, %v457
          %465 = vst.msk [vmem:[#allocation13 + $0x10] sm:$0xff] %vm462, %v458
          %466 = vst.msk [vmem:[#allocation13 + $0x18] sm:$0xff] %vm462, %v459
          %467 = vst.msk [vmem:[#allocation13 + $0x20] sm:$0xff] %vm462, %v460
          %468 = vst.msk [vmem:[#allocation13 + $0x28] sm:$0xff] %vm462, %v461
        $region72: #{transformer_forward.1} parent=43 // pred_fallthru
          _
        %v469 = vld [vmem:[#allocation13] sm:$0xff]
        %v470 = vld [vmem:[#allocation13 + $0x8] sm:$0xff]
        %v471 = vld [vmem:[#allocation13 + $0x10] sm:$0xff]
        %v472 = vld [vmem:[#allocation13 + $0x18] sm:$0xff]
        %v473 = vld [vmem:[#allocation13 + $0x20] sm:$0xff]
        %v474 = vld [vmem:[#allocation13 + $0x28] sm:$0xff]
        %v475 = vld [vmem:[%s369] sm:$0xf]
        %v476 = vld [vmem:[%s369 + $0x4] sm:$0xf]
        %v477 = vld [vmem:[%s369 + $0x8] sm:$0xf]
        %v478 = vld [vmem:[%s369 + $0xc] sm:$0xf]
        %v479 = vld [vmem:[%s378] sm:$0xf]
        %v480 = vld [vmem:[%s378 + $0x4] sm:$0xf]
        %v481 = vld [vmem:[%s378 + $0x8] sm:$0xf]
        %v482 = vld [vmem:[%s378 + $0xc] sm:$0xf]
        %v483 = vld [vmem:[%s387] sm:$0xf]
        %v484 = vld [vmem:[%s387 + $0x4] sm:$0xf]
        %v485 = vld [vmem:[%s387 + $0x8] sm:$0xf]
        %v486 = vld [vmem:[%s387 + $0xc] sm:$0xf]
        %v487 = vld [vmem:[%s396] sm:$0xf]
        %v488 = vld [vmem:[%s396 + $0x4] sm:$0xf]
        %v489 = vld [vmem:[%s396 + $0x8] sm:$0xf]
        %v490 = vld [vmem:[%s396 + $0xc] sm:$0xf]
        %v491 = vld [vmem:[%s396 + $0x10] sm:$0xf]
        %v492 = vld [vmem:[%s396 + $0x14] sm:$0xf]
        %v493 = vld [vmem:[%s396 + $0x18] sm:$0xf]
        %v494 = vld [vmem:[%s396 + $0x1c] sm:$0xf]
        %v495 = vld [vmem:[%s396 + $0x20] sm:$0xf]
        %v496 = vld [vmem:[%s396 + $0x24] sm:$0xf]
        %v497 = vld [vmem:[%s396 + $0x28] sm:$0xf]
        %v498 = vld [vmem:[%s396 + $0x2c] sm:$0xf]
        %v499 = vld [vmem:[%s396 + $0x30] sm:$0xf]
        %v500 = vld [vmem:[%s396 + $0x34] sm:$0xf]
        %v501 = vld [vmem:[%s396 + $0x38] sm:$0xf]
        %v502 = vld [vmem:[%s396 + $0x3c] sm:$0xf]
        %v503 = vld [vmem:[%s405] sm:$0xff]
        %vm504 = vcmask 261120
        %v505 = vsel %vm504, %v469, 0.0
        %506 = vadd.xlane.f32.xlu0 %v505
        %v507 = vpop.xlane.xlu0 %506
        %v508 = vsel %vm504, %v470, 0.0
        %509 = vadd.xlane.f32.xlu0 %v508
        %v510 = vpop.xlane.xlu0 %509
        %v511 = vsel %vm504, %v471, 0.0
        %512 = vadd.xlane.f32.xlu0 %v511
        %v513 = vpop.xlane.xlu0 %512
        %v514 = vsel %vm504, %v472, 0.0
        %515 = vadd.xlane.f32.xlu0 %v514
        %v516 = vpop.xlane.xlu0 %515
        %v517 = vsel %vm504, %v473, 0.0
        %518 = vadd.xlane.f32.xlu0 %v517
        %v519 = vpop.xlane.xlu0 %518
        %v520 = vsel %vm504, %v474, 0.0
        %521 = vadd.xlane.f32.xlu0 %v520
        %v522 = vpop.xlane.xlu0 %521
        %v523 = vrcp.pop 32.0
        %v524 = vmul.f32 %v507, %v523
        %v525 = vmul.f32 %v510, %v523
        %v526 = vmul.f32 %v513, %v523
        %v527 = vmul.f32 %v516, %v523
        %v528 = vmul.f32 %v519, %v523
        %v529 = vmul.f32 %v522, %v523
        %v530 = vsub.f32 %v469, %v524
        %v531 = vsub.f32 %v470, %v525
        %v532 = vsub.f32 %v471, %v526
        %v533 = vsub.f32 %v472, %v527
        %v534 = vsub.f32 %v473, %v528
        %v535 = vsub.f32 %v474, %v529
        %v536 = vmul.f32 %v530, %v530
        %v537 = vmul.f32 %v531, %v531
        %v538 = vmul.f32 %v532, %v532
        %v539 = vmul.f32 %v533, %v533
        %v540 = vmul.f32 %v534, %v534
        %v541 = vmul.f32 %v535, %v535
        %v542 = vsel %vm504, %v536, 0.0
        %543 = vadd.xlane.f32.xlu0 %v542
        %v544 = vpop.xlane.xlu0 %543
        %v545 = vsel %vm504, %v537, 0.0
        %546 = vadd.xlane.f32.xlu0 %v545
        %v547 = vpop.xlane.xlu0 %546
        %v548 = vsel %vm504, %v538, 0.0
        %549 = vadd.xlane.f32.xlu0 %v548
        %v550 = vpop.xlane.xlu0 %549
        %v551 = vsel %vm504, %v539, 0.0
        %552 = vadd.xlane.f32.xlu0 %v551
        %v553 = vpop.xlane.xlu0 %552
        %v554 = vsel %vm504, %v540, 0.0
        %555 = vadd.xlane.f32.xlu0 %v554
        %v556 = vpop.xlane.xlu0 %555
        %v557 = vsel %vm504, %v541, 0.0
        %558 = vadd.xlane.f32.xlu0 %v557
        %v559 = vpop.xlane.xlu0 %558
        %v560 = vmul.f32 %v544, %v523
        %v561 = vmul.f32 %v547, %v523
        %v562 = vmul.f32 %v550, %v523
        %v563 = vmul.f32 %v553, %v523
        %v564 = vmul.f32 %v556, %v523
        %v565 = vmul.f32 %v559, %v523
        %v566 = vadd.f32 %v560, 1e-06
        %v567 = vadd.f32 %v561, 1e-06
        %v568 = vadd.f32 %v562, 1e-06
        %v569 = vadd.f32 %v563, 1e-06
        %v570 = vadd.f32 %v564, 1e-06
        %v571 = vadd.f32 %v565, 1e-06
        %v572 = vrsqrt.pop %v566
        %v573 = vrsqrt.pop %v567
        %v574 = vrsqrt.pop %v568
        %v575 = vrsqrt.pop %v569
        %v576 = vrsqrt.pop %v570
        %v577 = vrsqrt.pop %v571
        %v578 = vmul.f32 %v530, %v572
        %v579 = vmul.f32 %v531, %v573
        %v580 = vmul.f32 %v532, %v574
        %v581 = vmul.f32 %v533, %v575
        %v582 = vmul.f32 %v534, %v576
        %v583 = vmul.f32 %v535, %v577
        %v584 = vlaneseq
        %v585 = vshrl.u32 %v584, 7
        %v586 = vsub.s32 0, %v585
        %v587 = vrot.slane %v503, %v586
        %v588 = vmul.f32 %v578, %v587
        %v589 = vmul.f32 %v579, %v587
        %v590 = vmul.f32 %v580, %v587
        %v591 = vmul.f32 %v581, %v587
        %v592 = vmul.f32 %v582, %v587
        %v593 = vmul.f32 %v583, %v587
        %v594 = vlaneseq
        %v595 = vshrl.u32 %v594, 7
        %v596 = vsub.s32 1, %v595
        %v597 = vrot.slane %v503, %v596
        %v598 = vadd.f32 %v588, %v597
        %v599 = vadd.f32 %v589, %v597
        %v600 = vadd.f32 %v590, %v597
        %v601 = vadd.f32 %v591, %v597
        %v602 = vadd.f32 %v592, %v597
        %v603 = vadd.f32 %v593, %v597
        %v604 = vpack.c.bf16 %v599, %v598
        %v605 = vpack.c.bf16 %v601, %v600
        %v606 = vpack.c.bf16 %v603, %v602
        %v607 = vlaneseq
        %v608 = vshrl.u32 %v607, 7
        %v609 = vsub.s32 6, %v608
        %v610 = vrot.slane %v503, %v609
        %v615 = vunpack.c.l.b16 %v475
        %v616 = vunpack.c.l.b16 %v476
        %v617 = vunpack.c.l.b16 %v477
        %v618 = vunpack.c.l.b16 %v478
        %v619 = vpack.c.b16 %v616, %v615
        %v620 = vpack.c.b16 %v618, %v617
        %v624 = vsel %vm504, %v604, 0
        %v627 = vsel %vm504, %v605, 0
        %v630 = vsel %vm504, %v606, 0
        %632 = vmatprep.subr.bf16.mxu0 0
        %633 = vmatpush1.bf16.msra.mxu0 %v619
        %634 = vmatprep.subr.bf16.mxu0 0
        %635 = vmatpush1.bf16.msra.mxu0 %v620
        %636 = vmatprep.subr.bf16.mxu0 0
        %637 = vmatpush1.bf16.msra.mxu0 0
        %638 = vmatprep.subr.bf16.mxu0 0
        %639 = vmatpush1.bf16.msra.mxu0 0
        %640 = vmatprep.subr.bf16.mxu0 0
        %641 = vmatpush1.bf16.msra.mxu0 0
        %642 = vmatprep.subr.bf16.mxu0 0
        %643 = vmatpush1.bf16.msra.mxu0 0
        %644 = vmatprep.subr.bf16.mxu0 0
        %645 = vmatpush1.bf16.msra.mxu0 0
        %646 = vmatprep.subr.bf16.mxu0 0
        %647 = vmatpush1.bf16.msra.mxu0 0
        %648 = vmatprep.subr.bf16.mxu0 0
        %649 = vmatpush1.bf16.msra.mxu0 0
        %650 = vmatprep.subr.bf16.mxu0 0
        %651 = vmatpush1.bf16.msra.mxu0 0
        %652 = vmatprep.subr.bf16.mxu0 0
        %653 = vmatpush1.bf16.msra.mxu0 0
        %654 = vmatprep.subr.bf16.mxu0 0
        %655 = vmatpush1.bf16.msra.mxu0 0
        %656 = vmatprep.subr.bf16.mxu0 0
        %657 = vmatpush1.bf16.msra.mxu0 0
        %658 = vmatprep.subr.bf16.mxu0 0
        %659 = vmatpush1.bf16.msra.mxu0 0
        %660 = vmatprep.subr.bf16.mxu0 0
        %661 = vmatpush1.bf16.msra.mxu0 0
        %662 = vmatprep.subr.bf16.mxu0 0
        %663 = vmatpush1.bf16.msra.mxu0 0
        %664 = vmatprep.mubr.bf16.mxu0 0
        %665 = vmatmul.mubr.bf16.gmra.mrb[0].mxu0 %v624
        %v666 = vpop.f32.mrb[0].mxu0
        %v667 = vadd.f32 %v610, %v666
        %v668 = vpop.f32.mrb[0].mxu0
        %v669 = vpop.f32.mrb[0].mxu0
        %v670 = vadd.f32 %v610, %v669
        %v671 = vpop.f32.mrb[0].mxu0
        %672 = vmatprep.mubr.bf16.mxu0 0
        %673 = vmatmul.mubr.bf16.gmra.mrb[0].mxu0 %v627
        %v674 = vpop.f32.mrb[0].mxu0
        %v675 = vadd.f32 %v610, %v674
        %v676 = vpop.f32.mrb[0].mxu0
        %v677 = vpop.f32.mrb[0].mxu0
        %v678 = vadd.f32 %v610, %v677
        %v679 = vpop.f32.mrb[0].mxu0
        %680 = vmatprep.mubr.bf16.mxu0 0
        %681 = vmatmul.mubr.bf16.gmra.mrb[0].mxu0 %v630
        %v682 = vpop.f32.mrb[0].mxu0
        %v683 = vadd.f32 %v610, %v682
        %v684 = vpop.f32.mrb[0].mxu0
        %v685 = vpop.f32.mrb[0].mxu0
        %v686 = vadd.f32 %v610, %v685
        %v687 = vpop.f32.mrb[0].mxu0
        %688 = vdwg.mxu0
        %v689 = vlaneseq
        %v690 = vand.u32 %v689, 127
        %vm691 = vcmp.lt.s32.totalorder %v690, 17
        %v692 = vpack.c.bf16 %v670, %v667
        %v693 = vpack.c.bf16 %v675, %v675
        %v694 = vpack.c.bf16 %v683, %v678
        %v695 = vpack.c.bf16 %v686, %v686
        %698 = vrot.lane.b32.xlu0 %v692, 96
        %v699 = vpop.permute.xlu0 %698
        %700 = vrot.lane.b32.xlu0 %v693, 96
        %v701 = vpop.permute.xlu0 %700
        %vm702 = vcmask 64512
        %v704 = vsel %vm702, %v692, 0
        %v707 = vsel %vm702, %v693, 0
        %v710 = vsel %vm702, %v699, 0
        %v713 = vsel %vm702, %v701, 0
        %715 = vmatprep.subr.bf16.mxu0 0
        %716 = vmatpush1.bf16.xpose.msra.mxu0 %v710
        %717 = vmatprep.subr.bf16.mxu0 0
        %718 = vmatpush1.bf16.xpose.msra.mxu0 %v713
        %719 = vmatprep.subr.bf16.mxu0 0
        %720 = vmatpush1.bf16.xpose.msra.mxu0 0
        %721 = vmatprep.subr.bf16.mxu0 0
        %722 = vmatpush1.bf16.xpose.msra.mxu0 0
        %723 = vmatprep.subr.bf16.mxu0 0
        %724 = vmatpush1.bf16.xpose.msra.mxu0 0
        %725 = vmatprep.subr.bf16.mxu0 0
        %726 = vmatpush1.bf16.xpose.msra.mxu0 0
        %727 = vmatprep.subr.bf16.mxu0 0
        %728 = vmatpush1.bf16.xpose.msra.mxu0 0
        %729 = vmatprep.subr.bf16.mxu0 0
        %730 = vmatpush1.bf16.xpose.msra.mxu0 0
        %731 = vmatprep.subr.bf16.mxu0 0
        %732 = vmatpush1.bf16.xpose.msra.mxu0 0
        %733 = vmatprep.subr.bf16.mxu0 0
        %734 = vmatpush1.bf16.xpose.msra.mxu0 0
        %735 = vmatprep.subr.bf16.mxu0 0
        %736 = vmatpush1.bf16.xpose.msra.mxu0 0
        %737 = vmatprep.subr.bf16.mxu0 0
        %738 = vmatpush1.bf16.xpose.msra.mxu0 0
        %739 = vmatprep.subr.bf16.mxu0 0
        %740 = vmatpush1.bf16.xpose.msra.mxu0 0
        %741 = vmatprep.subr.bf16.mxu0 0
        %742 = vmatpush1.bf16.xpose.msra.mxu0 0
        %743 = vmatprep.subr.bf16.mxu0 0
        %744 = vmatpush1.bf16.xpose.msra.mxu0 0
        %745 = vmatprep.subr.bf16.mxu0 0
        %746 = vmatpush1.bf16.xpose.msra.mxu0 0
        %747 = vmatprep.mubr.bf16.mxu0 0
        %748 = vmatmul.mubr.bf16.gmra.mrb[0].mxu0 %v704
        %v749 = vpop.f32.mrb[0].mxu0
        %v750 = vadd.f32 0.0, %v749
        %v751 = vpop.f32.mrb[0].mxu0
        %v752 = vpop.f32.mrb[0].mxu0
        %v753 = vadd.f32 0.0, %v752
        %v754 = vpop.f32.mrb[0].mxu0
        %755 = vmatprep.mubr.bf16.mxu0 0
        %756 = vmatmul.mubr.bf16.gmra.mrb[0].mxu0 %v707
        %v757 = vpop.f32.mrb[0].mxu0
        %v758 = vadd.f32 0.0, %v757
        %v759 = vpop.f32.mrb[0].mxu0
        %v760 = vpop.f32.mrb[0].mxu0
        %v761 = vpop.f32.mrb[0].mxu0
        %762 = vdwg.mxu0
        %765 = vrot.lane.b32.xlu0 %v694, 96
        %v766 = vpop.permute.xlu0 %765
        %767 = vrot.lane.b32.xlu0 %v695, 96
        %v768 = vpop.permute.xlu0 %767
        %v770 = vsel %vm702, %v694, 0
        %v773 = vsel %vm702, %v695, 0
        %v776 = vsel %vm702, %v766, 0
        %v779 = vsel %vm702, %v768, 0
        %781 = vmatprep.subr.bf16.mxu0 0
        %782 = vmatpush1.bf16.xpose.msra.mxu0 %v776
        %783 = vmatprep.subr.bf16.mxu0 0
        %784 = vmatpush1.bf16.xpose.msra.mxu0 %v779
        %785 = vmatprep.subr.bf16.mxu0 0
        %786 = vmatpush1.bf16.xpose.msra.mxu0 0
        %787 = vmatprep.subr.bf16.mxu0 0
        %788 = vmatpush1.bf16.xpose.msra.mxu0 0
        %789 = vmatprep.subr.bf16.mxu0 0
        %790 = vmatpush1.bf16.xpose.msra.mxu0 0
        %791 = vmatprep.subr.bf16.mxu0 0
        %792 = vmatpush1.bf16.xpose.msra.mxu0 0
        %793 = vmatprep.subr.bf16.mxu0 0
        %794 = vmatpush1.bf16.xpose.msra.mxu0 0
        %795 = vmatprep.subr.bf16.mxu0 0
        %796 = vmatpush1.bf16.xpose.msra.mxu0 0
        %797 = vmatprep.subr.bf16.mxu0 0
        %798 = vmatpush1.bf16.xpose.msra.mxu0 0
        %799 = vmatprep.subr.bf16.mxu0 0
        %800 = vmatpush1.bf16.xpose.msra.mxu0 0
        %801 = vmatprep.subr.bf16.mxu0 0
        %802 = vmatpush1.bf16.xpose.msra.mxu0 0
        %803 = vmatprep.subr.bf16.mxu0 0
        %804 = vmatpush1.bf16.xpose.msra.mxu0 0
        %805 = vmatprep.subr.bf16.mxu0 0
        %806 = vmatpush1.bf16.xpose.msra.mxu0 0
        %807 = vmatprep.subr.bf16.mxu0 0
        %808 = vmatpush1.bf16.xpose.msra.mxu0 0
        %809 = vmatprep.subr.bf16.mxu0 0
        %810 = vmatpush1.bf16.xpose.msra.mxu0 0
        %811 = vmatprep.subr.bf16.mxu0 0
        %812 = vmatpush1.bf16.xpose.msra.mxu0 0
        %813 = vmatprep.mubr.bf16.mxu0 0
        %814 = vmatmul.mubr.bf16.gmra.mrb[0].mxu0 %v770
        %v815 = vpop.f32.mrb[0].mxu0
        %v816 = vadd.f32 0.0, %v815
        %v817 = vpop.f32.mrb[0].mxu0
        %v818 = vpop.f32.mrb[0].mxu0
        %v819 = vadd.f32 0.0, %v818
        %v820 = vpop.f32.mrb[0].mxu0
        %821 = vmatprep.mubr.bf16.mxu0 0
        %822 = vmatmul.mubr.bf16.gmra.mrb[0].mxu0 %v773
        %v823 = vpop.f32.mrb[0].mxu0
        %v824 = vadd.f32 0.0, %v823
        %v825 = vpop.f32.mrb[0].mxu0
        %v826 = vpop.f32.mrb[0].mxu0
        %v827 = vpop.f32.mrb[0].mxu0
        %828 = vdwg.mxu0
        %v829 = vmul.f32 %v750, 0.35355338
        %v830 = vmul.f32 %v753, 0.35355338
        %v831 = vmul.f32 %v758, 0.35355338
        %v832 = vmul.f32 %v816, 0.35355338
        %v833 = vmul.f32 %v819, 0.35355338
        %v834 = vmul.f32 %v824, 0.35355338
        %v835 = vsel %vm691, %v829, -1e+30
        %v836 = vsel %vm691, %v830, -1e+30
        %v837 = vsel %vm691, %v831, -1e+30
        %v838 = vsel %vm691, %v832, -1e+30
        %v839 = vsel %vm691, %v833, -1e+30
        %v840 = vsel %vm691, %v834, -1e+30
        %vm841 = vcmask 195584
        %v842 = vsel %vm841, %v835, -inf
        %843 = vmax.xlane.f32.xlu0 %v842
        %v844 = vpop.xlane.xlu0 %843
        %v845 = vsel %vm841, %v836, -inf
        %846 = vmax.xlane.f32.xlu0 %v845
        %v847 = vpop.xlane.xlu0 %846
        %v848 = vsel %vm841, %v837, -inf
        %849 = vmax.xlane.f32.xlu0 %v848
        %v850 = vpop.xlane.xlu0 %849
        %v851 = vsel %vm841, %v838, -inf
        %852 = vmax.xlane.f32.xlu0 %v851
        %v853 = vpop.xlane.xlu0 %852
        %v854 = vsel %vm841, %v839, -inf
        %855 = vmax.xlane.f32.xlu0 %v854
        %v856 = vpop.xlane.xlu0 %855
        %v857 = vsel %vm841, %v840, -inf
        %858 = vmax.xlane.f32.xlu0 %v857
        %v859 = vpop.xlane.xlu0 %858
        %v860 = vsub.f32 %v835, %v844
        %v861 = vsub.f32 %v836, %v847
        %v862 = vsub.f32 %v837, %v850
        %v863 = vsub.f32 %v838, %v853
        %v864 = vsub.f32 %v839, %v856
        %v865 = vsub.f32 %v840, %v859
        %v866 = vmul.f32 %v860, 1.442695
        %v867 = vpow.pop %v866
        %v868 = vmul.f32 %v861, 1.442695
        %v869 = vpow.pop %v868
        %v870 = vmul.f32 %v862, 1.442695
        %v871 = vpow.pop %v870
        %v872 = vmul.f32 %v863, 1.442695
        %v873 = vpow.pop %v872
        %v874 = vmul.f32 %v864, 1.442695
        %v875 = vpow.pop %v874
        %v876 = vmul.f32 %v865, 1.442695
        %v877 = vpow.pop %v876
        %v878 = vsel %vm841, %v867, 0.0
        %879 = vadd.xlane.f32.xlu0 %v878
        %v880 = vpop.xlane.xlu0 %879
        %v881 = vsel %vm841, %v869, 0.0
        %882 = vadd.xlane.f32.xlu0 %v881
        %v883 = vpop.xlane.xlu0 %882
        %v884 = vsel %vm841, %v871, 0.0
        %885 = vadd.xlane.f32.xlu0 %v884
        %v886 = vpop.xlane.xlu0 %885
        %v887 = vsel %vm841, %v873, 0.0
        %888 = vadd.xlane.f32.xlu0 %v887
        %v889 = vpop.xlane.xlu0 %888
        %v890 = vsel %vm841, %v875, 0.0
        %891 = vadd.xlane.f32.xlu0 %v890
        %v892 = vpop.xlane.xlu0 %891
        %v893 = vsel %vm841, %v877, 0.0
        %894 = vadd.xlane.f32.xlu0 %v893
        %v895 = vpop.xlane.xlu0 %894
        %v896 = vrcp.pop %v880
        %v897 = vrcp.pop %v883
        %v898 = vrcp.pop %v886
        %v899 = vrcp.pop %v889
        %v900 = vrcp.pop %v892
        %v901 = vrcp.pop %v895
        %v902 = vmul.f32 %v867, %v896
        %v903 = vmul.f32 %v869, %v897
        %v904 = vmul.f32 %v871, %v898
        %v905 = vmul.f32 %v873, %v899
        %v906 = vmul.f32 %v875, %v900
        %v907 = vmul.f32 %v877, %v901
        %v908 = vpack.c.bf16 %v903, %v902
        %v909 = vpack.c.bf16 %v904, %v904
        %v910 = vpack.c.bf16 %v906, %v905
        %v911 = vpack.c.bf16 %v907, %v907
        %912 = vrot.lane.b32.xlu0 %v692, 64
        %v913 = vpop.permute.xlu0 %912
        %914 = vrot.lane.b32.xlu0 %v693, 64
        %v915 = vpop.permute.xlu0 %914
        %v918 = vsel %vm841, %v908, 0
        %v921 = vsel %vm841, %v909, 0
        %vm923 = vcmask 1043456
        %v925 = vsel %vm923, %v915, 0
        %927 = vmatprep.subr.bf16.mxu0 0
        %928 = vmatpush1.bf16.msra.mxu0 %v913
        %929 = vmatprep.subr.bf16.mxu0 0
        %930 = vmatpush1.bf16.msra.mxu0 %v925
        %931 = vmatprep.subr.bf16.mxu0 0
        %932 = vmatpush1.bf16.msra.mxu0 0
        %933 = vmatprep.subr.bf16.mxu0 0
        %934 = vmatpush1.bf16.msra.mxu0 0
        %935 = vmatprep.subr.bf16.mxu0 0
        %936 = vmatpush1.bf16.msra.mxu0 0
        %937 = vmatprep.subr.bf16.mxu0 0
        %938 = vmatpush1.bf16.msra.mxu0 0
        %939 = vmatprep.subr.bf16.mxu0 0
        %940 = vmatpush1.bf16.msra.mxu0 0
        %941 = vmatprep.subr.bf16.mxu0 0
        %942 = vmatpush1.bf16.msra.mxu0 0
        %943 = vmatprep.subr.bf16.mxu0 0
        %944 = vmatpush1.bf16.msra.mxu0 0
        %945 = vmatprep.subr.bf16.mxu0 0
        %946 = vmatpush1.bf16.msra.mxu0 0
        %947 = vmatprep.subr.bf16.mxu0 0
        %948 = vmatpush1.bf16.msra.mxu0 0
        %949 = vmatprep.subr.bf16.mxu0 0
        %950 = vmatpush1.bf16.msra.mxu0 0
        %951 = vmatprep.subr.bf16.mxu0 0
        %952 = vmatpush1.bf16.msra.mxu0 0
        %953 = vmatprep.subr.bf16.mxu0 0
        %954 = vmatpush1.bf16.msra.mxu0 0
        %955 = vmatprep.subr.bf16.mxu0 0
        %956 = vmatpush1.bf16.msra.mxu0 0
        %957 = vmatprep.subr.bf16.mxu0 0
        %958 = vmatpush1.bf16.msra.mxu0 0
        %959 = vmatprep.mubr.bf16.mxu0 0
        %960 = vmatmul.mubr.bf16.gmra.mrb[0].mxu0 %v918
        %v961 = vpop.f32.mrb[0].mxu0
        %v962 = vadd.f32 0.0, %v961
        %v963 = vpop.f32.mrb[0].mxu0
        %v964 = vpop.f32.mrb[0].mxu0
        %v965 = vadd.f32 0.0, %v964
        %v966 = vpop.f32.mrb[0].mxu0
        %967 = vmatprep.mubr.bf16.mxu0 0
        %968 = vmatmul.mubr.bf16.gmra.mrb[0].mxu0 %v921
        %v969 = vpop.f32.mrb[0].mxu0
        %v970 = vadd.f32 0.0, %v969
        %v971 = vpop.f32.mrb[0].mxu0
        %v972 = vpop.f32.mrb[0].mxu0
        %v973 = vpop.f32.mrb[0].mxu0
        %974 = vdwg.mxu0
        %975 = vrot.lane.b32.xlu0 %v694, 64
        %v976 = vpop.permute.xlu0 %975
        %977 = vrot.lane.b32.xlu0 %v695, 64
        %v978 = vpop.permute.xlu0 %977
        %v981 = vsel %vm841, %v910, 0
        %v984 = vsel %vm841, %v911, 0
        %v987 = vsel %vm923, %v978, 0
        %989 = vmatprep.subr.bf16.mxu0 0
        %990 = vmatpush1.bf16.msra.mxu0 %v976
        %991 = vmatprep.subr.bf16.mxu0 0
        %992 = vmatpush1.bf16.msra.mxu0 %v987
        %993 = vmatprep.subr.bf16.mxu0 0
        %994 = vmatpush1.bf16.msra.mxu0 0
        %995 = vmatprep.subr.bf16.mxu0 0
        %996 = vmatpush1.bf16.msra.mxu0 0
        %997 = vmatprep.subr.bf16.mxu0 0
        %998 = vmatpush1.bf16.msra.mxu0 0
        %999 = vmatprep.subr.bf16.mxu0 0
        %1000 = vmatpush1.bf16.msra.mxu0 0
        %1001 = vmatprep.subr.bf16.mxu0 0
        %1002 = vmatpush1.bf16.msra.mxu0 0
        %1003 = vmatprep.subr.bf16.mxu0 0
        %1004 = vmatpush1.bf16.msra.mxu0 0
        %1005 = vmatprep.subr.bf16.mxu0 0
        %1006 = vmatpush1.bf16.msra.mxu0 0
        %1007 = vmatprep.subr.bf16.mxu0 0
        %1008 = vmatpush1.bf16.msra.mxu0 0
        %1009 = vmatprep.subr.bf16.mxu0 0
        %1010 = vmatpush1.bf16.msra.mxu0 0
        %1011 = vmatprep.subr.bf16.mxu0 0
        %1012 = vmatpush1.bf16.msra.mxu0 0
        %1013 = vmatprep.subr.bf16.mxu0 0
        %1014 = vmatpush1.bf16.msra.mxu0 0
        %1015 = vmatprep.subr.bf16.mxu0 0
        %1016 = vmatpush1.bf16.msra.mxu0 0
        %1017 = vmatprep.subr.bf16.mxu0 0
        %1018 = vmatpush1.bf16.msra.mxu0 0
        %1019 = vmatprep.subr.bf16.mxu0 0
        %1020 = vmatpush1.bf16.msra.mxu0 0
        %1021 = vmatprep.mubr.bf16.mxu0 0
        %1022 = vmatmul.mubr.bf16.gmra.mrb[0].mxu0 %v981
        %v1023 = vpop.f32.mrb[0].mxu0
        %v1024 = vadd.f32 0.0, %v1023
        %v1025 = vpop.f32.mrb[0].mxu0
        %v1026 = vpop.f32.mrb[0].mxu0
        %v1027 = vadd.f32 0.0, %v1026
        %v1028 = vpop.f32.mrb[0].mxu0
        %1029 = vmatprep.mubr.bf16.mxu0 0
        %1030 = vmatmul.mubr.bf16.gmra.mrb[0].mxu0 %v984
        %v1031 = vpop.f32.mrb[0].mxu0
        %v1032 = vadd.f32 0.0, %v1031
        %v1033 = vpop.f32.mrb[0].mxu0
        %v1034 = vpop.f32.mrb[0].mxu0
        %v1035 = vpop.f32.mrb[0].mxu0
        %1036 = vdwg.mxu0
        %v1037 = vpack.c.bf16 %v965, %v962
        %v1038 = vpack.c.bf16 %v1024, %v970
        %v1039 = vpack.c.bf16 %v1032, %v1027
        %1040 = vrot.lane.b32.xlu0 %v692, 120
        %v1041 = vpop.permute.xlu0 %1040
        %1042 = vrot.lane.b32.xlu0 %v693, 120
        %v1043 = vpop.permute.xlu0 %1042
        %1044 = vrot.lane.b32.xlu0 %v692, 88
        %v1045 = vpop.permute.xlu0 %1044
        %1046 = vrot.lane.b32.xlu0 %v693, 88
        %v1047 = vpop.permute.xlu0 %1046
        %v1049 = vsel %vm702, %v1041, 0
        %v1052 = vsel %vm702, %v1043, 0
        %v1055 = vsel %vm702, %v1045, 0
        %v1058 = vsel %vm702, %v1047, 0
        %1060 = vmatprep.subr.bf16.mxu0 0
        %1061 = vmatpush1.bf16.xpose.msra.mxu0 %v1055
        %1062 = vmatprep.subr.bf16.mxu0 0
        %1063 = vmatpush1.bf16.xpose.msra.mxu0 %v1058
        %1064 = vmatprep.subr.bf16.mxu0 0
        %1065 = vmatpush1.bf16.xpose.msra.mxu0 0
        %1066 = vmatprep.subr.bf16.mxu0 0
        %1067 = vmatpush1.bf16.xpose.msra.mxu0 0
        %1068 = vmatprep.subr.bf16.mxu0 0
        %1069 = vmatpush1.bf16.xpose.msra.mxu0 0
        %1070 = vmatprep.subr.bf16.mxu0 0
        %1071 = vmatpush1.bf16.xpose.msra.mxu0 0
        %1072 = vmatprep.subr.bf16.mxu0 0
        %1073 = vmatpush1.bf16.xpose.msra.mxu0 0
        %1074 = vmatprep.subr.bf16.mxu0 0
        %1075 = vmatpush1.bf16.xpose.msra.mxu0 0
        %1076 = vmatprep.subr.bf16.mxu0 0
        %1077 = vmatpush1.bf16.xpose.msra.mxu0 0
        %1078 = vmatprep.subr.bf16.mxu0 0
        %1079 = vmatpush1.bf16.xpose.msra.mxu0 0
        %1080 = vmatprep.subr.bf16.mxu0 0
        %1081 = vmatpush1.bf16.xpose.msra.mxu0 0
        %1082 = vmatprep.subr.bf16.mxu0 0
        %1083 = vmatpush1.bf16.xpose.msra.mxu0 0
        %1084 = vmatprep.subr.bf16.mxu0 0
        %1085 = vmatpush1.bf16.xpose.msra.mxu0 0
        %1086 = vmatprep.subr.bf16.mxu0 0
        %1087 = vmatpush1.bf16.xpose.msra.mxu0 0
        %1088 = vmatprep.subr.bf16.mxu0 0
        %1089 = vmatpush1.bf16.xpose.msra.mxu0 0
        %1090 = vmatprep.subr.bf16.mxu0 0
        %1091 = vmatpush1.bf16.xpose.msra.mxu0 0
        %1092 = vmatprep.mubr.bf16.mxu0 0
        %1093 = vmatmul.mubr.bf16.gmra.mrb[0].mxu0 %v1049
        %v1094 = vpop.f32.mrb[0].mxu0
        %v1095 = vadd.f32 0.0, %v1094
        %v1096 = vpop.f32.mrb[0].mxu0
        %v1097 = vpop.f32.mrb[0].mxu0
        %v1098 = vadd.f32 0.0, %v1097
        %v1099 = vpop.f32.mrb[0].mxu0
        %1100 = vmatprep.mubr.bf16.mxu0 0
        %1101 = vmatmul.mubr.bf16.gmra.mrb[0].mxu0 %v1052
        %v1102 = vpop.f32.mrb[0].mxu0
        %v1103 = vadd.f32 0.0, %v1102
        %v1104 = vpop.f32.mrb[0].mxu0
        %v1105 = vpop.f32.mrb[0].mxu0
        %v1106 = vpop.f32.mrb[0].mxu0
        %1107 = vdwg.mxu0
        %1108 = vrot.lane.b32.xlu0 %v694, 120
        %v1109 = vpop.permute.xlu0 %1108
        %1110 = vrot.lane.b32.xlu0 %v695, 120
        %v1111 = vpop.permute.xlu0 %1110
        %1112 = vrot.lane.b32.xlu0 %v694, 88
        %v1113 = vpop.permute.xlu0 %1112
        %1114 = vrot.lane.b32.xlu0 %v695, 88
        %v1115 = vpop.permute.xlu0 %1114
        %v1117 = vsel %vm702, %v1109, 0
        %v1120 = vsel %vm702, %v1111, 0
        %v1123 = vsel %vm702, %v1113, 0
        %v1126 = vsel %vm702, %v1115, 0
        %1128 = vmatprep.subr.bf16.mxu0 0
        %1129 = vmatpush1.bf16.xpose.msra.mxu0 %v1123
        %1130 = vmatprep.subr.bf16.mxu0 0
        %1131 = vmatpush1.bf16.xpose.msra.mxu0 %v1126
        %1132 = vmatprep.subr.bf16.mxu0 0
        %1133 = vmatpush1.bf16.xpose.msra.mxu0 0
        %1134 = vmatprep.subr.bf16.mxu0 0
        %1135 = vmatpush1.bf16.xpose.msra.mxu0 0
        %1136 = vmatprep.subr.bf16.mxu0 0
        %1137 = vmatpush1.bf16.xpose.msra.mxu0 0
        %1138 = vmatprep.subr.bf16.mxu0 0
        %1139 = vmatpush1.bf16.xpose.msra.mxu0 0
        %1140 = vmatprep.subr.bf16.mxu0 0
        %1141 = vmatpush1.bf16.xpose.msra.mxu0 0
        %1142 = vmatprep.subr.bf16.mxu0 0
        %1143 = vmatpush1.bf16.xpose.msra.mxu0 0
        %1144 = vmatprep.subr.bf16.mxu0 0
        %1145 = vmatpush1.bf16.xpose.msra.mxu0 0
        %1146 = vmatprep.subr.bf16.mxu0 0
        %1147 = vmatpush1.bf16.xpose.msra.mxu0 0
        %1148 = vmatprep.subr.bf16.mxu0 0
        %1149 = vmatpush1.bf16.xpose.msra.mxu0 0
        %1150 = vmatprep.subr.bf16.mxu0 0
        %1151 = vmatpush1.bf16.xpose.msra.mxu0 0
        %1152 = vmatprep.subr.bf16.mxu0 0
        %1153 = vmatpush1.bf16.xpose.msra.mxu0 0
        %1154 = vmatprep.subr.bf16.mxu0 0
        %1155 = vmatpush1.bf16.xpose.msra.mxu0 0
        %1156 = vmatprep.subr.bf16.mxu0 0
        %1157 = vmatpush1.bf16.xpose.msra.mxu0 0
        %1158 = vmatprep.subr.bf16.mxu0 0
        %1159 = vmatpush1.bf16.xpose.msra.mxu0 0
        %1160 = vmatprep.mubr.bf16.mxu0 0
        %1161 = vmatmul.mubr.bf16.gmra.mrb[0].mxu0 %v1117
        %v1162 = vpop.f32.mrb[0].mxu0
        %v1163 = vadd.f32 0.0, %v1162
        %v1164 = vpop.f32.mrb[0].mxu0
        %v1165 = vpop.f32.mrb[0].mxu0
        %v1166 = vadd.f32 0.0, %v1165
        %v1167 = vpop.f32.mrb[0].mxu0
        %1168 = vmatprep.mubr.bf16.mxu0 0
        %1169 = vmatmul.mubr.bf16.gmra.mrb[0].mxu0 %v1120
        %v1170 = vpop.f32.mrb[0].mxu0
        %v1171 = vadd.f32 0.0, %v1170
        %v1172 = vpop.f32.mrb[0].mxu0
        %v1173 = vpop.f32.mrb[0].mxu0
        %v1174 = vpop.f32.mrb[0].mxu0
        %1175 = vdwg.mxu0
        %v1176 = vmul.f32 %v1095, 0.35355338
        %v1177 = vmul.f32 %v1098, 0.35355338
        %v1178 = vmul.f32 %v1103, 0.35355338
        %v1179 = vmul.f32 %v1163, 0.35355338
        %v1180 = vmul.f32 %v1166, 0.35355338
        %v1181 = vmul.f32 %v1171, 0.35355338
        %v1182 = vsel %vm691, %v1176, -1e+30
        %v1183 = vsel %vm691, %v1177, -1e+30
        %v1184 = vsel %vm691, %v1178, -1e+30
        %v1185 = vsel %vm691, %v1179, -1e+30
        %v1186 = vsel %vm691, %v1180, -1e+30
        %v1187 = vsel %vm691, %v1181, -1e+30
        %v1188 = vsel %vm841, %v1182, -inf
        %1189 = vmax.xlane.f32.xlu0 %v1188
        %v1190 = vpop.xlane.xlu0 %1189
        %v1191 = vsel %vm841, %v1183, -inf
        %1192 = vmax.xlane.f32.xlu0 %v1191
        %v1193 = vpop.xlane.xlu0 %1192
        %v1194 = vsel %vm841, %v1184, -inf
        %1195 = vmax.xlane.f32.xlu0 %v1194
        %v1196 = vpop.xlane.xlu0 %1195
        %v1197 = vsel %vm841, %v1185, -inf
        %1198 = vmax.xlane.f32.xlu0 %v1197
        %v1199 = vpop.xlane.xlu0 %1198
        %v1200 = vsel %vm841, %v1186, -inf
        %1201 = vmax.xlane.f32.xlu0 %v1200
        %v1202 = vpop.xlane.xlu0 %1201
        %v1203 = vsel %vm841, %v1187, -inf
        %1204 = vmax.xlane.f32.xlu0 %v1203
        %v1205 = vpop.xlane.xlu0 %1204
        %v1206 = vsub.f32 %v1182, %v1190
        %v1207 = vsub.f32 %v1183, %v1193
        %v1208 = vsub.f32 %v1184, %v1196
        %v1209 = vsub.f32 %v1185, %v1199
        %v1210 = vsub.f32 %v1186, %v1202
        %v1211 = vsub.f32 %v1187, %v1205
        %v1212 = vmul.f32 %v1206, 1.442695
        %v1213 = vpow.pop %v1212
        %v1214 = vmul.f32 %v1207, 1.442695
        %v1215 = vpow.pop %v1214
        %v1216 = vmul.f32 %v1208, 1.442695
        %v1217 = vpow.pop %v1216
        %v1218 = vmul.f32 %v1209, 1.442695
        %v1219 = vpow.pop %v1218
        %v1220 = vmul.f32 %v1210, 1.442695
        %v1221 = vpow.pop %v1220
        %v1222 = vmul.f32 %v1211, 1.442695
        %v1223 = vpow.pop %v1222
        %v1224 = vsel %vm841, %v1213, 0.0
        %1225 = vadd.xlane.f32.xlu0 %v1224
        %v1226 = vpop.xlane.xlu0 %1225
        %v1227 = vsel %vm841, %v1215, 0.0
        %1228 = vadd.xlane.f32.xlu0 %v1227
        %v1229 = vpop.xlane.xlu0 %1228
        %v1230 = vsel %vm841, %v1217, 0.0
        %1231 = vadd.xlane.f32.xlu0 %v1230
        %v1232 = vpop.xlane.xlu0 %1231
        %v1233 = vsel %vm841, %v1219, 0.0
        %1234 = vadd.xlane.f32.xlu0 %v1233
        %v1235 = vpop.xlane.xlu0 %1234
        %v1236 = vsel %vm841, %v1221, 0.0
        %1237 = vadd.xlane.f32.xlu0 %v1236
        %v1238 = vpop.xlane.xlu0 %1237
        %v1239 = vsel %vm841, %v1223, 0.0
        %1240 = vadd.xlane.f32.xlu0 %v1239
        %v1241 = vpop.xlane.xlu0 %1240
        %v1242 = vrcp.pop %v1226
        %v1243 = vrcp.pop %v1229
        %v1244 = vrcp.pop %v1232
        %v1245 = vrcp.pop %v1235
        %v1246 = vrcp.pop %v1238
        %v1247 = vrcp.pop %v1241
        %v1248 = vmul.f32 %v1213, %v1242
        %v1249 = vmul.f32 %v1215, %v1243
        %v1250 = vmul.f32 %v1217, %v1244
        %v1251 = vmul.f32 %v1219, %v1245
        %v1252 = vmul.f32 %v1221, %v1246
        %v1253 = vmul.f32 %v1223, %v1247
        %v1254 = vpack.c.bf16 %v1249, %v1248
        %v1255 = vpack.c.bf16 %v1250, %v1250
        %v1256 = vpack.c.bf16 %v1252, %v1251
        %v1257 = vpack.c.bf16 %v1253, %v1253
        %1258 = vrot.lane.b32.xlu0 %v692, 56
        %v1259 = vpop.permute.xlu0 %1258
        %1260 = vrot.lane.b32.xlu0 %v693, 56
        %v1261 = vpop.permute.xlu0 %1260
        %v1264 = vsel %vm841, %v1254, 0
        %v1267 = vsel %vm841, %v1255, 0
        %v1270 = vsel %vm923, %v1261, 0
        %1272 = vmatprep.subr.bf16.mxu0 0
        %1273 = vmatpush1.bf16.msra.mxu0 %v1259
        %1274 = vmatprep.subr.bf16.mxu0 0
        %1275 = vmatpush1.bf16.msra.mxu0 %v1270
        %1276 = vmatprep.subr.bf16.mxu0 0
        %1277 = vmatpush1.bf16.msra.mxu0 0
        %1278 = vmatprep.subr.bf16.mxu0 0
        %1279 = vmatpush1.bf16.msra.mxu0 0
        %1280 = vmatprep.subr.bf16.mxu0 0
        %1281 = vmatpush1.bf16.msra.mxu0 0
        %1282 = vmatprep.subr.bf16.mxu0 0
        %1283 = vmatpush1.bf16.msra.mxu0 0
        %1284 = vmatprep.subr.bf16.mxu0 0
        %1285 = vmatpush1.bf16.msra.mxu0 0
        %1286 = vmatprep.subr.bf16.mxu0 0
        %1287 = vmatpush1.bf16.msra.mxu0 0
        %1288 = vmatprep.subr.bf16.mxu0 0
        %1289 = vmatpush1.bf16.msra.mxu0 0
        %1290 = vmatprep.subr.bf16.mxu0 0
        %1291 = vmatpush1.bf16.msra.mxu0 0
        %1292 = vmatprep.subr.bf16.mxu0 0
        %1293 = vmatpush1.bf16.msra.mxu0 0
        %1294 = vmatprep.subr.bf16.mxu0 0
        %1295 = vmatpush1.bf16.msra.mxu0 0
        %1296 = vmatprep.subr.bf16.mxu0 0
        %1297 = vmatpush1.bf16.msra.mxu0 0
        %1298 = vmatprep.subr.bf16.mxu0 0
        %1299 = vmatpush1.bf16.msra.mxu0 0
        %1300 = vmatprep.subr.bf16.mxu0 0
        %1301 = vmatpush1.bf16.msra.mxu0 0
        %1302 = vmatprep.subr.bf16.mxu0 0
        %1303 = vmatpush1.bf16.msra.mxu0 0
        %1304 = vmatprep.mubr.bf16.mxu0 0
        %1305 = vmatmul.mubr.bf16.gmra.mrb[0].mxu0 %v1264
        %v1306 = vpop.f32.mrb[0].mxu0
        %v1307 = vadd.f32 0.0, %v1306
        %v1308 = vpop.f32.mrb[0].mxu0
        %v1309 = vpop.f32.mrb[0].mxu0
        %v1310 = vadd.f32 0.0, %v1309
        %v1311 = vpop.f32.mrb[0].mxu0
        %1312 = vmatprep.mubr.bf16.mxu0 0
        %1313 = vmatmul.mubr.bf16.gmra.mrb[0].mxu0 %v1267
        %v1314 = vpop.f32.mrb[0].mxu0
        %v1315 = vadd.f32 0.0, %v1314
        %v1316 = vpop.f32.mrb[0].mxu0
        %v1317 = vpop.f32.mrb[0].mxu0
        %v1318 = vpop.f32.mrb[0].mxu0
        %1319 = vdwg.mxu0
        %1320 = vrot.lane.b32.xlu0 %v694, 56
        %v1321 = vpop.permute.xlu0 %1320
        %1322 = vrot.lane.b32.xlu0 %v695, 56
        %v1323 = vpop.permute.xlu0 %1322
        %v1326 = vsel %vm841, %v1256, 0
        %v1329 = vsel %vm841, %v1257, 0
        %v1332 = vsel %vm923, %v1323, 0
        %1334 = vmatprep.subr.bf16.mxu0 0
        %1335 = vmatpush1.bf16.msra.mxu0 %v1321
        %1336 = vmatprep.subr.bf16.mxu0 0
        %1337 = vmatpush1.bf16.msra.mxu0 %v1332
        %1338 = vmatprep.subr.bf16.mxu0 0
        %1339 = vmatpush1.bf16.msra.mxu0 0
        %1340 = vmatprep.subr.bf16.mxu0 0
        %1341 = vmatpush1.bf16.msra.mxu0 0
        %1342 = vmatprep.subr.bf16.mxu0 0
        %1343 = vmatpush1.bf16.msra.mxu0 0
        %1344 = vmatprep.subr.bf16.mxu0 0
        %1345 = vmatpush1.bf16.msra.mxu0 0
        %1346 = vmatprep.subr.bf16.mxu0 0
        %1347 = vmatpush1.bf16.msra.mxu0 0
        %1348 = vmatprep.subr.bf16.mxu0 0
        %1349 = vmatpush1.bf16.msra.mxu0 0
        %1350 = vmatprep.subr.bf16.mxu0 0
        %1351 = vmatpush1.bf16.msra.mxu0 0
        %1352 = vmatprep.subr.bf16.mxu0 0
        %1353 = vmatpush1.bf16.msra.mxu0 0
        %1354 = vmatprep.subr.bf16.mxu0 0
        %1355 = vmatpush1.bf16.msra.mxu0 0
        %1356 = vmatprep.subr.bf16.mxu0 0
        %1357 = vmatpush1.bf16.msra.mxu0 0
        %1358 = vmatprep.subr.bf16.mxu0 0
        %1359 = vmatpush1.bf16.msra.mxu0 0
        %1360 = vmatprep.subr.bf16.mxu0 0
        %1361 = vmatpush1.bf16.msra.mxu0 0
        %1362 = vmatprep.subr.bf16.mxu0 0
        %1363 = vmatpush1.bf16.msra.mxu0 0
        %1364 = vmatprep.subr.bf16.mxu0 0
        %1365 = vmatpush1.bf16.msra.mxu0 0
        %1366 = vmatprep.mubr.bf16.mxu0 0
        %1367 = vmatmul.mubr.bf16.gmra.mrb[0].mxu0 %v1326
        %v1368 = vpop.f32.mrb[0].mxu0
        %v1369 = vadd.f32 0.0, %v1368
        %v1370 = vpop.f32.mrb[0].mxu0
        %v1371 = vpop.f32.mrb[0].mxu0
        %v1372 = vadd.f32 0.0, %v1371
        %v1373 = vpop.f32.mrb[0].mxu0
        %1374 = vmatprep.mubr.bf16.mxu0 0
        %1375 = vmatmul.mubr.bf16.gmra.mrb[0].mxu0 %v1329
        %v1376 = vpop.f32.mrb[0].mxu0
        %v1377 = vadd.f32 0.0, %v1376
        %v1378 = vpop.f32.mrb[0].mxu0
        %v1379 = vpop.f32.mrb[0].mxu0
        %v1380 = vpop.f32.mrb[0].mxu0
        %1381 = vdwg.mxu0
        %v1382 = vpack.c.bf16 %v1310, %v1307
        %v1383 = vpack.c.bf16 %v1369, %v1315
        %v1384 = vpack.c.bf16 %v1377, %v1372
        %v1386 = vsel %vm702, %v1382, 0
        %v1389 = vsel %vm702, %v1383, 0
        %v1392 = vsel %vm702, %v1384, 0
        %v1395 = vsel %vm923, %v480, 0
        %1397 = vmatprep.subr.bf16.mxu0 0
        %1398 = vmatpush1.bf16.msra.mxu0 %v1395
        %1399 = vmatprep.subr.bf16.mxu0 0
        %1400 = vmatpush1.bf16.msra.mxu0 0
        %1401 = vmatprep.subr.bf16.mxu0 0
        %1402 = vmatpush1.bf16.msra.mxu0 0
        %1403 = vmatprep.subr.bf16.mxu0 0
        %1404 = vmatpush1.bf16.msra.mxu0 0
        %1405 = vmatprep.subr.bf16.mxu0 0
        %1406 = vmatpush1.bf16.msra.mxu0 0
        %1407 = vmatprep.subr.bf16.mxu0 0
        %1408 = vmatpush1.bf16.msra.mxu0 0
        %1409 = vmatprep.subr.bf16.mxu0 0
        %1410 = vmatpush1.bf16.msra.mxu0 0
        %1411 = vmatprep.subr.bf16.mxu0 0
        %1412 = vmatpush1.bf16.msra.mxu0 0
        %1413 = vmatprep.subr.bf16.mxu0 0
        %1414 = vmatpush1.bf16.msra.mxu0 0
        %1415 = vmatprep.subr.bf16.mxu0 0
        %1416 = vmatpush1.bf16.msra.mxu0 0
        %1417 = vmatprep.subr.bf16.mxu0 0
        %1418 = vmatpush1.bf16.msra.mxu0 0
        %1419 = vmatprep.subr.bf16.mxu0 0
        %1420 = vmatpush1.bf16.msra.mxu0 0
        %1421 = vmatprep.subr.bf16.mxu0 0
        %1422 = vmatpush1.bf16.msra.mxu0 0
        %1423 = vmatprep.subr.bf16.mxu0 0
        %1424 = vmatpush1.bf16.msra.mxu0 0
        %1425 = vmatprep.subr.bf16.mxu0 0
        %1426 = vmatpush1.bf16.msra.mxu0 0
        %1427 = vmatprep.subr.bf16.mxu0 0
        %1428 = vmatpush1.bf16.msra.mxu0 0
        %1429 = vmatprep.mubr.bf16.mxu0 0
        %1430 = vmatmul.mubr.bf16.gmra.mrb[0].mxu0 %v1386
        %v1431 = vpop.f32.mrb[0].mxu0
        %v1432 = vadd.f32 0.0, %v1431
        %v1433 = vpop.f32.mrb[0].mxu0
        %v1434 = vpop.f32.mrb[0].mxu0
        %v1435 = vadd.f32 0.0, %v1434
        %v1436 = vpop.f32.mrb[0].mxu0
        %1437 = vmatprep.mubr.bf16.mxu0 0
        %1438 = vmatmul.mubr.bf16.gmra.mrb[0].mxu0 %v1389
        %v1439 = vpop.f32.mrb[0].mxu0
        %v1440 = vadd.f32 0.0, %v1439
        %v1441 = vpop.f32.mrb[0].mxu0
        %v1442 = vpop.f32.mrb[0].mxu0
        %v1443 = vadd.f32 0.0, %v1442
        %v1444 = vpop.f32.mrb[0].mxu0
        %1445 = vmatprep.mubr.bf16.mxu0 0
        %1446 = vmatmul.mubr.bf16.gmra.mrb[0].mxu0 %v1392
        %v1447 = vpop.f32.mrb[0].mxu0
        %v1448 = vadd.f32 0.0, %v1447
        %v1449 = vpop.f32.mrb[0].mxu0
        %v1450 = vpop.f32.mrb[0].mxu0
        %v1451 = vadd.f32 0.0, %v1450
        %v1452 = vpop.f32.mrb[0].mxu0
        %1453 = vdwg.mxu0
        %v1455 = vsel %vm702, %v1037, 0
        %v1458 = vsel %vm702, %v1038, 0
        %v1461 = vsel %vm702, %v1039, 0
        %v1464 = vsel %vm923, %v479, 0
        %1466 = vmatprep.subr.bf16.mxu0 0
        %1467 = vmatpush1.bf16.msra.mxu0 %v1464
        %1468 = vmatprep.subr.bf16.mxu0 0
        %1469 = vmatpush1.bf16.msra.mxu0 0
        %1470 = vmatprep.subr.bf16.mxu0 0
        %1471 = vmatpush1.bf16.msra.mxu0 0
        %1472 = vmatprep.subr.bf16.mxu0 0
        %1473 = vmatpush1.bf16.msra.mxu0 0
        %1474 = vmatprep.subr.bf16.mxu0 0
        %1475 = vmatpush1.bf16.msra.mxu0 0
        %1476 = vmatprep.subr.bf16.mxu0 0
        %1477 = vmatpush1.bf16.msra.mxu0 0
        %1478 = vmatprep.subr.bf16.mxu0 0
        %1479 = vmatpush1.bf16.msra.mxu0 0
        %1480 = vmatprep.subr.bf16.mxu0 0
        %1481 = vmatpush1.bf16.msra.mxu0 0
        %1482 = vmatprep.subr.bf16.mxu0 0
        %1483 = vmatpush1.bf16.msra.mxu0 0
        %1484 = vmatprep.subr.bf16.mxu0 0
        %1485 = vmatpush1.bf16.msra.mxu0 0
        %1486 = vmatprep.subr.bf16.mxu0 0
        %1487 = vmatpush1.bf16.msra.mxu0 0
        %1488 = vmatprep.subr.bf16.mxu0 0
        %1489 = vmatpush1.bf16.msra.mxu0 0
        %1490 = vmatprep.subr.bf16.mxu0 0
        %1491 = vmatpush1.bf16.msra.mxu0 0
        %1492 = vmatprep.subr.bf16.mxu0 0
        %1493 = vmatpush1.bf16.msra.mxu0 0
        %1494 = vmatprep.subr.bf16.mxu0 0
        %1495 = vmatpush1.bf16.msra.mxu0 0
        %1496 = vmatprep.subr.bf16.mxu0 0
        %1497 = vmatpush1.bf16.msra.mxu0 0
        %1498 = vmatprep.mubr.bf16.mxu0 0
        %1499 = vmatmul.mubr.bf16.gmra.mrb[0].mxu0 %v1455
        %v1500 = vpop.f32.mrb[0].mxu0
        %v1501 = vadd.f32 %v1432, %v1500
        %v1502 = vpop.f32.mrb[0].mxu0
        %v1503 = vpop.f32.mrb[0].mxu0
        %v1504 = vadd.f32 %v1435, %v1503
        %v1505 = vpop.f32.mrb[0].mxu0
        %1506 = vmatprep.mubr.bf16.mxu0 0
        %1507 = vmatmul.mubr.bf16.gmra.mrb[0].mxu0 %v1458
        %v1508 = vpop.f32.mrb[0].mxu0
        %v1509 = vadd.f32 %v1440, %v1508
        %v1510 = vpop.f32.mrb[0].mxu0
        %v1511 = vpop.f32.mrb[0].mxu0
        %v1512 = vadd.f32 %v1443, %v1511
        %v1513 = vpop.f32.mrb[0].mxu0
        %1514 = vmatprep.mubr.bf16.mxu0 0
        %1515 = vmatmul.mubr.bf16.gmra.mrb[0].mxu0 %v1461
        %v1516 = vpop.f32.mrb[0].mxu0
        %v1517 = vadd.f32 %v1448, %v1516
        %v1518 = vpop.f32.mrb[0].mxu0
        %v1519 = vpop.f32.mrb[0].mxu0
        %v1520 = vadd.f32 %v1451, %v1519
        %v1521 = vpop.f32.mrb[0].mxu0
        %1522 = vdwg.mxu0
        %1523 = vrot.lane.b32.xlu0 %v692, 112
        %v1524 = vpop.permute.xlu0 %1523
        %1525 = vrot.lane.b32.xlu0 %v693, 112
        %v1526 = vpop.permute.xlu0 %1525
        %1527 = vrot.lane.b32.xlu0 %v692, 80
        %v1528 = vpop.permute.xlu0 %1527
        %1529 = vrot.lane.b32.xlu0 %v693, 80
        %v1530 = vpop.permute.xlu0 %1529
        %v1532 = vsel %vm702, %v1524, 0
        %v1535 = vsel %vm702, %v1526, 0
        %v1538 = vsel %vm702, %v1528, 0
        %v1541 = vsel %vm702, %v1530, 0
        %1543 = vmatprep.subr.bf16.mxu0 0
        %1544 = vmatpush1.bf16.xpose.msra.mxu0 %v1538
        %1545 = vmatprep.subr.bf16.mxu0 0
        %1546 = vmatpush1.bf16.xpose.msra.mxu0 %v1541
        %1547 = vmatprep.subr.bf16.mxu0 0
        %1548 = vmatpush1.bf16.xpose.msra.mxu0 0
        %1549 = vmatprep.subr.bf16.mxu0 0
        %1550 = vmatpush1.bf16.xpose.msra.mxu0 0
        %1551 = vmatprep.subr.bf16.mxu0 0
        %1552 = vmatpush1.bf16.xpose.msra.mxu0 0
        %1553 = vmatprep.subr.bf16.mxu0 0
        %1554 = vmatpush1.bf16.xpose.msra.mxu0 0
        %1555 = vmatprep.subr.bf16.mxu0 0
        %1556 = vmatpush1.bf16.xpose.msra.mxu0 0
        %1557 = vmatprep.subr.bf16.mxu0 0
        %1558 = vmatpush1.bf16.xpose.msra.mxu0 0
        %1559 = vmatprep.subr.bf16.mxu0 0
        %1560 = vmatpush1.bf16.xpose.msra.mxu0 0
        %1561 = vmatprep.subr.bf16.mxu0 0
        %1562 = vmatpush1.bf16.xpose.msra.mxu0 0
        %1563 = vmatprep.subr.bf16.mxu0 0
        %1564 = vmatpush1.bf16.xpose.msra.mxu0 0
        %1565 = vmatprep.subr.bf16.mxu0 0
        %1566 = vmatpush1.bf16.xpose.msra.mxu0 0
        %1567 = vmatprep.subr.bf16.mxu0 0
        %1568 = vmatpush1.bf16.xpose.msra.mxu0 0
        %1569 = vmatprep.subr.bf16.mxu0 0
        %1570 = vmatpush1.bf16.xpose.msra.mxu0 0
        %1571 = vmatprep.subr.bf16.mxu0 0
        %1572 = vmatpush1.bf16.xpose.msra.mxu0 0
        %1573 = vmatprep.subr.bf16.mxu0 0
        %1574 = vmatpush1.bf16.xpose.msra.mxu0 0
        %1575 = vmatprep.mubr.bf16.mxu0 0
        %1576 = vmatmul.mubr.bf16.gmra.mrb[0].mxu0 %v1532
        %v1577 = vpop.f32.mrb[0].mxu0
        %v1578 = vadd.f32 0.0, %v1577
        %v1579 = vpop.f32.mrb[0].mxu0
        %v1580 = vpop.f32.mrb[0].mxu0
        %v1581 = vadd.f32 0.0, %v1580
        %v1582 = vpop.f32.mrb[0].mxu0
        %1583 = vmatprep.mubr.bf16.mxu0 0
        %1584 = vmatmul.mubr.bf16.gmra.mrb[0].mxu0 %v1535
        %v1585 = vpop.f32.mrb[0].mxu0
        %v1586 = vadd.f32 0.0, %v1585
        %v1587 = vpop.f32.mrb[0].mxu0
        %v1588 = vpop.f32.mrb[0].mxu0
        %v1589 = vpop.f32.mrb[0].mxu0
        %1590 = vdwg.mxu0
        %1591 = vrot.lane.b32.xlu0 %v694, 112
        %v1592 = vpop.permute.xlu0 %1591
        %1593 = vrot.lane.b32.xlu0 %v695, 112
        %v1594 = vpop.permute.xlu0 %1593
        %1595 = vrot.lane.b32.xlu0 %v694, 80
        %v1596 = vpop.permute.xlu0 %1595
        %1597 = vrot.lane.b32.xlu0 %v695, 80
        %v1598 = vpop.permute.xlu0 %1597
        %v1600 = vsel %vm702, %v1592, 0
        %v1603 = vsel %vm702, %v1594, 0
        %v1606 = vsel %vm702, %v1596, 0
        %v1609 = vsel %vm702, %v1598, 0
        %1611 = vmatprep.subr.bf16.mxu0 0
        %1612 = vmatpush1.bf16.xpose.msra.mxu0 %v1606
        %1613 = vmatprep.subr.bf16.mxu0 0
        %1614 = vmatpush1.bf16.xpose.msra.mxu0 %v1609
        %1615 = vmatprep.subr.bf16.mxu0 0
        %1616 = vmatpush1.bf16.xpose.msra.mxu0 0
        %1617 = vmatprep.subr.bf16.mxu0 0
        %1618 = vmatpush1.bf16.xpose.msra.mxu0 0
        %1619 = vmatprep.subr.bf16.mxu0 0
        %1620 = vmatpush1.bf16.xpose.msra.mxu0 0
        %1621 = vmatprep.subr.bf16.mxu0 0
        %1622 = vmatpush1.bf16.xpose.msra.mxu0 0
        %1623 = vmatprep.subr.bf16.mxu0 0
        %1624 = vmatpush1.bf16.xpose.msra.mxu0 0
        %1625 = vmatprep.subr.bf16.mxu0 0
        %1626 = vmatpush1.bf16.xpose.msra.mxu0 0
        %1627 = vmatprep.subr.bf16.mxu0 0
        %1628 = vmatpush1.bf16.xpose.msra.mxu0 0
        %1629 = vmatprep.subr.bf16.mxu0 0
        %1630 = vmatpush1.bf16.xpose.msra.mxu0 0
        %1631 = vmatprep.subr.bf16.mxu0 0
        %1632 = vmatpush1.bf16.xpose.msra.mxu0 0
        %1633 = vmatprep.subr.bf16.mxu0 0
        %1634 = vmatpush1.bf16.xpose.msra.mxu0 0
        %1635 = vmatprep.subr.bf16.mxu0 0
        %1636 = vmatpush1.bf16.xpose.msra.mxu0 0
        %1637 = vmatprep.subr.bf16.mxu0 0
        %1638 = vmatpush1.bf16.xpose.msra.mxu0 0
        %1639 = vmatprep.subr.bf16.mxu0 0
        %1640 = vmatpush1.bf16.xpose.msra.mxu0 0
        %1641 = vmatprep.subr.bf16.mxu0 0
        %1642 = vmatpush1.bf16.xpose.msra.mxu0 0
        %1643 = vmatprep.mubr.bf16.mxu0 0
        %1644 = vmatmul.mubr.bf16.gmra.mrb[0].mxu0 %v1600
        %v1645 = vpop.f32.mrb[0].mxu0
        %v1646 = vadd.f32 0.0, %v1645
        %v1647 = vpop.f32.mrb[0].mxu0
        %v1648 = vpop.f32.mrb[0].mxu0
        %v1649 = vadd.f32 0.0, %v1648
        %v1650 = vpop.f32.mrb[0].mxu0
        %1651 = vmatprep.mubr.bf16.mxu0 0
        %1652 = vmatmul.mubr.bf16.gmra.mrb[0].mxu0 %v1603
        %v1653 = vpop.f32.mrb[0].mxu0
        %v1654 = vadd.f32 0.0, %v1653
        %v1655 = vpop.f32.mrb[0].mxu0
        %v1656 = vpop.f32.mrb[0].mxu0
        %v1657 = vpop.f32.mrb[0].mxu0
        %1658 = vdwg.mxu0
        %v1659 = vmul.f32 %v1578, 0.35355338
        %v1660 = vmul.f32 %v1581, 0.35355338
        %v1661 = vmul.f32 %v1586, 0.35355338
        %v1662 = vmul.f32 %v1646, 0.35355338
        %v1663 = vmul.f32 %v1649, 0.35355338
        %v1664 = vmul.f32 %v1654, 0.35355338
        %v1665 = vsel %vm691, %v1659, -1e+30
        %v1666 = vsel %vm691, %v1660, -1e+30
        %v1667 = vsel %vm691, %v1661, -1e+30
        %v1668 = vsel %vm691, %v1662, -1e+30
        %v1669 = vsel %vm691, %v1663, -1e+30
        %v1670 = vsel %vm691, %v1664, -1e+30
        %v1671 = vsel %vm841, %v1665, -inf
        %1672 = vmax.xlane.f32.xlu0 %v1671
        %v1673 = vpop.xlane.xlu0 %1672
        %v1674 = vsel %vm841, %v1666, -inf
        %1675 = vmax.xlane.f32.xlu0 %v1674
        %v1676 = vpop.xlane.xlu0 %1675
        %v1677 = vsel %vm841, %v1667, -inf
        %1678 = vmax.xlane.f32.xlu0 %v1677
        %v1679 = vpop.xlane.xlu0 %1678
        %v1680 = vsel %vm841, %v1668, -inf
        %1681 = vmax.xlane.f32.xlu0 %v1680
        %v1682 = vpop.xlane.xlu0 %1681
        %v1683 = vsel %vm841, %v1669, -inf
        %1684 = vmax.xlane.f32.xlu0 %v1683
        %v1685 = vpop.xlane.xlu0 %1684
        %v1686 = vsel %vm841, %v1670, -inf
        %1687 = vmax.xlane.f32.xlu0 %v1686
        %v1688 = vpop.xlane.xlu0 %1687
        %v1689 = vsub.f32 %v1665, %v1673
        %v1690 = vsub.f32 %v1666, %v1676
        %v1691 = vsub.f32 %v1667, %v1679
        %v1692 = vsub.f32 %v1668, %v1682
        %v1693 = vsub.f32 %v1669, %v1685
        %v1694 = vsub.f32 %v1670, %v1688
        %v1695 = vmul.f32 %v1689, 1.442695
        %v1696 = vpow.pop %v1695
        %v1697 = vmul.f32 %v1690, 1.442695
        %v1698 = vpow.pop %v1697
        %v1699 = vmul.f32 %v1691, 1.442695
        %v1700 = vpow.pop %v1699
        %v1701 = vmul.f32 %v1692, 1.442695
        %v1702 = vpow.pop %v1701
        %v1703 = vmul.f32 %v1693, 1.442695
        %v1704 = vpow.pop %v1703
        %v1705 = vmul.f32 %v1694, 1.442695
        %v1706 = vpow.pop %v1705
        %v1707 = vsel %vm841, %v1696, 0.0
        %1708 = vadd.xlane.f32.xlu0 %v1707
        %v1709 = vpop.xlane.xlu0 %1708
        %v1710 = vsel %vm841, %v1698, 0.0
        %1711 = vadd.xlane.f32.xlu0 %v1710
        %v1712 = vpop.xlane.xlu0 %1711
        %v1713 = vsel %vm841, %v1700, 0.0
        %1714 = vadd.xlane.f32.xlu0 %v1713
        %v1715 = vpop.xlane.xlu0 %1714
        %v1716 = vsel %vm841, %v1702, 0.0
        %1717 = vadd.xlane.f32.xlu0 %v1716
        %v1718 = vpop.xlane.xlu0 %1717
        %v1719 = vsel %vm841, %v1704, 0.0
        %1720 = vadd.xlane.f32.xlu0 %v1719
        %v1721 = vpop.xlane.xlu0 %1720
        %v1722 = vsel %vm841, %v1706, 0.0
        %1723 = vadd.xlane.f32.xlu0 %v1722
        %v1724 = vpop.xlane.xlu0 %1723
        %v1725 = vrcp.pop %v1709
        %v1726 = vrcp.pop %v1712
        %v1727 = vrcp.pop %v1715
        %v1728 = vrcp.pop %v1718
        %v1729 = vrcp.pop %v1721
        %v1730 = vrcp.pop %v1724
        %v1731 = vmul.f32 %v1696, %v1725
        %v1732 = vmul.f32 %v1698, %v1726
        %v1733 = vmul.f32 %v1700, %v1727
        %v1734 = vmul.f32 %v1702, %v1728
        %v1735 = vmul.f32 %v1704, %v1729
        %v1736 = vmul.f32 %v1706, %v1730
        %v1737 = vpack.c.bf16 %v1732, %v1731
        %v1738 = vpack.c.bf16 %v1733, %v1733
        %v1739 = vpack.c.bf16 %v1735, %v1734
        %v1740 = vpack.c.bf16 %v1736, %v1736
        %1741 = vrot.lane.b32.xlu0 %v692, 48
        %v1742 = vpop.permute.xlu0 %1741
        %1743 = vrot.lane.b32.xlu0 %v693, 48
        %v1744 = vpop.permute.xlu0 %1743
        %v1747 = vsel %vm841, %v1737, 0
        %v1750 = vsel %vm841, %v1738, 0
        %v1753 = vsel %vm923, %v1744, 0
        %1755 = vmatprep.subr.bf16.mxu0 0
        %1756 = vmatpush1.bf16.msra.mxu0 %v1742
        %1757 = vmatprep.subr.bf16.mxu0 0
        %1758 = vmatpush1.bf16.msra.mxu0 %v1753
        %1759 = vmatprep.subr.bf16.mxu0 0
        %1760 = vmatpush1.bf16.msra.mxu0 0
        %1761 = vmatprep.subr.bf16.mxu0 0
        %1762 = vmatpush1.bf16.msra.mxu0 0
        %1763 = vmatprep.subr.bf16.mxu0 0
        %1764 = vmatpush1.bf16.msra.mxu0 0
        %1765 = vmatprep.subr.bf16.mxu0 0
        %1766 = vmatpush1.bf16.msra.mxu0 0
        %1767 = vmatprep.subr.bf16.mxu0 0
        %1768 = vmatpush1.bf16.msra.mxu0 0
        %1769 = vmatprep.subr.bf16.mxu0 0
        %1770 = vmatpush1.bf16.msra.mxu0 0
        %1771 = vmatprep.subr.bf16.mxu0 0
        %1772 = vmatpush1.bf16.msra.mxu0 0
        %1773 = vmatprep.subr.bf16.mxu0 0
        %1774 = vmatpush1.bf16.msra.mxu0 0
        %1775 = vmatprep.subr.bf16.mxu0 0
        %1776 = vmatpush1.bf16.msra.mxu0 0
        %1777 = vmatprep.subr.bf16.mxu0 0
        %1778 = vmatpush1.bf16.msra.mxu0 0
        %1779 = vmatprep.subr.bf16.mxu0 0
        %1780 = vmatpush1.bf16.msra.mxu0 0
        %1781 = vmatprep.subr.bf16.mxu0 0
        %1782 = vmatpush1.bf16.msra.mxu0 0
        %1783 = vmatprep.subr.bf16.mxu0 0
        %1784 = vmatpush1.bf16.msra.mxu0 0
        %1785 = vmatprep.subr.bf16.mxu0 0
        %1786 = vmatpush1.bf16.msra.mxu0 0
        %1787 = vmatprep.mubr.bf16.mxu0 0
        %1788 = vmatmul.mubr.bf16.gmra.mrb[0].mxu0 %v1747
        %v1789 = vpop.f32.mrb[0].mxu0
        %v1790 = vadd.f32 0.0, %v1789
        %v1791 = vpop.f32.mrb[0].mxu0
        %v1792 = vpop.f32.mrb[0].mxu0
        %v1793 = vadd.f32 0.0, %v1792
        %v1794 = vpop.f32.mrb[0].mxu0
        %1795 = vmatprep.mubr.bf16.mxu0 0
        %1796 = vmatmul.mubr.bf16.gmra.mrb[0].mxu0 %v1750
        %v1797 = vpop.f32.mrb[0].mxu0
        %v1798 = vadd.f32 0.0, %v1797
        %v1799 = vpop.f32.mrb[0].mxu0
        %v1800 = vpop.f32.mrb[0].mxu0
        %v1801 = vpop.f32.mrb[0].mxu0
        %1802 = vdwg.mxu0
        %1803 = vrot.lane.b32.xlu0 %v694, 48
        %v1804 = vpop.permute.xlu0 %1803
        %1805 = vrot.lane.b32.xlu0 %v695, 48
        %v1806 = vpop.permute.xlu0 %1805
        %v1809 = vsel %vm841, %v1739, 0
        %v1812 = vsel %vm841, %v1740, 0
        %v1815 = vsel %vm923, %v1806, 0
        %1817 = vmatprep.subr.bf16.mxu0 0
        %1818 = vmatpush1.bf16.msra.mxu0 %v1804
        %1819 = vmatprep.subr.bf16.mxu0 0
        %1820 = vmatpush1.bf16.msra.mxu0 %v1815
        %1821 = vmatprep.subr.bf16.mxu0 0
        %1822 = vmatpush1.bf16.msra.mxu0 0
        %1823 = vmatprep.subr.bf16.mxu0 0
        %1824 = vmatpush1.bf16.msra.mxu0 0
        %1825 = vmatprep.subr.bf16.mxu0 0
        %1826 = vmatpush1.bf16.msra.mxu0 0
        %1827 = vmatprep.subr.bf16.mxu0 0
        %1828 = vmatpush1.bf16.msra.mxu0 0
        %1829 = vmatprep.subr.bf16.mxu0 0
        %1830 = vmatpush1.bf16.msra.mxu0 0
        %1831 = vmatprep.subr.bf16.mxu0 0
        %1832 = vmatpush1.bf16.msra.mxu0 0
        %1833 = vmatprep.subr.bf16.mxu0 0
        %1834 = vmatpush1.bf16.msra.mxu0 0
        %1835 = vmatprep.subr.bf16.mxu0 0
        %1836 = vmatpush1.bf16.msra.mxu0 0
        %1837 = vmatprep.subr.bf16.mxu0 0
        %1838 = vmatpush1.bf16.msra.mxu0 0
        %1839 = vmatprep.subr.bf16.mxu0 0
        %1840 = vmatpush1.bf16.msra.mxu0 0
        %1841 = vmatprep.subr.bf16.mxu0 0
        %1842 = vmatpush1.bf16.msra.mxu0 0
        %1843 = vmatprep.subr.bf16.mxu0 0
        %1844 = vmatpush1.bf16.msra.mxu0 0
        %1845 = vmatprep.subr.bf16.mxu0 0
        %1846 = vmatpush1.bf16.msra.mxu0 0
        %1847 = vmatprep.subr.bf16.mxu0 0
        %1848 = vmatpush1.bf16.msra.mxu0 0
        %1849 = vmatprep.mubr.bf16.mxu0 0
        %1850 = vmatmul.mubr.bf16.gmra.mrb[0].mxu0 %v1809
        %v1851 = vpop.f32.mrb[0].mxu0
        %v1852 = vadd.f32 0.0, %v1851
        %v1853 = vpop.f32.mrb[0].mxu0
        %v1854 = vpop.f32.mrb[0].mxu0
        %v1855 = vadd.f32 0.0, %v1854
        %v1856 = vpop.f32.mrb[0].mxu0
        %1857 = vmatprep.mubr.bf16.mxu0 0
        %1858 = vmatmul.mubr.bf16.gmra.mrb[0].mxu0 %v1812
        %v1859 = vpop.f32.mrb[0].mxu0
        %v1860 = vadd.f32 0.0, %v1859
        %v1861 = vpop.f32.mrb[0].mxu0
        %v1862 = vpop.f32.mrb[0].mxu0
        %v1863 = vpop.f32.mrb[0].mxu0
        %1864 = vdwg.mxu0
        %v1865 = vpack.c.bf16 %v1793, %v1790
        %v1866 = vpack.c.bf16 %v1852, %v1798
        %v1867 = vpack.c.bf16 %v1860, %v1855
        %v1869 = vsel %vm702, %v1865, 0
        %v1872 = vsel %vm702, %v1866, 0
        %v1875 = vsel %vm702, %v1867, 0
        %v1878 = vsel %vm923, %v481, 0
        %1880 = vmatprep.subr.bf16.mxu0 0
        %1881 = vmatpush1.bf16.msra.mxu0 %v1878
        %1882 = vmatprep.subr.bf16.mxu0 0
        %1883 = vmatpush1.bf16.msra.mxu0 0
        %1884 = vmatprep.subr.bf16.mxu0 0
        %1885 = vmatpush1.bf16.msra.mxu0 0
        %1886 = vmatprep.subr.bf16.mxu0 0
        %1887 = vmatpush1.bf16.msra.mxu0 0
        %1888 = vmatprep.subr.bf16.mxu0 0
        %1889 = vmatpush1.bf16.msra.mxu0 0
        %1890 = vmatprep.subr.bf16.mxu0 0
        %1891 = vmatpush1.bf16.msra.mxu0 0
        %1892 = vmatprep.subr.bf16.mxu0 0
        %1893 = vmatpush1.bf16.msra.mxu0 0
        %1894 = vmatprep.subr.bf16.mxu0 0
        %1895 = vmatpush1.bf16.msra.mxu0 0
        %1896 = vmatprep.subr.bf16.mxu0 0
        %1897 = vmatpush1.bf16.msra.mxu0 0
        %1898 = vmatprep.subr.bf16.mxu0 0
        %1899 = vmatpush1.bf16.msra.mxu0 0
        %1900 = vmatprep.subr.bf16.mxu0 0
        %1901 = vmatpush1.bf16.msra.mxu0 0
        %1902 = vmatprep.subr.bf16.mxu0 0
        %1903 = vmatpush1.bf16.msra.mxu0 0
        %1904 = vmatprep.subr.bf16.mxu0 0
        %1905 = vmatpush1.bf16.msra.mxu0 0
        %1906 = vmatprep.subr.bf16.mxu0 0
        %1907 = vmatpush1.bf16.msra.mxu0 0
        %1908 = vmatprep.subr.bf16.mxu0 0
        %1909 = vmatpush1.bf16.msra.mxu0 0
        %1910 = vmatprep.subr.bf16.mxu0 0
        %1911 = vmatpush1.bf16.msra.mxu0 0
        %1912 = vmatprep.mubr.bf16.mxu0 0
        %1913 = vmatmul.mubr.bf16.gmra.mrb[0].mxu0 %v1869
        %v1914 = vpop.f32.mrb[0].mxu0
        %v1915 = vadd.f32 0.0, %v1914
        %v1916 = vpop.f32.mrb[0].mxu0
        %v1917 = vpop.f32.mrb[0].mxu0
        %v1918 = vadd.f32 0.0, %v1917
        %v1919 = vpop.f32.mrb[0].mxu0
        %1920 = vmatprep.mubr.bf16.mxu0 0
        %1921 = vmatmul.mubr.bf16.gmra.mrb[0].mxu0 %v1872
        %v1922 = vpop.f32.mrb[0].mxu0
        %v1923 = vadd.f32 0.0, %v1922
        %v1924 = vpop.f32.mrb[0].mxu0
        %v1925 = vpop.f32.mrb[0].mxu0
        %v1926 = vadd.f32 0.0, %v1925
        %v1927 = vpop.f32.mrb[0].mxu0
        %1928 = vmatprep.mubr.bf16.mxu0 0
        %1929 = vmatmul.mubr.bf16.gmra.mrb[0].mxu0 %v1875
        %v1930 = vpop.f32.mrb[0].mxu0
        %v1931 = vadd.f32 0.0, %v1930
        %v1932 = vpop.f32.mrb[0].mxu0
        %v1933 = vpop.f32.mrb[0].mxu0
        %v1934 = vadd.f32 0.0, %v1933
        %v1935 = vpop.f32.mrb[0].mxu0
        %1936 = vdwg.mxu0
        %v1937 = vadd.f32 %v1501, %v1915
        %v1938 = vadd.f32 %v1504, %v1918
        %v1939 = vadd.f32 %v1509, %v1923
        %v1940 = vadd.f32 %v1512, %v1926
        %v1941 = vadd.f32 %v1517, %v1931
        %v1942 = vadd.f32 %v1520, %v1934
        %1943 = vrot.lane.b32.xlu0 %v692, 104
        %v1944 = vpop.permute.xlu0 %1943
        %1945 = vrot.lane.b32.xlu0 %v693, 104
        %v1946 = vpop.permute.xlu0 %1945
        %1947 = vrot.lane.b32.xlu0 %v692, 72
        %v1948 = vpop.permute.xlu0 %1947
        %1949 = vrot.lane.b32.xlu0 %v693, 72
        %v1950 = vpop.permute.xlu0 %1949
        %v1952 = vsel %vm702, %v1944, 0
        %v1955 = vsel %vm702, %v1946, 0
        %v1958 = vsel %vm702, %v1948, 0
        %v1961 = vsel %vm702, %v1950, 0
        %1963 = vmatprep.subr.bf16.mxu0 0
        %1964 = vmatpush1.bf16.xpose.msra.mxu0 %v1958
        %1965 = vmatprep.subr.bf16.mxu0 0
        %1966 = vmatpush1.bf16.xpose.msra.mxu0 %v1961
        %1967 = vmatprep.subr.bf16.mxu0 0
        %1968 = vmatpush1.bf16.xpose.msra.mxu0 0
        %1969 = vmatprep.subr.bf16.mxu0 0
        %1970 = vmatpush1.bf16.xpose.msra.mxu0 0
        %1971 = vmatprep.subr.bf16.mxu0 0
        %1972 = vmatpush1.bf16.xpose.msra.mxu0 0
        %1973 = vmatprep.subr.bf16.mxu0 0
        %1974 = vmatpush1.bf16.xpose.msra.mxu0 0
        %1975 = vmatprep.subr.bf16.mxu0 0
        %1976 = vmatpush1.bf16.xpose.msra.mxu0 0
        %1977 = vmatprep.subr.bf16.mxu0 0
        %1978 = vmatpush1.bf16.xpose.msra.mxu0 0
        %1979 = vmatprep.subr.bf16.mxu0 0
        %1980 = vmatpush1.bf16.xpose.msra.mxu0 0
        %1981 = vmatprep.subr.bf16.mxu0 0
        %1982 = vmatpush1.bf16.xpose.msra.mxu0 0
        %1983 = vmatprep.subr.bf16.mxu0 0
        %1984 = vmatpush1.bf16.xpose.msra.mxu0 0
        %1985 = vmatprep.subr.bf16.mxu0 0
        %1986 = vmatpush1.bf16.xpose.msra.mxu0 0
        %1987 = vmatprep.subr.bf16.mxu0 0
        %1988 = vmatpush1.bf16.xpose.msra.mxu0 0
        %1989 = vmatprep.subr.bf16.mxu0 0
        %1990 = vmatpush1.bf16.xpose.msra.mxu0 0
        %1991 = vmatprep.subr.bf16.mxu0 0
        %1992 = vmatpush1.bf16.xpose.msra.mxu0 0
        %1993 = vmatprep.subr.bf16.mxu0 0
        %1994 = vmatpush1.bf16.xpose.msra.mxu0 0
        %1995 = vmatprep.mubr.bf16.mxu0 0
        %1996 = vmatmul.mubr.bf16.gmra.mrb[0].mxu0 %v1952
        %v1997 = vpop.f32.mrb[0].mxu0
        %v1998 = vadd.f32 0.0, %v1997
        %v1999 = vpop.f32.mrb[0].mxu0
        %v2000 = vpop.f32.mrb[0].mxu0
        %v2001 = vadd.f32 0.0, %v2000
        %v2002 = vpop.f32.mrb[0].mxu0
        %2003 = vmatprep.mubr.bf16.mxu0 0
        %2004 = vmatmul.mubr.bf16.gmra.mrb[0].mxu0 %v1955
        %v2005 = vpop.f32.mrb[0].mxu0
        %v2006 = vadd.f32 0.0, %v2005
        %v2007 = vpop.f32.mrb[0].mxu0
        %v2008 = vpop.f32.mrb[0].mxu0
        %v2009 = vpop.f32.mrb[0].mxu0
        %2010 = vdwg.mxu0
        %2011 = vrot.lane.b32.xlu0 %v694, 104
        %v2012 = vpop.permute.xlu0 %2011
        %2013 = vrot.lane.b32.xlu0 %v695, 104
        %v2014 = vpop.permute.xlu0 %2013
        %2015 = vrot.lane.b32.xlu0 %v694, 72
        %v2016 = vpop.permute.xlu0 %2015
        %2017 = vrot.lane.b32.xlu0 %v695, 72
        %v2018 = vpop.permute.xlu0 %2017
        %v2020 = vsel %vm702, %v2012, 0
        %v2023 = vsel %vm702, %v2014, 0
        %v2026 = vsel %vm702, %v2016, 0
        %v2029 = vsel %vm702, %v2018, 0
        %2031 = vmatprep.subr.bf16.mxu0 0
        %2032 = vmatpush1.bf16.xpose.msra.mxu0 %v2026
        %2033 = vmatprep.subr.bf16.mxu0 0
        %2034 = vmatpush1.bf16.xpose.msra.mxu0 %v2029
        %2035 = vmatprep.subr.bf16.mxu0 0
        %2036 = vmatpush1.bf16.xpose.msra.mxu0 0
        %2037 = vmatprep.subr.bf16.mxu0 0
        %2038 = vmatpush1.bf16.xpose.msra.mxu0 0
        %2039 = vmatprep.subr.bf16.mxu0 0
        %2040 = vmatpush1.bf16.xpose.msra.mxu0 0
        %2041 = vmatprep.subr.bf16.mxu0 0
        %2042 = vmatpush1.bf16.xpose.msra.mxu0 0
        %2043 = vmatprep.subr.bf16.mxu0 0
        %2044 = vmatpush1.bf16.xpose.msra.mxu0 0
        %2045 = vmatprep.subr.bf16.mxu0 0
        %2046 = vmatpush1.bf16.xpose.msra.mxu0 0
        %2047 = vmatprep.subr.bf16.mxu0 0
        %2048 = vmatpush1.bf16.xpose.msra.mxu0 0
        %2049 = vmatprep.subr.bf16.mxu0 0
        %2050 = vmatpush1.bf16.xpose.msra.mxu0 0
        %2051 = vmatprep.subr.bf16.mxu0 0
        %2052 = vmatpush1.bf16.xpose.msra.mxu0 0
        %2053 = vmatprep.subr.bf16.mxu0 0
        %2054 = vmatpush1.bf16.xpose.msra.mxu0 0
        %2055 = vmatprep.subr.bf16.mxu0 0
        %2056 = vmatpush1.bf16.xpose.msra.mxu0 0
        %2057 = vmatprep.subr.bf16.mxu0 0
        %2058 = vmatpush1.bf16.xpose.msra.mxu0 0
        %2059 = vmatprep.subr.bf16.mxu0 0
        %2060 = vmatpush1.bf16.xpose.msra.mxu0 0
        %2061 = vmatprep.subr.bf16.mxu0 0
        %2062 = vmatpush1.bf16.xpose.msra.mxu0 0
        %2063 = vmatprep.mubr.bf16.mxu0 0
        %2064 = vmatmul.mubr.bf16.gmra.mrb[0].mxu0 %v2020
        %v2065 = vpop.f32.mrb[0].mxu0
        %v2066 = vadd.f32 0.0, %v2065
        %v2067 = vpop.f32.mrb[0].mxu0
        %v2068 = vpop.f32.mrb[0].mxu0
        %v2069 = vadd.f32 0.0, %v2068
        %v2070 = vpop.f32.mrb[0].mxu0
        %2071 = vmatprep.mubr.bf16.mxu0 0
        %2072 = vmatmul.mubr.bf16.gmra.mrb[0].mxu0 %v2023
        %v2073 = vpop.f32.mrb[0].mxu0
        %v2074 = vadd.f32 0.0, %v2073
        %v2075 = vpop.f32.mrb[0].mxu0
        %v2076 = vpop.f32.mrb[0].mxu0
        %v2077 = vpop.f32.mrb[0].mxu0
        %2078 = vdwg.mxu0
        %v2079 = vmul.f32 %v1998, 0.35355338
        %v2080 = vmul.f32 %v2001, 0.35355338
        %v2081 = vmul.f32 %v2006, 0.35355338
        %v2082 = vmul.f32 %v2066, 0.35355338
        %v2083 = vmul.f32 %v2069, 0.35355338
        %v2084 = vmul.f32 %v2074, 0.35355338
        %v2085 = vsel %vm691, %v2079, -1e+30
        %v2086 = vsel %vm691, %v2080, -1e+30
        %v2087 = vsel %vm691, %v2081, -1e+30
        %v2088 = vsel %vm691, %v2082, -1e+30
        %v2089 = vsel %vm691, %v2083, -1e+30
        %v2090 = vsel %vm691, %v2084, -1e+30
        %v2091 = vsel %vm841, %v2085, -inf
        %2092 = vmax.xlane.f32.xlu0 %v2091
        %v2093 = vpop.xlane.xlu0 %2092
        %v2094 = vsel %vm841, %v2086, -inf
        %2095 = vmax.xlane.f32.xlu0 %v2094
        %v2096 = vpop.xlane.xlu0 %2095
        %v2097 = vsel %vm841, %v2087, -inf
        %2098 = vmax.xlane.f32.xlu0 %v2097
        %v2099 = vpop.xlane.xlu0 %2098
        %v2100 = vsel %vm841, %v2088, -inf
        %2101 = vmax.xlane.f32.xlu0 %v2100
        %v2102 = vpop.xlane.xlu0 %2101
        %v2103 = vsel %vm841, %v2089, -inf
        %2104 = vmax.xlane.f32.xlu0 %v2103
        %v2105 = vpop.xlane.xlu0 %2104
        %v2106 = vsel %vm841, %v2090, -inf
        %2107 = vmax.xlane.f32.xlu0 %v2106
        %v2108 = vpop.xlane.xlu0 %2107
        %v2109 = vsub.f32 %v2085, %v2093
        %v2110 = vsub.f32 %v2086, %v2096
        %v2111 = vsub.f32 %v2087, %v2099
        %v2112 = vsub.f32 %v2088, %v2102
        %v2113 = vsub.f32 %v2089, %v2105
        %v2114 = vsub.f32 %v2090, %v2108
        %v2115 = vmul.f32 %v2109, 1.442695
        %v2116 = vpow.pop %v2115
        %v2117 = vmul.f32 %v2110, 1.442695
        %v2118 = vpow.pop %v2117
        %v2119 = vmul.f32 %v2111, 1.442695
        %v2120 = vpow.pop %v2119
        %v2121 = vmul.f32 %v2112, 1.442695
        %v2122 = vpow.pop %v2121
        %v2123 = vmul.f32 %v2113, 1.442695
        %v2124 = vpow.pop %v2123
        %v2125 = vmul.f32 %v2114, 1.442695
        %v2126 = vpow.pop %v2125
        %v2127 = vsel %vm841, %v2116, 0.0
        %2128 = vadd.xlane.f32.xlu0 %v2127
        %v2129 = vpop.xlane.xlu0 %2128
        %v2130 = vsel %vm841, %v2118, 0.0
        %2131 = vadd.xlane.f32.xlu0 %v2130
        %v2132 = vpop.xlane.xlu0 %2131
        %v2133 = vsel %vm841, %v2120, 0.0
        %2134 = vadd.xlane.f32.xlu0 %v2133
        %v2135 = vpop.xlane.xlu0 %2134
        %v2136 = vsel %vm841, %v2122, 0.0
        %2137 = vadd.xlane.f32.xlu0 %v2136
        %v2138 = vpop.xlane.xlu0 %2137
        %v2139 = vsel %vm841, %v2124, 0.0
        %2140 = vadd.xlane.f32.xlu0 %v2139
        %v2141 = vpop.xlane.xlu0 %2140
        %v2142 = vsel %vm841, %v2126, 0.0
        %2143 = vadd.xlane.f32.xlu0 %v2142
        %v2144 = vpop.xlane.xlu0 %2143
        %v2145 = vrcp.pop %v2129
        %v2146 = vrcp.pop %v2132
        %v2147 = vrcp.pop %v2135
        %v2148 = vrcp.pop %v2138
        %v2149 = vrcp.pop %v2141
        %v2150 = vrcp.pop %v2144
        %v2151 = vmul.f32 %v2116, %v2145
        %v2152 = vmul.f32 %v2118, %v2146
        %v2153 = vmul.f32 %v2120, %v2147
        %v2154 = vmul.f32 %v2122, %v2148
        %v2155 = vmul.f32 %v2124, %v2149
        %v2156 = vmul.f32 %v2126, %v2150
        %v2157 = vpack.c.bf16 %v2152, %v2151
        %v2158 = vpack.c.bf16 %v2153, %v2153
        %v2159 = vpack.c.bf16 %v2155, %v2154
        %v2160 = vpack.c.bf16 %v2156, %v2156
        %2161 = vrot.lane.b32.xlu0 %v692, 40
        %v2162 = vpop.permute.xlu0 %2161
        %2163 = vrot.lane.b32.xlu0 %v693, 40
        %v2164 = vpop.permute.xlu0 %2163
        %v2167 = vsel %vm841, %v2157, 0
        %v2170 = vsel %vm841, %v2158, 0
        %v2173 = vsel %vm923, %v2164, 0
        %2175 = vmatprep.subr.bf16.mxu0 0
        %2176 = vmatpush1.bf16.msra.mxu0 %v2162
        %2177 = vmatprep.subr.bf16.mxu0 0
        %2178 = vmatpush1.bf16.msra.mxu0 %v2173
        %2179 = vmatprep.subr.bf16.mxu0 0
        %2180 = vmatpush1.bf16.msra.mxu0 0
        %2181 = vmatprep.subr.bf16.mxu0 0
        %2182 = vmatpush1.bf16.msra.mxu0 0
        %2183 = vmatprep.subr.bf16.mxu0 0
        %2184 = vmatpush1.bf16.msra.mxu0 0
        %2185 = vmatprep.subr.bf16.mxu0 0
        %2186 = vmatpush1.bf16.msra.mxu0 0
        %2187 = vmatprep.subr.bf16.mxu0 0
        %2188 = vmatpush1.bf16.msra.mxu0 0
        %2189 = vmatprep.subr.bf16.mxu0 0
        %2190 = vmatpush1.bf16.msra.mxu0 0
        %2191 = vmatprep.subr.bf16.mxu0 0
        %2192 = vmatpush1.bf16.msra.mxu0 0
        %2193 = vmatprep.subr.bf16.mxu0 0
        %2194 = vmatpush1.bf16.msra.mxu0 0
        %2195 = vmatprep.subr.bf16.mxu0 0
        %2196 = vmatpush1.bf16.msra.mxu0 0
        %2197 = vmatprep.subr.bf16.mxu0 0
        %2198 = vmatpush1.bf16.msra.mxu0 0
        %2199 = vmatprep.subr.bf16.mxu0 0
        %2200 = vmatpush1.bf16.msra.mxu0 0
        %2201 = vmatprep.subr.bf16.mxu0 0
        %2202 = vmatpush1.bf16.msra.mxu0 0
        %2203 = vmatprep.subr.bf16.mxu0 0
        %2204 = vmatpush1.bf16.msra.mxu0 0
        %2205 = vmatprep.subr.bf16.mxu0 0
        %2206 = vmatpush1.bf16.msra.mxu0 0
        %2207 = vmatprep.mubr.bf16.mxu0 0
        %2208 = vmatmul.mubr.bf16.gmra.mrb[0].mxu0 %v2167
        %v2209 = vpop.f32.mrb[0].mxu0
        %v2210 = vadd.f32 0.0, %v2209
        %v2211 = vpop.f32.mrb[0].mxu0
        %v2212 = vpop.f32.mrb[0].mxu0
        %v2213 = vadd.f32 0.0, %v2212
        %v2214 = vpop.f32.mrb[0].mxu0
        %2215 = vmatprep.mubr.bf16.mxu0 0
        %2216 = vmatmul.mubr.bf16.gmra.mrb[0].mxu0 %v2170
        %v2217 = vpop.f32.mrb[0].mxu0
        %v2218 = vadd.f32 0.0, %v2217
        %v2219 = vpop.f32.mrb[0].mxu0
        %v2220 = vpop.f32.mrb[0].mxu0
        %v2221 = vpop.f32.mrb[0].mxu0
        %2222 = vdwg.mxu0
        %2223 = vrot.lane.b32.xlu0 %v694, 40
        %v2224 = vpop.permute.xlu0 %2223
        %2225 = vrot.lane.b32.xlu0 %v695, 40
        %v2226 = vpop.permute.xlu0 %2225
        %v2229 = vsel %vm841, %v2159, 0
        %v2232 = vsel %vm841, %v2160, 0
        %v2235 = vsel %vm923, %v2226, 0
        %2237 = vmatprep.subr.bf16.mxu0 0
        %2238 = vmatpush1.bf16.msra.mxu0 %v2224
        %2239 = vmatprep.subr.bf16.mxu0 0
        %2240 = vmatpush1.bf16.msra.mxu0 %v2235
        %2241 = vmatprep.subr.bf16.mxu0 0
        %2242 = vmatpush1.bf16.msra.mxu0 0
        %2243 = vmatprep.subr.bf16.mxu0 0
        %2244 = vmatpush1.bf16.msra.mxu0 0
        %2245 = vmatprep.subr.bf16.mxu0 0
        %2246 = vmatpush1.bf16.msra.mxu0 0
        %2247 = vmatprep.subr.bf16.mxu0 0
        %2248 = vmatpush1.bf16.msra.mxu0 0
        %2249 = vmatprep.subr.bf16.mxu0 0
        %2250 = vmatpush1.bf16.msra.mxu0 0
        %2251 = vmatprep.subr.bf16.mxu0 0
        %2252 = vmatpush1.bf16.msra.mxu0 0
        %2253 = vmatprep.subr.bf16.mxu0 0
        %2254 = vmatpush1.bf16.msra.mxu0 0
        %2255 = vmatprep.subr.bf16.mxu0 0
        %2256 = vmatpush1.bf16.msra.mxu0 0
        %2257 = vmatprep.subr.bf16.mxu0 0
        %2258 = vmatpush1.bf16.msra.mxu0 0
        %2259 = vmatprep.subr.bf16.mxu0 0
        %2260 = vmatpush1.bf16.msra.mxu0 0
        %2261 = vmatprep.subr.bf16.mxu0 0
        %2262 = vmatpush1.bf16.msra.mxu0 0
        %2263 = vmatprep.subr.bf16.mxu0 0
        %2264 = vmatpush1.bf16.msra.mxu0 0
        %2265 = vmatprep.subr.bf16.mxu0 0
        %2266 = vmatpush1.bf16.msra.mxu0 0
        %2267 = vmatprep.subr.bf16.mxu0 0
        %2268 = vmatpush1.bf16.msra.mxu0 0
        %2269 = vmatprep.mubr.bf16.mxu0 0
        %2270 = vmatmul.mubr.bf16.gmra.mrb[0].mxu0 %v2229
        %v2271 = vpop.f32.mrb[0].mxu0
        %v2272 = vadd.f32 0.0, %v2271
        %v2273 = vpop.f32.mrb[0].mxu0
        %v2274 = vpop.f32.mrb[0].mxu0
        %v2275 = vadd.f32 0.0, %v2274
        %v2276 = vpop.f32.mrb[0].mxu0
        %2277 = vmatprep.mubr.bf16.mxu0 0
        %2278 = vmatmul.mubr.bf16.gmra.mrb[0].mxu0 %v2232
        %v2279 = vpop.f32.mrb[0].mxu0
        %v2280 = vadd.f32 0.0, %v2279
        %v2281 = vpop.f32.mrb[0].mxu0
        %v2282 = vpop.f32.mrb[0].mxu0
        %v2283 = vpop.f32.mrb[0].mxu0
        %2284 = vdwg.mxu0
        %v2285 = vpack.c.bf16 %v2213, %v2210
        %v2286 = vpack.c.bf16 %v2272, %v2218
        %v2287 = vpack.c.bf16 %v2280, %v2275
        %v2289 = vsel %vm702, %v2285, 0
        %v2292 = vsel %vm702, %v2286, 0
        %v2295 = vsel %vm702, %v2287, 0
        %v2298 = vsel %vm923, %v482, 0
        %2300 = vmatprep.subr.bf16.mxu0 0
        %2301 = vmatpush1.bf16.msra.mxu0 %v2298
        %2302 = vmatprep.subr.bf16.mxu0 0
        %2303 = vmatpush1.bf16.msra.mxu0 0
        %2304 = vmatprep.subr.bf16.mxu0 0
        %2305 = vmatpush1.bf16.msra.mxu0 0
        %2306 = vmatprep.subr.bf16.mxu0 0
        %2307 = vmatpush1.bf16.msra.mxu0 0
        %2308 = vmatprep.subr.bf16.mxu0 0
        %2309 = vmatpush1.bf16.msra.mxu0 0
        %2310 = vmatprep.subr.bf16.mxu0 0
        %2311 = vmatpush1.bf16.msra.mxu0 0
        %2312 = vmatprep.subr.bf16.mxu0 0
        %2313 = vmatpush1.bf16.msra.mxu0 0
        %2314 = vmatprep.subr.bf16.mxu0 0
        %2315 = vmatpush1.bf16.msra.mxu0 0
        %2316 = vmatprep.subr.bf16.mxu0 0
        %2317 = vmatpush1.bf16.msra.mxu0 0
        %2318 = vmatprep.subr.bf16.mxu0 0
        %2319 = vmatpush1.bf16.msra.mxu0 0
        %2320 = vmatprep.subr.bf16.mxu0 0
        %2321 = vmatpush1.bf16.msra.mxu0 0
        %2322 = vmatprep.subr.bf16.mxu0 0
        %2323 = vmatpush1.bf16.msra.mxu0 0
        %2324 = vmatprep.subr.bf16.mxu0 0
        %2325 = vmatpush1.bf16.msra.mxu0 0
        %2326 = vmatprep.subr.bf16.mxu0 0
        %2327 = vmatpush1.bf16.msra.mxu0 0
        %2328 = vmatprep.subr.bf16.mxu0 0
        %2329 = vmatpush1.bf16.msra.mxu0 0
        %2330 = vmatprep.subr.bf16.mxu0 0
        %2331 = vmatpush1.bf16.msra.mxu0 0
        %2332 = vmatprep.mubr.bf16.mxu0 0
        %2333 = vmatmul.mubr.bf16.gmra.mrb[0].mxu0 %v2289
        %v2334 = vpop.f32.mrb[0].mxu0
        %v2335 = vadd.f32 0.0, %v2334
        %v2336 = vpop.f32.mrb[0].mxu0
        %v2337 = vpop.f32.mrb[0].mxu0
        %v2338 = vadd.f32 0.0, %v2337
        %v2339 = vpop.f32.mrb[0].mxu0
        %2340 = vmatprep.mubr.bf16.mxu0 0
        %2341 = vmatmul.mubr.bf16.gmra.mrb[0].mxu0 %v2292
        %v2342 = vpop.f32.mrb[0].mxu0
        %v2343 = vadd.f32 0.0, %v2342
        %v2344 = vpop.f32.mrb[0].mxu0
        %v2345 = vpop.f32.mrb[0].mxu0
        %v2346 = vadd.f32 0.0, %v2345
        %v2347 = vpop.f32.mrb[0].mxu0
        %2348 = vmatprep.mubr.bf16.mxu0 0
        %2349 = vmatmul.mubr.bf16.gmra.mrb[0].mxu0 %v2295
        %v2350 = vpop.f32.mrb[0].mxu0
        %v2351 = vadd.f32 0.0, %v2350
        %v2352 = vpop.f32.mrb[0].mxu0
        %v2353 = vpop.f32.mrb[0].mxu0
        %v2354 = vadd.f32 0.0, %v2353
        %v2355 = vpop.f32.mrb[0].mxu0
        %2356 = vdwg.mxu0
        %v2357 = vadd.f32 %v1937, %v2335
        %v2358 = vadd.f32 %v1938, %v2338
        %v2359 = vadd.f32 %v1939, %v2343
        %v2360 = vadd.f32 %v1940, %v2346
        %v2361 = vadd.f32 %v1941, %v2351
        %v2362 = vadd.f32 %v1942, %v2354
        %v2363 = vadd.f32 %v469, %v2357
        %v2364 = vadd.f32 %v470, %v2358
        %v2365 = vadd.f32 %v471, %v2359
        %v2366 = vadd.f32 %v472, %v2360
        %v2367 = vadd.f32 %v473, %v2361
        %v2368 = vadd.f32 %v474, %v2362
        %v2369 = vlaneseq
        %v2370 = vshrl.u32 %v2369, 7
        %v2371 = vsub.s32 4, %v2370
        %v2372 = vrot.slane %v503, %v2371
        %v2373 = vadd.f32 %v2363, %v2372
        %v2374 = vadd.f32 %v2364, %v2372
        %v2375 = vadd.f32 %v2365, %v2372
        %v2376 = vadd.f32 %v2366, %v2372
        %v2377 = vadd.f32 %v2367, %v2372
        %v2378 = vadd.f32 %v2368, %v2372
        %v2379 = vsel %vm504, %v2373, 0.0
        %2380 = vadd.xlane.f32.xlu0 %v2379
        %v2381 = vpop.xlane.xlu0 %2380
        %v2382 = vsel %vm504, %v2374, 0.0
        %2383 = vadd.xlane.f32.xlu0 %v2382
        %v2384 = vpop.xlane.xlu0 %2383
        %v2385 = vsel %vm504, %v2375, 0.0
        %2386 = vadd.xlane.f32.xlu0 %v2385
        %v2387 = vpop.xlane.xlu0 %2386
        %v2388 = vsel %vm504, %v2376, 0.0
        %2389 = vadd.xlane.f32.xlu0 %v2388
        %v2390 = vpop.xlane.xlu0 %2389
        %v2391 = vsel %vm504, %v2377, 0.0
        %2392 = vadd.xlane.f32.xlu0 %v2391
        %v2393 = vpop.xlane.xlu0 %2392
        %v2394 = vsel %vm504, %v2378, 0.0
        %2395 = vadd.xlane.f32.xlu0 %v2394
        %v2396 = vpop.xlane.xlu0 %2395
        %v2397 = vmul.f32 %v2381, %v523
        %v2398 = vmul.f32 %v2384, %v523
        %v2399 = vmul.f32 %v2387, %v523
        %v2400 = vmul.f32 %v2390, %v523
        %v2401 = vmul.f32 %v2393, %v523
        %v2402 = vmul.f32 %v2396, %v523
        %v2403 = vsub.f32 %v2373, %v2397
        %v2404 = vsub.f32 %v2374, %v2398
        %v2405 = vsub.f32 %v2375, %v2399
        %v2406 = vsub.f32 %v2376, %v2400
        %v2407 = vsub.f32 %v2377, %v2401
        %v2408 = vsub.f32 %v2378, %v2402
        %v2409 = vmul.f32 %v2403, %v2403
        %v2410 = vmul.f32 %v2404, %v2404
        %v2411 = vmul.f32 %v2405, %v2405
        %v2412 = vmul.f32 %v2406, %v2406
        %v2413 = vmul.f32 %v2407, %v2407
        %v2414 = vmul.f32 %v2408, %v2408
        %v2415 = vsel %vm504, %v2409, 0.0
        %2416 = vadd.xlane.f32.xlu0 %v2415
        %v2417 = vpop.xlane.xlu0 %2416
        %v2418 = vsel %vm504, %v2410, 0.0
        %2419 = vadd.xlane.f32.xlu0 %v2418
        %v2420 = vpop.xlane.xlu0 %2419
        %v2421 = vsel %vm504, %v2411, 0.0
        %2422 = vadd.xlane.f32.xlu0 %v2421
        %v2423 = vpop.xlane.xlu0 %2422
        %v2424 = vsel %vm504, %v2412, 0.0
        %2425 = vadd.xlane.f32.xlu0 %v2424
        %v2426 = vpop.xlane.xlu0 %2425
        %v2427 = vsel %vm504, %v2413, 0.0
        %2428 = vadd.xlane.f32.xlu0 %v2427
        %v2429 = vpop.xlane.xlu0 %2428
        %v2430 = vsel %vm504, %v2414, 0.0
        %2431 = vadd.xlane.f32.xlu0 %v2430
        %v2432 = vpop.xlane.xlu0 %2431
        %v2433 = vmul.f32 %v2417, %v523
        %v2434 = vmul.f32 %v2420, %v523
        %v2435 = vmul.f32 %v2423, %v523
        %v2436 = vmul.f32 %v2426, %v523
        %v2437 = vmul.f32 %v2429, %v523
        %v2438 = vmul.f32 %v2432, %v523
        %v2439 = vadd.f32 %v2433, 1e-06
        %v2440 = vadd.f32 %v2434, 1e-06
        %v2441 = vadd.f32 %v2435, 1e-06
        %v2442 = vadd.f32 %v2436, 1e-06
        %v2443 = vadd.f32 %v2437, 1e-06
        %v2444 = vadd.f32 %v2438, 1e-06
        %v2445 = vrsqrt.pop %v2439
        %v2446 = vrsqrt.pop %v2440
        %v2447 = vrsqrt.pop %v2441
        %v2448 = vrsqrt.pop %v2442
        %v2449 = vrsqrt.pop %v2443
        %v2450 = vrsqrt.pop %v2444
        %v2451 = vmul.f32 %v2403, %v2445
        %v2452 = vmul.f32 %v2404, %v2446
        %v2453 = vmul.f32 %v2405, %v2447
        %v2454 = vmul.f32 %v2406, %v2448
        %v2455 = vmul.f32 %v2407, %v2449
        %v2456 = vmul.f32 %v2408, %v2450
        %v2457 = vlaneseq
        %v2458 = vshrl.u32 %v2457, 7
        %v2459 = vsub.s32 2, %v2458
        %v2460 = vrot.slane %v503, %v2459
        %v2461 = vmul.f32 %v2451, %v2460
        %v2462 = vmul.f32 %v2452, %v2460
        %v2463 = vmul.f32 %v2453, %v2460
        %v2464 = vmul.f32 %v2454, %v2460
        %v2465 = vmul.f32 %v2455, %v2460
        %v2466 = vmul.f32 %v2456, %v2460
        %v2467 = vlaneseq
        %v2468 = vshrl.u32 %v2467, 7
        %v2469 = vsub.s32 3, %v2468
        %v2470 = vrot.slane %v503, %v2469
        %v2471 = vadd.f32 %v2461, %v2470
        %v2472 = vadd.f32 %v2462, %v2470
        %v2473 = vadd.f32 %v2463, %v2470
        %v2474 = vadd.f32 %v2464, %v2470
        %v2475 = vadd.f32 %v2465, %v2470
        %v2476 = vadd.f32 %v2466, %v2470
        %v2477 = vpack.c.bf16 %v2472, %v2471
        %v2478 = vpack.c.bf16 %v2474, %v2473
        %v2479 = vpack.c.bf16 %v2476, %v2475
        %v2480 = vlaneseq
        %v2481 = vshrl.u32 %v2480, 7
        %v2482 = vsub.s32 7, %v2481
        %v2483 = vrot.slane %v503, %v2482
        %v2488 = vunpack.c.l.b16 %v483
        %v2489 = vunpack.c.l.b16 %v484
        %v2490 = vunpack.c.l.b16 %v485
        %v2491 = vunpack.c.l.b16 %v486
        %v2492 = vpack.c.b16 %v2489, %v2488
        %v2493 = vpack.c.b16 %v2491, %v2490
        %v2497 = vsel %vm504, %v2477, 0
        %v2500 = vsel %vm504, %v2478, 0
        %v2503 = vsel %vm504, %v2479, 0
        %2505 = vmatprep.subr.bf16.mxu0 0
        %2506 = vmatpush1.bf16.msra.mxu0 %v2492
        %2507 = vmatprep.subr.bf16.mxu0 0
        %2508 = vmatpush1.bf16.msra.mxu0 %v2493
        %2509 = vmatprep.subr.bf16.mxu0 0
        %2510 = vmatpush1.bf16.msra.mxu0 0
        %2511 = vmatprep.subr.bf16.mxu0 0
        %2512 = vmatpush1.bf16.msra.mxu0 0
        %2513 = vmatprep.subr.bf16.mxu0 0
        %2514 = vmatpush1.bf16.msra.mxu0 0
        %2515 = vmatprep.subr.bf16.mxu0 0
        %2516 = vmatpush1.bf16.msra.mxu0 0
        %2517 = vmatprep.subr.bf16.mxu0 0
        %2518 = vmatpush1.bf16.msra.mxu0 0
        %2519 = vmatprep.subr.bf16.mxu0 0
        %2520 = vmatpush1.bf16.msra.mxu0 0
        %2521 = vmatprep.subr.bf16.mxu0 0
        %2522 = vmatpush1.bf16.msra.mxu0 0
        %2523 = vmatprep.subr.bf16.mxu0 0
        %2524 = vmatpush1.bf16.msra.mxu0 0
        %2525 = vmatprep.subr.bf16.mxu0 0
        %2526 = vmatpush1.bf16.msra.mxu0 0
        %2527 = vmatprep.subr.bf16.mxu0 0
        %2528 = vmatpush1.bf16.msra.mxu0 0
        %2529 = vmatprep.subr.bf16.mxu0 0
        %2530 = vmatpush1.bf16.msra.mxu0 0
        %2531 = vmatprep.subr.bf16.mxu0 0
        %2532 = vmatpush1.bf16.msra.mxu0 0
        %2533 = vmatprep.subr.bf16.mxu0 0
        %2534 = vmatpush1.bf16.msra.mxu0 0
        %2535 = vmatprep.subr.bf16.mxu0 0
        %2536 = vmatpush1.bf16.msra.mxu0 0
        %2537 = vmatprep.mubr.bf16.mxu0 0
        %2538 = vmatmul.mubr.bf16.gmra.mrb[0].mxu0 %v2497
        %v2539 = vpop.f32.mrb[0].mxu0
        %v2540 = vadd.f32 %v2483, %v2539
        %v2541 = vpop.f32.mrb[0].mxu0
        %v2542 = vpop.f32.mrb[0].mxu0
        %v2543 = vadd.f32 %v2483, %v2542
        %v2544 = vpop.f32.mrb[0].mxu0
        %2545 = vmatprep.mubr.bf16.mxu0 0
        %2546 = vmatmul.mubr.bf16.gmra.mrb[0].mxu0 %v2500
        %v2547 = vpop.f32.mrb[0].mxu0
        %v2548 = vadd.f32 %v2483, %v2547
        %v2549 = vpop.f32.mrb[0].mxu0
        %v2550 = vpop.f32.mrb[0].mxu0
        %v2551 = vadd.f32 %v2483, %v2550
        %v2552 = vpop.f32.mrb[0].mxu0
        %2553 = vmatprep.mubr.bf16.mxu0 0
        %2554 = vmatmul.mubr.bf16.gmra.mrb[0].mxu0 %v2503
        %v2555 = vpop.f32.mrb[0].mxu0
        %v2556 = vadd.f32 %v2483, %v2555
        %v2557 = vpop.f32.mrb[0].mxu0
        %v2558 = vpop.f32.mrb[0].mxu0
        %v2559 = vadd.f32 %v2483, %v2558
        %v2560 = vpop.f32.mrb[0].mxu0
        %2561 = vdwg.mxu0
        %v2562 = vmul.f32 %v2540, 0.5
        %v2563 = vmul.f32 %v2543, 0.5
        %v2564 = vmul.f32 %v2548, 0.5
        %v2565 = vmul.f32 %v2551, 0.5
        %v2566 = vmul.f32 %v2556, 0.5
        %v2567 = vmul.f32 %v2559, 0.5
        %v2568 = vmul.f32 %v2540, 0.70710677
        %v2569 = vmul.f32 %v2543, 0.70710677
        %v2570 = vmul.f32 %v2548, 0.70710677
        %v2571 = vmul.f32 %v2551, 0.70710677
        %v2572 = vmul.f32 %v2556, 0.70710677
        %v2573 = vmul.f32 %v2559, 0.70710677
        %vm2574 = vcmp.ge.f32.partialorder %v2568, 0.0
        %vm2575 = vcmp.ge.f32.partialorder %v2569, 0.0
        %vm2576 = vcmp.ge.f32.partialorder %v2570, 0.0
        %vm2577 = vcmp.ge.f32.partialorder %v2571, 0.0
        %vm2578 = vcmp.ge.f32.partialorder %v2572, 0.0
        %vm2579 = vcmp.ge.f32.partialorder %v2573, 0.0
        %v2580 = vsel %vm2574, 1.0, -1.0
        %v2581 = vsel %vm2575, 1.0, -1.0
        %v2582 = vsel %vm2576, 1.0, -1.0
        %v2583 = vsel %vm2577, 1.0, -1.0
        %v2584 = vsel %vm2578, 1.0, -1.0
        %v2585 = vsel %vm2579, 1.0, -1.0
        %v2586 = vand.u32 2147483647, %v2568
        %v2587 = vand.u32 2147483647, %v2569
        %v2588 = vand.u32 2147483647, %v2570
        %v2589 = vand.u32 2147483647, %v2571
        %v2590 = vand.u32 2147483647, %v2572
        %v2591 = vand.u32 2147483647, %v2573
        %v2592 = vmul.f32 %v2586, 0.3275911
        %v2593 = vmul.f32 %v2587, 0.3275911
        %v2594 = vmul.f32 %v2588, 0.3275911
        %v2595 = vmul.f32 %v2589, 0.3275911
        %v2596 = vmul.f32 %v2590, 0.3275911
        %v2597 = vmul.f32 %v2591, 0.3275911
        %v2598 = vadd.f32 %v2592, 1.0
        %v2599 = vadd.f32 %v2593, 1.0
        %v2600 = vadd.f32 %v2594, 1.0
        %v2601 = vadd.f32 %v2595, 1.0
        %v2602 = vadd.f32 %v2596, 1.0
        %v2603 = vadd.f32 %v2597, 1.0
        %v2604 = vrcp.pop %v2598
        %v2605 = vmul.f32 1.0, %v2604
        %v2606 = vrcp.pop %v2599
        %v2607 = vmul.f32 1.0, %v2606
        %v2608 = vrcp.pop %v2600
        %v2609 = vmul.f32 1.0, %v2608
        %v2610 = vrcp.pop %v2601
        %v2611 = vmul.f32 1.0, %v2610
        %v2612 = vrcp.pop %v2602
        %v2613 = vmul.f32 1.0, %v2612
        %v2614 = vrcp.pop %v2603
        %v2615 = vmul.f32 1.0, %v2614
        %v2616 = vmul.f32 %v2605, 1.0614054
        %v2617 = vmul.f32 %v2607, 1.0614054
        %v2618 = vmul.f32 %v2609, 1.0614054
        %v2619 = vmul.f32 %v2611, 1.0614054
        %v2620 = vmul.f32 %v2613, 1.0614054
        %v2621 = vmul.f32 %v2615, 1.0614054
        %v2622 = vadd.f32 %v2616, -1.4531521
        %v2623 = vadd.f32 %v2617, -1.4531521
        %v2624 = vadd.f32 %v2618, -1.4531521
        %v2625 = vadd.f32 %v2619, -1.4531521
        %v2626 = vadd.f32 %v2620, -1.4531521
        %v2627 = vadd.f32 %v2621, -1.4531521
        %v2628 = vmul.f32 %v2622, %v2605
        %v2629 = vmul.f32 %v2623, %v2607
        %v2630 = vmul.f32 %v2624, %v2609
        %v2631 = vmul.f32 %v2625, %v2611
        %v2632 = vmul.f32 %v2626, %v2613
        %v2633 = vmul.f32 %v2627, %v2615
        %v2634 = vadd.f32 %v2628, 1.4214138
        %v2635 = vadd.f32 %v2629, 1.4214138
        %v2636 = vadd.f32 %v2630, 1.4214138
        %v2637 = vadd.f32 %v2631, 1.4214138
        %v2638 = vadd.f32 %v2632, 1.4214138
        %v2639 = vadd.f32 %v2633, 1.4214138
        %v2640 = vmul.f32 %v2634, %v2605
        %v2641 = vmul.f32 %v2635, %v2607
        %v2642 = vmul.f32 %v2636, %v2609
        %v2643 = vmul.f32 %v2637, %v2611
        %v2644 = vmul.f32 %v2638, %v2613
        %v2645 = vmul.f32 %v2639, %v2615
        %v2646 = vadd.f32 %v2640, -0.28449672
        %v2647 = vadd.f32 %v2641, -0.28449672
        %v2648 = vadd.f32 %v2642, -0.28449672
        %v2649 = vadd.f32 %v2643, -0.28449672
        %v2650 = vadd.f32 %v2644, -0.28449672
        %v2651 = vadd.f32 %v2645, -0.28449672
        %v2652 = vmul.f32 %v2646, %v2605
        %v2653 = vmul.f32 %v2647, %v2607
        %v2654 = vmul.f32 %v2648, %v2609
        %v2655 = vmul.f32 %v2649, %v2611
        %v2656 = vmul.f32 %v2650, %v2613
        %v2657 = vmul.f32 %v2651, %v2615
        %v2658 = vadd.f32 %v2652, 0.2548296
        %v2659 = vadd.f32 %v2653, 0.2548296
        %v2660 = vadd.f32 %v2654, 0.2548296
        %v2661 = vadd.f32 %v2655, 0.2548296
        %v2662 = vadd.f32 %v2656, 0.2548296
        %v2663 = vadd.f32 %v2657, 0.2548296
        %v2664 = vmul.f32 %v2658, %v2605
        %v2665 = vmul.f32 %v2659, %v2607
        %v2666 = vmul.f32 %v2660, %v2609
        %v2667 = vmul.f32 %v2661, %v2611
        %v2668 = vmul.f32 %v2662, %v2613
        %v2669 = vmul.f32 %v2663, %v2615
        %v2670 = vsub.f32 0.0, %v2586
        %v2671 = vsub.f32 0.0, %v2587
        %v2672 = vsub.f32 0.0, %v2588
        %v2673 = vsub.f32 0.0, %v2589
        %v2674 = vsub.f32 0.0, %v2590
        %v2675 = vsub.f32 0.0, %v2591
        %v2676 = vmul.f32 %v2670, %v2586
        %v2677 = vmul.f32 %v2671, %v2587
        %v2678 = vmul.f32 %v2672, %v2588
        %v2679 = vmul.f32 %v2673, %v2589
        %v2680 = vmul.f32 %v2674, %v2590
        %v2681 = vmul.f32 %v2675, %v2591
        %v2682 = vmul.f32 %v2676, 1.442695
        %v2683 = vpow.pop %v2682
        %v2684 = vmul.f32 %v2677, 1.442695
        %v2685 = vpow.pop %v2684
        %v2686 = vmul.f32 %v2678, 1.442695
        %v2687 = vpow.pop %v2686
        %v2688 = vmul.f32 %v2679, 1.442695
        %v2689 = vpow.pop %v2688
        %v2690 = vmul.f32 %v2680, 1.442695
        %v2691 = vpow.pop %v2690
        %v2692 = vmul.f32 %v2681, 1.442695
        %v2693 = vpow.pop %v2692
        %v2694 = vmul.f32 %v2664, %v2683
        %v2695 = vmul.f32 %v2665, %v2685
        %v2696 = vmul.f32 %v2666, %v2687
        %v2697 = vmul.f32 %v2667, %v2689
        %v2698 = vmul.f32 %v2668, %v2691
        %v2699 = vmul.f32 %v2669, %v2693
        %v2700 = vsub.f32 1.0, %v2694
        %v2701 = vsub.f32 1.0, %v2695
        %v2702 = vsub.f32 1.0, %v2696
        %v2703 = vsub.f32 1.0, %v2697
        %v2704 = vsub.f32 1.0, %v2698
        %v2705 = vsub.f32 1.0, %v2699
        %v2706 = vmul.f32 %v2580, %v2700
        %v2707 = vmul.f32 %v2581, %v2701
        %v2708 = vmul.f32 %v2582, %v2702
        %v2709 = vmul.f32 %v2583, %v2703
        %v2710 = vmul.f32 %v2584, %v2704
        %v2711 = vmul.f32 %v2585, %v2705
        %v2712 = vadd.f32 %v2706, 1.0
        %v2713 = vadd.f32 %v2707, 1.0
        %v2714 = vadd.f32 %v2708, 1.0
        %v2715 = vadd.f32 %v2709, 1.0
        %v2716 = vadd.f32 %v2710, 1.0
        %v2717 = vadd.f32 %v2711, 1.0
        %v2718 = vmul.f32 %v2562, %v2712
        %v2719 = vmul.f32 %v2563, %v2713
        %v2720 = vmul.f32 %v2564, %v2714
        %v2721 = vmul.f32 %v2565, %v2715
        %v2722 = vmul.f32 %v2566, %v2716
        %v2723 = vmul.f32 %v2567, %v2717
        %v2724 = vpack.c.bf16 %v2719, %v2718
        %v2725 = vpack.c.bf16 %v2721, %v2720
        %v2726 = vpack.c.bf16 %v2723, %v2722
        %v2727 = vlaneseq
        %v2728 = vshrl.u32 %v2727, 7
        %v2729 = vsub.s32 5, %v2728
        %v2730 = vrot.slane %v503, %v2729
        %v2747 = vunpack.c.l.b16 %v487
        %v2748 = vunpack.c.l.b16 %v488
        %v2749 = vunpack.c.l.b16 %v489
        %v2750 = vunpack.c.l.b16 %v490
        %v2751 = vunpack.c.l.b16 %v491
        %v2752 = vunpack.c.l.b16 %v492
        %v2753 = vunpack.c.l.b16 %v493
        %v2754 = vunpack.c.l.b16 %v494
        %v2755 = vunpack.c.l.b16 %v495
        %v2756 = vunpack.c.l.b16 %v496
        %v2757 = vunpack.c.l.b16 %v497
        %v2758 = vunpack.c.l.b16 %v498
        %v2759 = vunpack.c.l.b16 %v499
        %v2760 = vunpack.c.l.b16 %v500
        %v2761 = vunpack.c.l.b16 %v501
        %v2762 = vunpack.c.l.b16 %v502
        %v2763 = vpack.c.b16 %v2748, %v2747
        %v2764 = vpack.c.b16 %v2750, %v2749
        %v2765 = vpack.c.b16 %v2752, %v2751
        %v2766 = vpack.c.b16 %v2754, %v2753
        %v2767 = vpack.c.b16 %v2756, %v2755
        %v2768 = vpack.c.b16 %v2758, %v2757
        %v2769 = vpack.c.b16 %v2760, %v2759
        %v2770 = vpack.c.b16 %v2762, %v2761
        %2779 = vmatprep.subr.bf16.mxu0 0
        %2780 = vmatpush1.bf16.msra.mxu0 %v2763
        %2781 = vmatprep.subr.bf16.mxu0 0
        %2782 = vmatpush1.bf16.msra.mxu0 %v2764
        %2783 = vmatprep.subr.bf16.mxu0 0
        %2784 = vmatpush1.bf16.msra.mxu0 %v2765
        %2785 = vmatprep.subr.bf16.mxu0 0
        %2786 = vmatpush1.bf16.msra.mxu0 %v2766
        %2787 = vmatprep.subr.bf16.mxu0 0
        %2788 = vmatpush1.bf16.msra.mxu0 %v2767
        %2789 = vmatprep.subr.bf16.mxu0 0
        %2790 = vmatpush1.bf16.msra.mxu0 %v2768
        %2791 = vmatprep.subr.bf16.mxu0 0
        %2792 = vmatpush1.bf16.msra.mxu0 %v2769
        %2793 = vmatprep.subr.bf16.mxu0 0
        %2794 = vmatpush1.bf16.msra.mxu0 %v2770
        %2795 = vmatprep.subr.bf16.mxu0 0
        %2796 = vmatpush1.bf16.msra.mxu0 0
        %2797 = vmatprep.subr.bf16.mxu0 0
        %2798 = vmatpush1.bf16.msra.mxu0 0
        %2799 = vmatprep.subr.bf16.mxu0 0
        %2800 = vmatpush1.bf16.msra.mxu0 0
        %2801 = vmatprep.subr.bf16.mxu0 0
        %2802 = vmatpush1.bf16.msra.mxu0 0
        %2803 = vmatprep.subr.bf16.mxu0 0
        %2804 = vmatpush1.bf16.msra.mxu0 0
        %2805 = vmatprep.subr.bf16.mxu0 0
        %2806 = vmatpush1.bf16.msra.mxu0 0
        %2807 = vmatprep.subr.bf16.mxu0 0
        %2808 = vmatpush1.bf16.msra.mxu0 0
        %2809 = vmatprep.subr.bf16.mxu0 0
        %2810 = vmatpush1.bf16.msra.mxu0 0
        %2811 = vmatprep.mubr.bf16.mxu0 0
        %2812 = vmatmul.mubr.bf16.gmra.mrb[0].mxu0 %v2724
        %v2813 = vpop.f32.mrb[0].mxu0
        %v2814 = vadd.f32 %v2730, %v2813
        %v2815 = vpop.f32.mrb[0].mxu0
        %v2816 = vpop.f32.mrb[0].mxu0
        %v2817 = vadd.f32 %v2730, %v2816
        %v2818 = vpop.f32.mrb[0].mxu0
        %2819 = vmatprep.mubr.bf16.mxu0 0
        %2820 = vmatmul.mubr.bf16.gmra.mrb[0].mxu0 %v2725
        %v2821 = vpop.f32.mrb[0].mxu0
        %v2822 = vadd.f32 %v2730, %v2821
        %v2823 = vpop.f32.mrb[0].mxu0
        %v2824 = vpop.f32.mrb[0].mxu0
        %v2825 = vadd.f32 %v2730, %v2824
        %v2826 = vpop.f32.mrb[0].mxu0
        %2827 = vmatprep.mubr.bf16.mxu0 0
        %2828 = vmatmul.mubr.bf16.gmra.mrb[0].mxu0 %v2726
        %v2829 = vpop.f32.mrb[0].mxu0
        %v2830 = vadd.f32 %v2730, %v2829
        %v2831 = vpop.f32.mrb[0].mxu0
        %v2832 = vpop.f32.mrb[0].mxu0
        %v2833 = vadd.f32 %v2730, %v2832
        %v2834 = vpop.f32.mrb[0].mxu0
        %2835 = vdwg.mxu0
        %v2836 = vadd.f32 %v2373, %v2814
        %v2837 = vadd.f32 %v2374, %v2817
        %v2838 = vadd.f32 %v2375, %v2822
        %v2839 = vadd.f32 %v2376, %v2825
        %v2840 = vadd.f32 %v2377, %v2830
        %v2841 = vadd.f32 %v2378, %v2833
        %2842 = vst.msk [vmem:[#allocation13] sm:$0xff] %vm504, %v2836
        %2843 = vst.msk [vmem:[#allocation13 + $0x8] sm:$0xff] %vm504, %v2837
        %2844 = vst.msk [vmem:[#allocation13 + $0x10] sm:$0xff] %vm504, %v2838
        %2845 = vst.msk [vmem:[#allocation13 + $0x18] sm:$0xff] %vm504, %v2839
        %2846 = vst.msk [vmem:[#allocation13 + $0x20] sm:$0xff] %vm504, %v2840
        %2847 = vst.msk [vmem:[#allocation13 + $0x28] sm:$0xff] %vm504, %v2841
        // Predicated region
        $region73: #{transformer_forward.1} parent=43 // pred_check
          %p2848 = pneg %p214
        $region74: #{transformer_forward.1} parent=43 // pred_check_branch
          %2850 = sbr.rel (%p2848) target = $region76
        $region75: #{transformer_forward.1} parent=43 // pred_region
          %s2851 = smul.u32 6, %s32
          %s2853 = ssub.s32 768, 768
          %2854 = vsyncadd [#allocation4], %s2853
          %s2855 = smul.addr %s2851, 128
          %s2856 = scalar_lea.hbm %s6, %s2855
          %s2857 = sshll.u32 [#allocation13], 4
          %s2858 = int_to_ptr.vmem [resolvable:$true] %s2857
          %2863 = dma.vmem_to_hbm [thread:$0]  %s2858, 768, %s2856, [#allocation4], 128, 128, 8
        $region76: #{transformer_forward.1} parent=43 // pred_fallthru
          _
        // Predicated region
        $region77: #{transformer_forward.1} parent=43 // pred_check
          %p2864 = pneg %p214
        $region78: #{transformer_forward.1} parent=43 // pred_check_branch
          %2866 = sbr.rel (%p2864) target = $region80
        $region79: #{transformer_forward.1} parent=43 // pred_region
          %2867 = dma.done [#allocation4], 768
        $region80: #{transformer_forward.1} parent=43 // pred_fallthru
          _
      $region44: #{transformer_forward.1} parent=5 // pred_fallthru
        _
      %p2868 = scmp.le.s32.totalorder 2, %s23
      // Predicated region
      $region81: #{transformer_forward.1} parent=5 // pred_check
        %p2869 = pneg %p2868
      $region82: #{transformer_forward.1} parent=5 // pred_check_branch
        %2871 = sbr.rel (%p2869) target = $region84
      $region83: #{transformer_forward.1} parent=5 // pred_region
        %s2872 = ssub.s32 %s23, 2
      $region84: #{transformer_forward.1} parent=5 // pred_fallthru
        _
    $region6: #{transformer_forward.1} parent=1 // loop_footer
      %s27 = sadd.s32 1, %s23
    $region7: #{transformer_forward.1} parent=1 // loop_footer_branch
      %22 = sbr.rel target = $region3
    $region8: #{transformer_forward.1} parent=1 // loop_exit
      _
    %2873 = vsyncpa [#allocation3], 1
    %s2874 = scalar_lea.sflag [#allocation3], 1
    %2875 = vsyncpa %s2874, 1
    %2876 = vsyncpa [#allocation6], 1
    %s2877 = scalar_lea.sflag [#allocation6], 1
    %2878 = vsyncpa %s2877, 1
    %2879 = vsyncpa [#allocation9], 1
    %s2880 = scalar_lea.sflag [#allocation9], 1
    %2881 = vsyncpa %s2880, 1
    %2882 = vsyncpa [#allocation12], 1
    %s2883 = scalar_lea.sflag [#allocation12], 1
    %2884 = vsyncpa %s2883, 1
    %2885 = vsyncpa [#allocation4], 1
    %s2886 = scalar_lea.sflag [#allocation4], 1
    %2887 = vsyncpa %s2886, 1

</llo_original>
